<compile_context>
chip_gen: v7x
topology: tpu7x:2x2x1
jax: 0.10.0
libtpu: 0.0.40
codegen_flags: <defaults>
</compile_context>

<pallas_src>
import jax
import jax.numpy as jnp
import numpy as np
from jax.experimental import pallas as pl
from jax.experimental.pallas import tpu as pltpu

BN_EPS = 1e-5
SUBLANE = 8  # f32 sublane tile

_TAPS = [(kh - 1, kw - 1) for kh in range(3) for kw in range(3)]
_CENTER = _TAPS.index((0, 0))


def _round_up(x, m):
    return ((x + m - 1) // m) * m


def _padded_channel_pos(ci, c0, c0_pad, growth, g_pad):
    """Row position of real channel `ci` (concat order) inside the padded slab."""
    if ci < c0:
        return ci
    r = ci - c0
    return c0_pad + (r // growth) * g_pad + (r % growth)


# ----------------------------- Pallas kernel ---------------------------------
def _make_dense_block_kernel(nb_layers, H, W, c0_pad, g_pad):
    # static row offsets of each layer's (scale, bias) block inside the packed arrays
    scale_offs = [l * c0_pad + g_pad * (l * (l - 1)) // 2 for l in range(nb_layers)]

    def kernel(x_ref, masks_ref, scale_ref, bias_ref, *rest):
        o_ref = rest[-1]
        w_refs = rest[:-1]
        nbhw = x_ref.shape[1]
        masks = masks_ref[...]                              # (8, nbhw), one sublane tile

        # The output block doubles as the resident activation slab: copy x once, then
        # every layer appends into its fixed 8-aligned row slab (no concats, no growth).
        o_ref[0:c0_pad, :] = x_ref[...]

        for l in range(nb_layers):
            cin_pad = c0_pad + l * g_pad
            soff = scale_offs[l]
            scale = scale_ref[soff:soff + cin_pad, :]       # (cin_pad, 1)
            bias = bias_ref[soff:soff + cin_pad, :]
            act = o_ref[0:cin_pad, :]                       # 8-aligned sublane read
            # folded (eval-mode) BatchNorm + ReLU; padding rows have scale=bias=0 -> 0
            z = jnp.maximum(act * scale + bias, 0.0)        # (cin_pad, nbhw)

            w_all = w_refs[l][...]                          # (9*g_pad, cin_pad)

            # 3x3 SAME conv = 9 per-tap matmuls accumulated in f32 (no im2col concat).
            out_l = jnp.dot(w_all[_CENTER * g_pad:(_CENTER + 1) * g_pad, :], z,
                            preferred_element_type=jnp.float32)
            m = 0
            for t, (dh, dw) in enumerate(_TAPS):
                if dh == 0 and dw == 0:
                    continue
                off = dh * W + dw
                # XLU lane rotate + border mask (the mask also kills cross-image wrap)
                zt = pltpu.roll(z, shift=(-off) % nbhw, axis=1) * masks[m:m + 1, :]
                out_l = out_l + jnp.dot(w_all[t * g_pad:(t + 1) * g_pad, :], zt,
                                        preferred_element_type=jnp.float32)
                m += 1

            row = c0_pad + l * g_pad
            o_ref[row:row + g_pad, :] = out_l               # 8-aligned, lane-dense store
        # TODO(synk): F.dropout with dropRate>0 (stochastic) not implemented; dropRate=0 / eval is exact.

    return kernel


# ----------------------------- parameters ------------------------------------
def init_dense_block_params(key, nb_layers, in_planes, growth_rate):
    """Deterministic synthetic params: per-layer BN (gamma,beta,mean,var) + conv W."""
    params = []
    for i in range(nb_layers):
        cin = in_planes + i * growth_rate
        key, k1, k2, k3, k4, k5 = jax.random.split(key, 6)
        gamma = 1.0 + 0.1 * jax.random.normal(k1, (cin,), jnp.float32)
        beta = 0.1 * jax.random.normal(k2, (cin,), jnp.float32)
        mean = 0.1 * jax.random.normal(k3, (cin,), jnp.float32)
        var = 1.0 + 0.1 * jnp.abs(jax.random.normal(k4, (cin,), jnp.float32))
        # PyTorch Conv2d weight layout: (Cout, Cin, 3, 3), bias=False
        w = jax.random.normal(k5, (growth_rate, cin, 3, 3), jnp.float32) * np.sqrt(
            2.0 / (9 * cin))
        params.append(dict(gamma=gamma, beta=beta, mean=mean, var=var, w=w))
    return params


def prepare_dense_block_params(params):
    """One-time hoisted prep: fold BN to (scale, bias), pad channels to 8-row slabs and
    split conv weights into 9 per-tap (g_pad, cin_pad) slabs stacked along sublanes."""
    growth = int(params[0]["w"].shape[0])
    c0 = int(params[0]["w"].shape[1])
    c0_pad = _round_up(c0, SUBLANE)
    g_pad = _round_up(growth, SUBLANE)

    scales, biases, w_taps = [], [], []
    for l, p in enumerate(params):
        cin = int(p["w"].shape[1])
        cin_pad = c0_pad + l * g_pad
        pos = np.array([_padded_channel_pos(ci, c0, c0_pad, growth, g_pad)
                        for ci in range(cin)], dtype=np.int64)

        scale = np.asarray(p["gamma"] / jnp.sqrt(p["var"] + BN_EPS), dtype=np.float32)
        bias = (np.asarray(p["beta"], dtype=np.float32)
                - np.asarray(p["mean"], dtype=np.float32) * scale)
        s_pad = np.zeros((cin_pad, 1), np.float32)
        b_pad = np.zeros((cin_pad, 1), np.float32)
        s_pad[pos, 0] = scale
        b_pad[pos, 0] = bias
        scales.append(s_pad)
        biases.append(b_pad)

        w = np.asarray(p["w"], dtype=np.float32)            # (growth, cin, 3, 3)
        wt = np.zeros((9 * g_pad, cin_pad), np.float32)
        for kh in range(3):
            for kw in range(3):
                t = kh * 3 + kw
                wt[t * g_pad:t * g_pad + growth, pos] = w[:, :, kh, kw]
        w_taps.append(jnp.asarray(wt))

    return dict(scale=jnp.asarray(np.concatenate(scales, axis=0)),
                bias=jnp.asarray(np.concatenate(biases, axis=0)),
                w_taps=w_taps)


# ----------------------------- forward passes ---------------------------------
def _pick_batch_block(N, HW, c0_pad, ctot_pad, vmem_budget_bytes=12 << 20):
    """Largest divisor of N whose per-grid-step working set fits a conservative VMEM
    budget (sized for v5e's 16 MiB scoped default; re-derive for v7x's 64 MiB)."""
    best = 1
    for nb in range(1, N + 1):
        if N % nb:
            continue
        # activation/output slab + input block + a shifted-z temporary, x2 pipelining
        step_bytes = (2 * ctot_pad + 2 * c0_pad) * nb * HW * 4 * 2
        if step_bytes <= vmem_budget_bytes:
            best = nb
    return best


def dense_block_forward(x_nchw, prepared, *, growth):
    """Fused Pallas implementation. Input/output NCHW, like the PyTorch module (eval)."""
    N, c0, H, W = x_nchw.shape
    HW = H * W
    w_taps = prepared["w_taps"]
    L = len(w_taps)
    c0_pad = int(w_taps[0].shape[1])
    g_pad = int(w_taps[0].shape[0]) // 9
    ctot_pad = c0_pad + L * g_pad
    ctot = c0 + L * growth

    Nb = _pick_batch_block(N, HW, c0_pad, ctot_pad)
    nbhw = Nb * HW
    n_blocks = N // Nb

    # lane-dense (C_pad, N*HW) layout: batch folded onto the lane / matmul-N axis
    # (wrapper-side transpose is layout plumbing outside the hot kernel).
    x2 = x_nchw.astype(jnp.float32).reshape(N, c0, HW)
    x2 = jnp.pad(x2, ((0, 0), (0, c0_pad - c0), (0, 0)))
    x2 = jnp.transpose(x2, (1, 0, 2)).reshape(c0_pad, N * HW)

    # border-validity masks for the 8 non-centre taps (also kill the cross-image wrap
    # of the lane roll); identical for every batch block, computed once outside.
    pos = jnp.arange(nbhw, dtype=jnp.int32)
    hh = (pos // W) % H
    ww = pos % W
    rows = []
    for dh, dw in _TAPS:
        if dh == 0 and dw == 0:
            continue
        valid = (hh + dh >= 0) & (hh + dh < H) & (ww + dw >= 0) & (ww + dw < W)
        rows.append(valid.astype(jnp.float32))
    masks = jnp.stack(rows, axis=0)                          # (8, Nb*HW)

    kernel = _make_dense_block_kernel(L, H, W, c0_pad, g_pad)

    in_specs = [
        pl.BlockSpec((c0_pad, nbhw), lambda n: (0, n)),          # x batch block
        pl.BlockSpec(masks.shape, lambda n: (0, 0)),             # masks (resident)
        pl.BlockSpec(prepared["scale"].shape, lambda n: (0, 0)), # packed BN scales
        pl.BlockSpec(prepared["bias"].shape, lambda n: (0, 0)),  # packed BN biases
    ]
    args = [x2, masks, prepared["scale"], prepared["bias"]]
    for wt in w_taps:
        in_specs.append(pl.BlockSpec(wt.shape, lambda n: (0, 0)))
        args.append(wt)

    out = pl.pallas_call(
        kernel,
        out_shape=jax.ShapeDtypeStruct((ctot_pad, N * HW), jnp.float32),
        grid=(n_blocks,),
        in_specs=in_specs,
        out_specs=pl.BlockSpec((ctot_pad, nbhw), lambda n: (0, n)),
        # batch-block axis is embarrassingly parallel; on v7x use CORE_PARALLEL when
        # n_blocks >= 2 to guarantee both TensorCores split the batch.
        compiler_params=pltpu.CompilerParams(dimension_semantics=("parallel",)),
    )(*args)

    # (ctot_pad, N*HW) -> (N, ctot, H, W): drop the 8-row channel padding outside.
    out = out.reshape(ctot_pad, N, HW).transpose(1, 0, 2)
    real_idx = np.array([_padded_channel_pos(ci, c0, c0_pad, growth, g_pad)
                         for ci in range(ctot)], dtype=np.int64)
    out = out[:, real_idx, :].reshape(N, ctot, H, W)
    return out.astype(x_nchw.dtype)


def dense_block_reference(x_nchw, params):
    """Pure-JAX reference (eval-mode BN + ReLU + 3x3 SAME conv + channel concat)."""
    x = x_nchw
    for p in params:
        inv = p["gamma"] / jnp.sqrt(p["var"] + BN_EPS)
        z = (x - p["mean"][None, :, None, None]) * inv[None, :, None, None] \
            + p["beta"][None, :, None, None]
        z = jnp.maximum(z, 0.0)
        out = jax.lax.conv_general_dilated(
            z, p["w"], window_strides=(1, 1), padding="SAME",
            dimension_numbers=("NCHW", "OIHW", "NCHW"))
        x = jnp.concatenate([x, out], axis=1)
    return x


# ----------------------------- main -------------------------------------------
if __name__ == "__main__":
    nb_layers, in_planes, growth_rate = 2, 4, 4
    N, H, W = 2, 16, 16

    key = jax.random.PRNGKey(0)
    key, kx = jax.random.split(key)
    x = jax.random.normal(kx, (N, in_planes, H, W), jnp.float32)  # NCHW like PyTorch

    params = init_dense_block_params(key, nb_layers, in_planes, growth_rate)
    prepared = prepare_dense_block_params(params)   # hoisted out of the hot path

    fwd = jax.jit(dense_block_forward, static_argnames=("growth",))
    out = jax.block_until_ready(fwd(x, prepared, growth=growth_rate))

    ref = jax.block_until_ready(dense_block_reference(x, params))

    expected_channels = in_planes + nb_layers * growth_rate
    assert out.shape == (N, expected_channels, H, W), out.shape
    if not jnp.allclose(out, ref, rtol=1e-4, atol=1e-4):
        raise AssertionError(
            f"mismatch: max abs err = {float(jnp.max(jnp.abs(out - ref)))}")

    print("KERNEL_OK")
</pallas_src>

<mosaic_0001>
module attributes {stable_mosaic.version = 11 : i64} {
  func.func @kernel(%arg0: i32, %arg1: memref<8x512xf32, #tpu.memory_space<vmem>>, %arg2: memref<8x512xf32, #tpu.memory_space<vmem>>, %arg3: memref<24x1xf32, #tpu.memory_space<vmem>>, %arg4: memref<24x1xf32, #tpu.memory_space<vmem>>, %arg5: memref<72x8xf32, #tpu.memory_space<vmem>>, %arg6: memref<72x16xf32, #tpu.memory_space<vmem>>, %arg7: memref<24x512xf32, #tpu.memory_space<vmem>>) attributes {dimension_semantics = [#tpu.dimension_semantics<parallel>], iteration_bounds = array<i64: 1>, scalar_prefetch = 0 : i64, scratch_operands = 0 : i64, tpu.core_type = #tpu.core_type<tc>, window_params = [{transform_indices = @transform_0, window_bounds = array<i64: 8, 512>}, {pipeline_mode = #tpu.pipeline_mode<synchronous>, transform_indices = @transform_1, window_bounds = array<i64: 8, 512>}, {pipeline_mode = #tpu.pipeline_mode<synchronous>, transform_indices = @transform_2, window_bounds = array<i64: 24, 1>}, {pipeline_mode = #tpu.pipeline_mode<synchronous>, transform_indices = @transform_3, window_bounds = array<i64: 24, 1>}, {pipeline_mode = #tpu.pipeline_mode<synchronous>, transform_indices = @transform_4, window_bounds = array<i64: 72, 8>}, {pipeline_mode = #tpu.pipeline_mode<synchronous>, transform_indices = @transform_5, window_bounds = array<i64: 72, 16>}, {transform_indices = @transform_6, window_bounds = array<i64: 24, 512>}]} {
    %c0 = arith.constant 0 : index
    %c0_0 = arith.constant 0 : index
    %0 = vector.load %arg2[%c0, %c0_0] : memref<8x512xf32, #tpu.memory_space<vmem>>, vector<8x512xf32>
    %c0_1 = arith.constant 0 : index
    %c0_2 = arith.constant 0 : index
    %1 = vector.load %arg1[%c0_1, %c0_2] : memref<8x512xf32, #tpu.memory_space<vmem>>, vector<8x512xf32>
    %c0_3 = arith.constant 0 : index
    %c0_4 = arith.constant 0 : index
    %2 = vector.load %arg7[%c0_3, %c0_4] : memref<24x512xf32, #tpu.memory_space<vmem>>, vector<8x512xf32>
    tpu.vector_store %arg7[%c0_3, %c0_4], %1 {strides = array<i32>} : memref<24x512xf32, #tpu.memory_space<vmem>>, vector<8x512xf32>,
    %c0_5 = arith.constant 0 : index
    %c0_6 = arith.constant 0 : index
    %3 = vector.load %arg3[%c0_5, %c0_6] : memref<24x1xf32, #tpu.memory_space<vmem>>, vector<8x1xf32>
    %c0_7 = arith.constant 0 : index
    %c0_8 = arith.constant 0 : index
    %4 = vector.load %arg4[%c0_7, %c0_8] : memref<24x1xf32, #tpu.memory_space<vmem>>, vector<8x1xf32>
    %c0_9 = arith.constant 0 : index
    %c0_10 = arith.constant 0 : index
    %5 = vector.load %arg7[%c0_9, %c0_10] : memref<24x512xf32, #tpu.memory_space<vmem>>, vector<8x512xf32>
    %6 = vector.broadcast %3 : vector<8x1xf32> to vector<8x512xf32>
    %7 = arith.mulf %5, %6 : vector<8x512xf32>
    %8 = vector.broadcast %4 : vector<8x1xf32> to vector<8x512xf32>
    %9 = arith.addf %7, %8 : vector<8x512xf32>
    %cst = arith.constant 0.000000e+00 : f32
    %10 = vector.broadcast %cst : f32 to vector<8x512xf32>
    %11 = arith.maximumf %9, %10 : vector<8x512xf32>
    %c0_11 = arith.constant 0 : index
    %c0_12 = arith.constant 0 : index
    %12 = vector.load %arg5[%c0_11, %c0_12] : memref<72x8xf32, #tpu.memory_space<vmem>>, vector<72x8xf32>
    %13 = vector.extract_strided_slice %12 {offsets = [32, 0], sizes = [8, 8], strides = [1, 1]} : vector<72x8xf32> to vector<8x8xf32>
    %cst_13 = arith.constant dense<0.000000e+00> : vector<8x512xf32>
    %14 = tpu.matmul %13, %11, %cst_13 {dimension_numbers = #tpu.dot_dimension_numbers<[1], [0], [0], [1], [0, 0, 1, 1], [], []>} : vector<8x8xf32>, vector<8x512xf32>, vector<8x512xf32> -> vector<8x512xf32>
    %c17_i32 = arith.constant 17 : i32
    %15 = tpu.dynamic_rotate %11 by %c17_i32 dim 1 : vector<8x512xf32>, i32 -> vector<8x512xf32>
    %16 = vector.extract_strided_slice %0 {offsets = [0, 0], sizes = [1, 512], strides = [1, 1]} : vector<8x512xf32> to vector<1x512xf32>
    %17 = vector.broadcast %16 : vector<1x512xf32> to vector<8x512xf32>
    %18 = arith.mulf %15, %17 : vector<8x512xf32>
    %19 = vector.extract_strided_slice %12 {offsets = [0, 0], sizes = [8, 8], strides = [1, 1]} : vector<72x8xf32> to vector<8x8xf32>
    %cst_14 = arith.constant dense<0.000000e+00> : vector<8x512xf32>
    %20 = tpu.matmul %19, %18, %cst_14 {dimension_numbers = #tpu.dot_dimension_numbers<[1], [0], [0], [1], [0, 0, 1, 1], [], []>} : vector<8x8xf32>, vector<8x512xf32>, vector<8x512xf32> -> vector<8x512xf32>
    %21 = arith.addf %14, %20 : vector<8x512xf32>
    %c16_i32 = arith.constant 16 : i32
    %22 = tpu.dynamic_rotate %11 by %c16_i32 dim 1 : vector<8x512xf32>, i32 -> vector<8x512xf32>
    %23 = vector.extract_strided_slice %0 {offsets = [1, 0], sizes = [1, 512], strides = [1, 1]} : vector<8x512xf32> to vector<1x512xf32>
    %24 = vector.broadcast %23 : vector<1x512xf32> to vector<8x512xf32>
    %25 = arith.mulf %22, %24 : vector<8x512xf32>
    %26 = vector.extract_strided_slice %12 {offsets = [8, 0], sizes = [8, 8], strides = [1, 1]} : vector<72x8xf32> to vector<8x8xf32>
    %cst_15 = arith.constant dense<0.000000e+00> : vector<8x512xf32>
    %27 = tpu.matmul %26, %25, %cst_15 {dimension_numbers = #tpu.dot_dimension_numbers<[1], [0], [0], [1], [0, 0, 1, 1], [], []>} : vector<8x8xf32>, vector<8x512xf32>, vector<8x512xf32> -> vector<8x512xf32>
    %28 = arith.addf %21, %27 : vector<8x512xf32>
    %c15_i32 = arith.constant 15 : i32
    %29 = tpu.dynamic_rotate %11 by %c15_i32 dim 1 : vector<8x512xf32>, i32 -> vector<8x512xf32>
    %30 = vector.extract_strided_slice %0 {offsets = [2, 0], sizes = [1, 512], strides = [1, 1]} : vector<8x512xf32> to vector<1x512xf32>
    %31 = vector.broadcast %30 : vector<1x512xf32> to vector<8x512xf32>
    %32 = arith.mulf %29, %31 : vector<8x512xf32>
    %33 = vector.extract_strided_slice %12 {offsets = [16, 0], sizes = [8, 8], strides = [1, 1]} : vector<72x8xf32> to vector<8x8xf32>
    %cst_16 = arith.constant dense<0.000000e+00> : vector<8x512xf32>
    %34 = tpu.matmul %33, %32, %cst_16 {dimension_numbers = #tpu.dot_dimension_numbers<[1], [0], [0], [1], [0, 0, 1, 1], [], []>} : vector<8x8xf32>, vector<8x512xf32>, vector<8x512xf32> -> vector<8x512xf32>
    %35 = arith.addf %28, %34 : vector<8x512xf32>
    %c1_i32 = arith.constant 1 : i32
    %36 = tpu.dynamic_rotate %11 by %c1_i32 dim 1 : vector<8x512xf32>, i32 -> vector<8x512xf32>
    %37 = vector.extract_strided_slice %0 {offsets = [3, 0], sizes = [1, 512], strides = [1, 1]} : vector<8x512xf32> to vector<1x512xf32>
    %38 = vector.broadcast %37 : vector<1x512xf32> to vector<8x512xf32>
    %39 = arith.mulf %36, %38 : vector<8x512xf32>
    %40 = vector.extract_strided_slice %12 {offsets = [24, 0], sizes = [8, 8], strides = [1, 1]} : vector<72x8xf32> to vector<8x8xf32>
    %cst_17 = arith.constant dense<0.000000e+00> : vector<8x512xf32>
    %41 = tpu.matmul %40, %39, %cst_17 {dimension_numbers = #tpu.dot_dimension_numbers<[1], [0], [0], [1], [0, 0, 1, 1], [], []>} : vector<8x8xf32>, vector<8x512xf32>, vector<8x512xf32> -> vector<8x512xf32>
    %42 = arith.addf %35, %41 : vector<8x512xf32>
    %c511_i32 = arith.constant 511 : i32
    %43 = tpu.dynamic_rotate %11 by %c511_i32 dim 1 : vector<8x512xf32>, i32 -> vector<8x512xf32>
    %44 = vector.extract_strided_slice %0 {offsets = [4, 0], sizes = [1, 512], strides = [1, 1]} : vector<8x512xf32> to vector<1x512xf32>
    %45 = vector.broadcast %44 : vector<1x512xf32> to vector<8x512xf32>
    %46 = arith.mulf %43, %45 : vector<8x512xf32>
    %47 = vector.extract_strided_slice %12 {offsets = [40, 0], sizes = [8, 8], strides = [1, 1]} : vector<72x8xf32> to vector<8x8xf32>
    %cst_18 = arith.constant dense<0.000000e+00> : vector<8x512xf32>
    %48 = tpu.matmul %47, %46, %cst_18 {dimension_numbers = #tpu.dot_dimension_numbers<[1], [0], [0], [1], [0, 0, 1, 1], [], []>} : vector<8x8xf32>, vector<8x512xf32>, vector<8x512xf32> -> vector<8x512xf32>
    %49 = arith.addf %42, %48 : vector<8x512xf32>
    %c497_i32 = arith.constant 497 : i32
    %50 = tpu.dynamic_rotate %11 by %c497_i32 dim 1 : vector<8x512xf32>, i32 -> vector<8x512xf32>
    %51 = vector.extract_strided_slice %0 {offsets = [5, 0], sizes = [1, 512], strides = [1, 1]} : vector<8x512xf32> to vector<1x512xf32>
    %52 = vector.broadcast %51 : vector<1x512xf32> to vector<8x512xf32>
    %53 = arith.mulf %50, %52 : vector<8x512xf32>
    %54 = vector.extract_strided_slice %12 {offsets = [48, 0], sizes = [8, 8], strides = [1, 1]} : vector<72x8xf32> to vector<8x8xf32>
    %cst_19 = arith.constant dense<0.000000e+00> : vector<8x512xf32>
    %55 = tpu.matmul %54, %53, %cst_19 {dimension_numbers = #tpu.dot_dimension_numbers<[1], [0], [0], [1], [0, 0, 1, 1], [], []>} : vector<8x8xf32>, vector<8x512xf32>, vector<8x512xf32> -> vector<8x512xf32>
    %56 = arith.addf %49, %55 : vector<8x512xf32>
    %c496_i32 = arith.constant 496 : i32
    %57 = tpu.dynamic_rotate %11 by %c496_i32 dim 1 : vector<8x512xf32>, i32 -> vector<8x512xf32>
    %58 = vector.extract_strided_slice %0 {offsets = [6, 0], sizes = [1, 512], strides = [1, 1]} : vector<8x512xf32> to vector<1x512xf32>
    %59 = vector.broadcast %58 : vector<1x512xf32> to vector<8x512xf32>
    %60 = arith.mulf %57, %59 : vector<8x512xf32>
    %61 = vector.extract_strided_slice %12 {offsets = [56, 0], sizes = [8, 8], strides = [1, 1]} : vector<72x8xf32> to vector<8x8xf32>
    %cst_20 = arith.constant dense<0.000000e+00> : vector<8x512xf32>
    %62 = tpu.matmul %61, %60, %cst_20 {dimension_numbers = #tpu.dot_dimension_numbers<[1], [0], [0], [1], [0, 0, 1, 1], [], []>} : vector<8x8xf32>, vector<8x512xf32>, vector<8x512xf32> -> vector<8x512xf32>
    %63 = arith.addf %56, %62 : vector<8x512xf32>
    %c495_i32 = arith.constant 495 : i32
    %64 = tpu.dynamic_rotate %11 by %c495_i32 dim 1 : vector<8x512xf32>, i32 -> vector<8x512xf32>
    %65 = vector.extract_strided_slice %0 {offsets = [7, 0], sizes = [1, 512], strides = [1, 1]} : vector<8x512xf32> to vector<1x512xf32>
    %66 = vector.broadcast %65 : vector<1x512xf32> to vector<8x512xf32>
    %67 = arith.mulf %64, %66 : vector<8x512xf32>
    %68 = vector.extract_strided_slice %12 {offsets = [64, 0], sizes = [8, 8], strides = [1, 1]} : vector<72x8xf32> to vector<8x8xf32>
    %cst_21 = arith.constant dense<0.000000e+00> : vector<8x512xf32>
    %69 = tpu.matmul %68, %67, %cst_21 {dimension_numbers = #tpu.dot_dimension_numbers<[1], [0], [0], [1], [0, 0, 1, 1], [], []>} : vector<8x8xf32>, vector<8x512xf32>, vector<8x512xf32> -> vector<8x512xf32>
    %70 = arith.addf %63, %69 : vector<8x512xf32>
    %c8 = arith.constant 8 : index
    %c0_22 = arith.constant 0 : index
    %71 = vector.load %arg7[%c8, %c0_22] : memref<24x512xf32, #tpu.memory_space<vmem>>, vector<8x512xf32>
    tpu.vector_store %arg7[%c8, %c0_22], %70 {strides = array<i32>} : memref<24x512xf32, #tpu.memory_space<vmem>>, vector<8x512xf32>,
    %c8_23 = arith.constant 8 : index
    %c0_24 = arith.constant 0 : index
    %72 = vector.load %arg3[%c8_23, %c0_24] : memref<24x1xf32, #tpu.memory_space<vmem>>, vector<16x1xf32>
    %c8_25 = arith.constant 8 : index
    %c0_26 = arith.constant 0 : index
    %73 = vector.load %arg4[%c8_25, %c0_26] : memref<24x1xf32, #tpu.memory_space<vmem>>, vector<16x1xf32>
    %c0_27 = arith.constant 0 : index
    %c0_28 = arith.constant 0 : index
    %74 = vector.load %arg7[%c0_27, %c0_28] : memref<24x512xf32, #tpu.memory_space<vmem>>, vector<16x512xf32>
    %75 = vector.broadcast %72 : vector<16x1xf32> to vector<16x512xf32>
    %76 = arith.mulf %74, %75 : vector<16x512xf32>
    %77 = vector.broadcast %73 : vector<16x1xf32> to vector<16x512xf32>
    %78 = arith.addf %76, %77 : vector<16x512xf32>
    %cst_29 = arith.constant 0.000000e+00 : f32
    %79 = vector.broadcast %cst_29 : f32 to vector<16x512xf32>
    %80 = arith.maximumf %78, %79 : vector<16x512xf32>
    %c0_30 = arith.constant 0 : index
    %c0_31 = arith.constant 0 : index
    %81 = vector.load %arg6[%c0_30, %c0_31] : memref<72x16xf32, #tpu.memory_space<vmem>>, vector<72x16xf32>
    %82 = vector.extract_strided_slice %81 {offsets = [32, 0], sizes = [8, 16], strides = [1, 1]} : vector<72x16xf32> to vector<8x16xf32>
    %cst_32 = arith.constant dense<0.000000e+00> : vector<8x512xf32>
    %83 = tpu.matmul %82, %80, %cst_32 {dimension_numbers = #tpu.dot_dimension_numbers<[1], [0], [0], [1], [0, 0, 1, 1], [], []>} : vector<8x16xf32>, vector<16x512xf32>, vector<8x512xf32> -> vector<8x512xf32>
    %c17_i32_33 = arith.constant 17 : i32
    %84 = tpu.dynamic_rotate %80 by %c17_i32_33 dim 1 : vector<16x512xf32>, i32 -> vector<16x512xf32>
    %85 = vector.extract_strided_slice %0 {offsets = [0, 0], sizes = [1, 512], strides = [1, 1]} : vector<8x512xf32> to vector<1x512xf32>
    %86 = vector.broadcast %85 : vector<1x512xf32> to vector<16x512xf32>
    %87 = arith.mulf %84, %86 : vector<16x512xf32>
    %88 = vector.extract_strided_slice %81 {offsets = [0, 0], sizes = [8, 16], strides = [1, 1]} : vector<72x16xf32> to vector<8x16xf32>
    %cst_34 = arith.constant dense<0.000000e+00> : vector<8x512xf32>
    %89 = tpu.matmul %88, %87, %cst_34 {dimension_numbers = #tpu.dot_dimension_numbers<[1], [0], [0], [1], [0, 0, 1, 1], [], []>} : vector<8x16xf32>, vector<16x512xf32>, vector<8x512xf32> -> vector<8x512xf32>
    %90 = arith.addf %83, %89 : vector<8x512xf32>
    %c16_i32_35 = arith.constant 16 : i32
    %91 = tpu.dynamic_rotate %80 by %c16_i32_35 dim 1 : vector<16x512xf32>, i32 -> vector<16x512xf32>
    %92 = vector.extract_strided_slice %0 {offsets = [1, 0], sizes = [1, 512], strides = [1, 1]} : vector<8x512xf32> to vector<1x512xf32>
    %93 = vector.broadcast %92 : vector<1x512xf32> to vector<16x512xf32>
    %94 = arith.mulf %91, %93 : vector<16x512xf32>
    %95 = vector.extract_strided_slice %81 {offsets = [8, 0], sizes = [8, 16], strides = [1, 1]} : vector<72x16xf32> to vector<8x16xf32>
    %cst_36 = arith.constant dense<0.000000e+00> : vector<8x512xf32>
    %96 = tpu.matmul %95, %94, %cst_36 {dimension_numbers = #tpu.dot_dimension_numbers<[1], [0], [0], [1], [0, 0, 1, 1], [], []>} : vector<8x16xf32>, vector<16x512xf32>, vector<8x512xf32> -> vector<8x512xf32>
    %97 = arith.addf %90, %96 : vector<8x512xf32>
    %c15_i32_37 = arith.constant 15 : i32
    %98 = tpu.dynamic_rotate %80 by %c15_i32_37 dim 1 : vector<16x512xf32>, i32 -> vector<16x512xf32>
    %99 = vector.extract_strided_slice %0 {offsets = [2, 0], sizes = [1, 512], strides = [1, 1]} : vector<8x512xf32> to vector<1x512xf32>
    %100 = vector.broadcast %99 : vector<1x512xf32> to vector<16x512xf32>
    %101 = arith.mulf %98, %100 : vector<16x512xf32>
    %102 = vector.extract_strided_slice %81 {offsets = [16, 0], sizes = [8, 16], strides = [1, 1]} : vector<72x16xf32> to vector<8x16xf32>
    %cst_38 = arith.constant dense<0.000000e+00> : vector<8x512xf32>
    %103 = tpu.matmul %102, %101, %cst_38 {dimension_numbers = #tpu.dot_dimension_numbers<[1], [0], [0], [1], [0, 0, 1, 1], [], []>} : vector<8x16xf32>, vector<16x512xf32>, vector<8x512xf32> -> vector<8x512xf32>
    %104 = arith.addf %97, %103 : vector<8x512xf32>
    %c1_i32_39 = arith.constant 1 : i32
    %105 = tpu.dynamic_rotate %80 by %c1_i32_39 dim 1 : vector<16x512xf32>, i32 -> vector<16x512xf32>
    %106 = vector.extract_strided_slice %0 {offsets = [3, 0], sizes = [1, 512], strides = [1, 1]} : vector<8x512xf32> to vector<1x512xf32>
    %107 = vector.broadcast %106 : vector<1x512xf32> to vector<16x512xf32>
    %108 = arith.mulf %105, %107 : vector<16x512xf32>
    %109 = vector.extract_strided_slice %81 {offsets = [24, 0], sizes = [8, 16], strides = [1, 1]} : vector<72x16xf32> to vector<8x16xf32>
    %cst_40 = arith.constant dense<0.000000e+00> : vector<8x512xf32>
    %110 = tpu.matmul %109, %108, %cst_40 {dimension_numbers = #tpu.dot_dimension_numbers<[1], [0], [0], [1], [0, 0, 1, 1], [], []>} : vector<8x16xf32>, vector<16x512xf32>, vector<8x512xf32> -> vector<8x512xf32>
    %111 = arith.addf %104, %110 : vector<8x512xf32>
    %c511_i32_41 = arith.constant 511 : i32
    %112 = tpu.dynamic_rotate %80 by %c511_i32_41 dim 1 : vector<16x512xf32>, i32 -> vector<16x512xf32>
    %113 = vector.extract_strided_slice %0 {offsets = [4, 0], sizes = [1, 512], strides = [1, 1]} : vector<8x512xf32> to vector<1x512xf32>
    %114 = vector.broadcast %113 : vector<1x512xf32> to vector<16x512xf32>
    %115 = arith.mulf %112, %114 : vector<16x512xf32>
    %116 = vector.extract_strided_slice %81 {offsets = [40, 0], sizes = [8, 16], strides = [1, 1]} : vector<72x16xf32> to vector<8x16xf32>
    %cst_42 = arith.constant dense<0.000000e+00> : vector<8x512xf32>
    %117 = tpu.matmul %116, %115, %cst_42 {dimension_numbers = #tpu.dot_dimension_numbers<[1], [0], [0], [1], [0, 0, 1, 1], [], []>} : vector<8x16xf32>, vector<16x512xf32>, vector<8x512xf32> -> vector<8x512xf32>
    %118 = arith.addf %111, %117 : vector<8x512xf32>
    %c497_i32_43 = arith.constant 497 : i32
    %119 = tpu.dynamic_rotate %80 by %c497_i32_43 dim 1 : vector<16x512xf32>, i32 -> vector<16x512xf32>
    %120 = vector.extract_strided_slice %0 {offsets = [5, 0], sizes = [1, 512], strides = [1, 1]} : vector<8x512xf32> to vector<1x512xf32>
    %121 = vector.broadcast %120 : vector<1x512xf32> to vector<16x512xf32>
    %122 = arith.mulf %119, %121 : vector<16x512xf32>
    %123 = vector.extract_strided_slice %81 {offsets = [48, 0], sizes = [8, 16], strides = [1, 1]} : vector<72x16xf32> to vector<8x16xf32>
    %cst_44 = arith.constant dense<0.000000e+00> : vector<8x512xf32>
    %124 = tpu.matmul %123, %122, %cst_44 {dimension_numbers = #tpu.dot_dimension_numbers<[1], [0], [0], [1], [0, 0, 1, 1], [], []>} : vector<8x16xf32>, vector<16x512xf32>, vector<8x512xf32> -> vector<8x512xf32>
    %125 = arith.addf %118, %124 : vector<8x512xf32>
    %c496_i32_45 = arith.constant 496 : i32
    %126 = tpu.dynamic_rotate %80 by %c496_i32_45 dim 1 : vector<16x512xf32>, i32 -> vector<16x512xf32>
    %127 = vector.extract_strided_slice %0 {offsets = [6, 0], sizes = [1, 512], strides = [1, 1]} : vector<8x512xf32> to vector<1x512xf32>
    %128 = vector.broadcast %127 : vector<1x512xf32> to vector<16x512xf32>
    %129 = arith.mulf %126, %128 : vector<16x512xf32>
    %130 = vector.extract_strided_slice %81 {offsets = [56, 0], sizes = [8, 16], strides = [1, 1]} : vector<72x16xf32> to vector<8x16xf32>
    %cst_46 = arith.constant dense<0.000000e+00> : vector<8x512xf32>
    %131 = tpu.matmul %130, %129, %cst_46 {dimension_numbers = #tpu.dot_dimension_numbers<[1], [0], [0], [1], [0, 0, 1, 1], [], []>} : vector<8x16xf32>, vector<16x512xf32>, vector<8x512xf32> -> vector<8x512xf32>
    %132 = arith.addf %125, %131 : vector<8x512xf32>
    %c495_i32_47 = arith.constant 495 : i32
    %133 = tpu.dynamic_rotate %80 by %c495_i32_47 dim 1 : vector<16x512xf32>, i32 -> vector<16x512xf32>
    %134 = vector.extract_strided_slice %0 {offsets = [7, 0], sizes = [1, 512], strides = [1, 1]} : vector<8x512xf32> to vector<1x512xf32>
    %135 = vector.broadcast %134 : vector<1x512xf32> to vector<16x512xf32>
    %136 = arith.mulf %133, %135 : vector<16x512xf32>
    %137 = vector.extract_strided_slice %81 {offsets = [64, 0], sizes = [8, 16], strides = [1, 1]} : vector<72x16xf32> to vector<8x16xf32>
    %cst_48 = arith.constant dense<0.000000e+00> : vector<8x512xf32>
    %138 = tpu.matmul %137, %136, %cst_48 {dimension_numbers = #tpu.dot_dimension_numbers<[1], [0], [0], [1], [0, 0, 1, 1], [], []>} : vector<8x16xf32>, vector<16x512xf32>, vector<8x512xf32> -> vector<8x512xf32>
    %139 = arith.addf %132, %138 : vector<8x512xf32>
    %c16 = arith.constant 16 : index
    %c0_49 = arith.constant 0 : index
    %140 = vector.load %arg7[%c16, %c0_49] : memref<24x512xf32, #tpu.memory_space<vmem>>, vector<8x512xf32>
    tpu.vector_store %arg7[%c16, %c0_49], %139 {strides = array<i32>} : memref<24x512xf32, #tpu.memory_space<vmem>>, vector<8x512xf32>,
    return
  }
  func.func @transform_0(%arg0: i32) -> (i32, i32) {
    %c0_i32 = arith.constant 0 : i32
    %c0_i32_0 = arith.constant 0 : i32
    return %c0_i32, %arg0 : i32, i32
  }
  func.func @transform_1(%arg0: i32) -> (i32, i32) {
    %c0_i32 = arith.constant 0 : i32
    %c0_i32_0 = arith.constant 0 : i32
    %c0_i32_1 = arith.constant 0 : i32
    return %c0_i32, %c0_i32_0 : i32, i32
  }
  func.func @transform_2(%arg0: i32) -> (i32, i32) {
    %c0_i32 = arith.constant 0 : i32
    %c0_i32_0 = arith.constant 0 : i32
    %c0_i32_1 = arith.constant 0 : i32
    return %c0_i32, %c0_i32_0 : i32, i32
  }
  func.func @transform_3(%arg0: i32) -> (i32, i32) {
    %c0_i32 = arith.constant 0 : i32
    %c0_i32_0 = arith.constant 0 : i32
    %c0_i32_1 = arith.constant 0 : i32
    return %c0_i32, %c0_i32_0 : i32, i32
  }
  func.func @transform_4(%arg0: i32) -> (i32, i32) {
    %c0_i32 = arith.constant 0 : i32
    %c0_i32_0 = arith.constant 0 : i32
    %c0_i32_1 = arith.constant 0 : i32
    return %c0_i32, %c0_i32_0 : i32, i32
  }
  func.func @transform_5(%arg0: i32) -> (i32, i32) {
    %c0_i32 = arith.constant 0 : i32
    %c0_i32_0 = arith.constant 0 : i32
    %c0_i32_1 = arith.constant 0 : i32
    return %c0_i32, %c0_i32_0 : i32, i32
  }
  func.func @transform_6(%arg0: i32) -> (i32, i32) {
    %c0_i32 = arith.constant 0 : i32
    %c0_i32_0 = arith.constant 0 : i32
    return %c0_i32, %arg0 : i32, i32
  }
}

</mosaic_0001>

<llo_original>
// kernel: dense_block_forward.1
$region0: #{dense_block_forward.1}
  #allocation0 [shape = 'u32[]', space=smem, size = 0x4, offset = 0x4, fixed_abs, tag = 'smem constant byte address 0x4 - core index']
  #allocation1 [shape = 'u32[144,128]{1,0:T(1,128)}', space=vmem, size = 0x12000, scoped, tag = 'internal scratch']
  %s0 = inlined_call_operand.vmem [shape: f32[8,512], index: 0, kind: input, shape index: {}]
  %s1 = inlined_call_operand.vmem [shape: f32[8,512], index: 1, kind: input, shape index: {}]
  %s2 = inlined_call_operand.vmem [shape: f32[24,1], index: 2, kind: input, shape index: {}]
  %s3 = inlined_call_operand.vmem [shape: f32[24,1], index: 3, kind: input, shape index: {}]
  %s4 = inlined_call_operand.vmem [shape: f32[72,8], index: 4, kind: input, shape index: {}]
  %s5 = inlined_call_operand.vmem [shape: f32[72,16], index: 5, kind: input, shape index: {}]
  %s6 = inlined_call_operand.vmem [shape: f32[24,512], index: 6, kind: output, shape index: {}]
  %s7 = sld [smem:[#allocation0]]
  $region34: #{dense_block_forward.1} parent=0
    _
  %s9 = ssub.s32 1, %s7
  %s10 = scalar_select 0, %s9, %s7
  // Predicated region
  $region2: #{dense_block_forward.1} parent=0 // pred_check
    _
  $region3: #{dense_block_forward.1} parent=0 // pred_check_branch
    %12 = sbr.rel (0) target = $region5
  $region4: #{dense_block_forward.1} parent=0 // pred_region
    _
  $region5: #{dense_block_forward.1} parent=0 // pred_fallthru
    _
  // Predicated region
  $region6: #{dense_block_forward.1} parent=0 // pred_check
    _
  $region7: #{dense_block_forward.1} parent=0 // pred_check_branch
    %14 = sbr.rel (0) target = $region9
  $region8: #{dense_block_forward.1} parent=0 // pred_region
    _
  $region9: #{dense_block_forward.1} parent=0 // pred_fallthru
    _
  // Predicated region
  $region10: #{dense_block_forward.1} parent=0 // pred_check
    _
  $region11: #{dense_block_forward.1} parent=0 // pred_check_branch
    %16 = sbr.rel (0) target = $region13
  $region12: #{dense_block_forward.1} parent=0 // pred_region
    _
  $region13: #{dense_block_forward.1} parent=0 // pred_fallthru
    _
  // Predicated region
  $region14: #{dense_block_forward.1} parent=0 // pred_check
    _
  $region15: #{dense_block_forward.1} parent=0 // pred_check_branch
    %18 = sbr.rel (0) target = $region17
  $region16: #{dense_block_forward.1} parent=0 // pred_region
    _
  $region17: #{dense_block_forward.1} parent=0 // pred_fallthru
    _
  // Predicated region
  $region18: #{dense_block_forward.1} parent=0 // pred_check
    _
  $region19: #{dense_block_forward.1} parent=0 // pred_check_branch
    %20 = sbr.rel (0) target = $region21
  $region20: #{dense_block_forward.1} parent=0 // pred_region
    _
  $region21: #{dense_block_forward.1} parent=0 // pred_fallthru
    _
  // Predicated region
  $region22: #{dense_block_forward.1} parent=0 // pred_check
    _
  $region23: #{dense_block_forward.1} parent=0 // pred_check_branch
    %22 = sbr.rel (0) target = $region25
  $region24: #{dense_block_forward.1} parent=0 // pred_region
    _
  $region25: #{dense_block_forward.1} parent=0 // pred_fallthru
    _
  %v23 = vld [vmem:[%s1] sm:$0xff]
  %v24 = vld [vmem:[%s1 + $0x8] sm:$0xff]
  %v25 = vld [vmem:[%s1 + $0x10] sm:$0xff]
  %v26 = vld [vmem:[%s1 + $0x18] sm:$0xff]
  %v27 = vld [vmem:[%s0] sm:$0xff]
  %v28 = vld [vmem:[%s0 + $0x8] sm:$0xff]
  %v29 = vld [vmem:[%s0 + $0x10] sm:$0xff]
  %v30 = vld [vmem:[%s0 + $0x18] sm:$0xff]
  %31 = vst [vmem:[%s6] sm:$0xff] %v27
  %32 = vst [vmem:[%s6 + $0x8] sm:$0xff] %v28
  %33 = vst [vmem:[%s6 + $0x10] sm:$0xff] %v29
  %34 = vst [vmem:[%s6 + $0x18] sm:$0xff] %v30
  %v35 = vld [vmem:[%s2] sm:$0xff]
  %v36 = vld [vmem:[%s3] sm:$0xff]
  %v37 = vld [vmem:[%s6] sm:$0xff]
  %v38 = vld [vmem:[%s6 + $0x8] sm:$0xff]
  %v39 = vld [vmem:[%s6 + $0x10] sm:$0xff]
  %v40 = vld [vmem:[%s6 + $0x18] sm:$0xff]
  %42 = vset.pattern.permute.xlu0 0
  %43 = vperm.xlu0 %42, %v35
  %v44 = vpop.permute.xlu0 %43
  %v46 = vmul.f32 %v37, %v44
  %v47 = vmul.f32 %v38, %v44
  %v48 = vmul.f32 %v39, %v44
  %v49 = vmul.f32 %v40, %v44
  %51 = vset.pattern.permute.xlu0 0
  %52 = vperm.xlu0 %51, %v36
  %v53 = vpop.permute.xlu0 %52
  %v55 = vadd.f32 %v46, %v53
  %v56 = vadd.f32 %v47, %v53
  %v57 = vadd.f32 %v48, %v53
  %v58 = vadd.f32 %v49, %v53
  %v59 = vmax.f32 %v55, 0.0
  %v60 = vmax.f32 %v56, 0.0
  %v61 = vmax.f32 %v57, 0.0
  %v62 = vmax.f32 %v58, 0.0
  %v63 = vld [vmem:[%s4] sm:$0xff]
  %v64 = vld [vmem:[%s4 + $0x8] sm:$0xff]
  %v65 = vld [vmem:[%s4 + $0x10] sm:$0xff]
  %v66 = vld [vmem:[%s4 + $0x18] sm:$0xff]
  %v67 = vld [vmem:[%s4 + $0x20] sm:$0xff]
  %v68 = vld [vmem:[%s4 + $0x28] sm:$0xff]
  %v69 = vld [vmem:[%s4 + $0x30] sm:$0xff]
  %v70 = vld [vmem:[%s4 + $0x38] sm:$0xff]
  %v71 = vld [vmem:[%s4 + $0x40] sm:$0xff]
  %72 = vrot.lane.b32.xlu0 %v59, 17
  %v73 = vpop.permute.xlu0 %72
  %74 = vrot.lane.b32.xlu0 %v60, 17
  %v75 = vpop.permute.xlu0 %74
  %76 = vrot.lane.b32.xlu0 %v61, 17
  %v77 = vpop.permute.xlu0 %76
  %78 = vrot.lane.b32.xlu0 %v62, 17
  %v79 = vpop.permute.xlu0 %78
  %v80 = vlaneseq
  %v81 = vand.u32 %v80, 127
  %vm82 = vcmp.lt.s32.totalorder %v81, 17
  %v83 = vsel %vm82, %v77, %v79
  %v84 = vsel %vm82, %v75, %v77
  %v85 = vsel %vm82, %v73, %v75
  %v86 = vsel %vm82, %v79, %v73
  %v87 = vlaneseq
  %v88 = vshrl.u32 %v87, 7
  %v89 = vsub.s32 0, %v88
  %v90 = vrot.slane %v23, %v89
  %v91 = vlaneseq
  %v92 = vshrl.u32 %v91, 7
  %v93 = vsub.s32 0, %v92
  %v94 = vrot.slane %v24, %v93
  %v95 = vlaneseq
  %v96 = vshrl.u32 %v95, 7
  %v97 = vsub.s32 0, %v96
  %v98 = vrot.slane %v25, %v97
  %v99 = vlaneseq
  %v100 = vshrl.u32 %v99, 7
  %v101 = vsub.s32 0, %v100
  %v102 = vrot.slane %v26, %v101
  %v103 = vmul.f32 %v86, %v90
  %v104 = vmul.f32 %v85, %v94
  %v105 = vmul.f32 %v84, %v98
  %v106 = vmul.f32 %v83, %v102
  %vm107 = vcmask 64512
  %v109 = vsel %vm107, %v63, 0
  %111 = vmatprep.subr.mxu0 %v104
  %112 = vmatpush1.msra.mxu0 %v103
  %113 = vmatprep.subr.mxu0 0.0
  %114 = vmatpush1.msra.mxu0 0.0
  %115 = vmatprep.subr.mxu0 0.0
  %116 = vmatpush1.msra.mxu0 0.0
  %117 = vmatprep.subr.mxu0 0.0
  %118 = vmatpush1.msra.mxu0 0.0
  %119 = vmatprep.subr.mxu0 0.0
  %120 = vmatpush1.msra.mxu0 0.0
  %121 = vmatprep.subr.mxu0 0.0
  %122 = vmatpush1.msra.mxu0 0.0
  %123 = vmatprep.subr.mxu0 0.0
  %124 = vmatpush1.msra.mxu0 0.0
  %125 = vmatprep.subr.mxu0 0.0
  %126 = vmatpush1.msra.mxu0 0.0
  %127 = vmatprep.subr.mxu0 0.0
  %128 = vmatpush1.msra.mxu0 0.0
  %129 = vmatprep.subr.mxu0 0.0
  %130 = vmatpush1.msra.mxu0 0.0
  %131 = vmatprep.subr.mxu0 0.0
  %132 = vmatpush1.msra.mxu0 0.0
  %133 = vmatprep.subr.mxu0 0.0
  %134 = vmatpush1.msra.mxu0 0.0
  %135 = vmatprep.subr.mxu0 0.0
  %136 = vmatpush1.msra.mxu0 0.0
  %137 = vmatprep.subr.mxu0 0.0
  %138 = vmatpush1.msra.mxu0 0.0
  %139 = vmatprep.subr.mxu0 0.0
  %140 = vmatpush1.msra.mxu0 0.0
  %141 = vmatprep.subr.mxu0 0.0
  %142 = vmatpush1.msra.mxu0 0.0
  %143 = vmatprep.subr.mxu0 0.0
  %144 = vmatpush1.msra.mxu0 0.0
  %145 = vmatprep.subr.mxu0 0.0
  %146 = vmatpush1.msra.mxu0 0.0
  %147 = vmatprep.subr.mxu0 0.0
  %148 = vmatpush1.msra.mxu0 0.0
  %149 = vmatprep.subr.mxu0 0.0
  %150 = vmatpush1.msra.mxu0 0.0
  %151 = vmatprep.subr.mxu0 0.0
  %152 = vmatpush1.msra.mxu0 0.0
  %153 = vmatprep.subr.mxu0 0.0
  %154 = vmatpush1.msra.mxu0 0.0
  %155 = vmatprep.subr.mxu0 0.0
  %156 = vmatpush1.msra.mxu0 0.0
  %157 = vmatprep.subr.mxu0 0.0
  %158 = vmatpush1.msra.mxu0 0.0
  %159 = vmatprep.subr.mxu0 0.0
  %160 = vmatpush1.msra.mxu0 0.0
  %161 = vmatprep.subr.mxu0 0.0
  %162 = vmatpush1.msra.mxu0 0.0
  %163 = vmatprep.subr.mxu0 0.0
  %164 = vmatpush1.msra.mxu0 0.0
  %165 = vmatprep.subr.mxu0 0.0
  %166 = vmatpush1.msra.mxu0 0.0
  %167 = vmatprep.subr.mxu0 0.0
  %168 = vmatpush1.msra.mxu0 0.0
  %169 = vmatprep.subr.mxu0 0.0
  %170 = vmatpush1.msra.mxu0 0.0
  %171 = vmatprep.subr.mxu0 0.0
  %172 = vmatpush1.msra.mxu0 0.0
  %173 = vmatprep.subr.mxu0 0.0
  %174 = vmatpush1.msra.mxu0 0.0
  %175 = vmatprep.mubr.f32.mxu0 0.0
  %176 = vmatmul.mubr.f32.gmra.mrb[0].mxu0 %v109
  %v177 = vpop.f32.mrb[0].mxu0
  %v178 = vadd.f32 0.0, %v177
  %v179 = vpop.f32.mrb[0].mxu0
  %v180 = vadd.f32 0.0, %v179
  %181 = vdwg.mxu0
  %182 = vmatprep.subr.mxu0 %v106
  %183 = vmatpush1.msra.mxu0 %v105
  %184 = vmatprep.subr.mxu0 0.0
  %185 = vmatpush1.msra.mxu0 0.0
  %186 = vmatprep.subr.mxu0 0.0
  %187 = vmatpush1.msra.mxu0 0.0
  %188 = vmatprep.subr.mxu0 0.0
  %189 = vmatpush1.msra.mxu0 0.0
  %190 = vmatprep.subr.mxu0 0.0
  %191 = vmatpush1.msra.mxu0 0.0
  %192 = vmatprep.subr.mxu0 0.0
  %193 = vmatpush1.msra.mxu0 0.0
  %194 = vmatprep.subr.mxu0 0.0
  %195 = vmatpush1.msra.mxu0 0.0
  %196 = vmatprep.subr.mxu0 0.0
  %197 = vmatpush1.msra.mxu0 0.0
  %198 = vmatprep.subr.mxu0 0.0
  %199 = vmatpush1.msra.mxu0 0.0
  %200 = vmatprep.subr.mxu0 0.0
  %201 = vmatpush1.msra.mxu0 0.0
  %202 = vmatprep.subr.mxu0 0.0
  %203 = vmatpush1.msra.mxu0 0.0
  %204 = vmatprep.subr.mxu0 0.0
  %205 = vmatpush1.msra.mxu0 0.0
  %206 = vmatprep.subr.mxu0 0.0
  %207 = vmatpush1.msra.mxu0 0.0
  %208 = vmatprep.subr.mxu0 0.0
  %209 = vmatpush1.msra.mxu0 0.0
  %210 = vmatprep.subr.mxu0 0.0
  %211 = vmatpush1.msra.mxu0 0.0
  %212 = vmatprep.subr.mxu0 0.0
  %213 = vmatpush1.msra.mxu0 0.0
  %214 = vmatprep.subr.mxu0 0.0
  %215 = vmatpush1.msra.mxu0 0.0
  %216 = vmatprep.subr.mxu0 0.0
  %217 = vmatpush1.msra.mxu0 0.0
  %218 = vmatprep.subr.mxu0 0.0
  %219 = vmatpush1.msra.mxu0 0.0
  %220 = vmatprep.subr.mxu0 0.0
  %221 = vmatpush1.msra.mxu0 0.0
  %222 = vmatprep.subr.mxu0 0.0
  %223 = vmatpush1.msra.mxu0 0.0
  %224 = vmatprep.subr.mxu0 0.0
  %225 = vmatpush1.msra.mxu0 0.0
  %226 = vmatprep.subr.mxu0 0.0
  %227 = vmatpush1.msra.mxu0 0.0
  %228 = vmatprep.subr.mxu0 0.0
  %229 = vmatpush1.msra.mxu0 0.0
  %230 = vmatprep.subr.mxu0 0.0
  %231 = vmatpush1.msra.mxu0 0.0
  %232 = vmatprep.subr.mxu0 0.0
  %233 = vmatpush1.msra.mxu0 0.0
  %234 = vmatprep.subr.mxu0 0.0
  %235 = vmatpush1.msra.mxu0 0.0
  %236 = vmatprep.subr.mxu0 0.0
  %237 = vmatpush1.msra.mxu0 0.0
  %238 = vmatprep.subr.mxu0 0.0
  %239 = vmatpush1.msra.mxu0 0.0
  %240 = vmatprep.subr.mxu0 0.0
  %241 = vmatpush1.msra.mxu0 0.0
  %242 = vmatprep.subr.mxu0 0.0
  %243 = vmatpush1.msra.mxu0 0.0
  %244 = vmatprep.subr.mxu0 0.0
  %245 = vmatpush1.msra.mxu0 0.0
  %246 = vmatprep.mubr.f32.mxu0 0.0
  %247 = vmatmul.mubr.f32.gmra.mrb[0].mxu0 %v109
  %v248 = vpop.f32.mrb[0].mxu0
  %v249 = vadd.f32 0.0, %v248
  %v250 = vpop.f32.mrb[0].mxu0
  %v251 = vadd.f32 0.0, %v250
  %252 = vdwg.mxu0
  %v254 = vsel %vm107, %v67, 0
  %256 = vmatprep.subr.mxu0 %v60
  %257 = vmatpush1.msra.mxu0 %v59
  %258 = vmatprep.subr.mxu0 0.0
  %259 = vmatpush1.msra.mxu0 0.0
  %260 = vmatprep.subr.mxu0 0.0
  %261 = vmatpush1.msra.mxu0 0.0
  %262 = vmatprep.subr.mxu0 0.0
  %263 = vmatpush1.msra.mxu0 0.0
  %264 = vmatprep.subr.mxu0 0.0
  %265 = vmatpush1.msra.mxu0 0.0
  %266 = vmatprep.subr.mxu0 0.0
  %267 = vmatpush1.msra.mxu0 0.0
  %268 = vmatprep.subr.mxu0 0.0
  %269 = vmatpush1.msra.mxu0 0.0
  %270 = vmatprep.subr.mxu0 0.0
  %271 = vmatpush1.msra.mxu0 0.0
  %272 = vmatprep.subr.mxu0 0.0
  %273 = vmatpush1.msra.mxu0 0.0
  %274 = vmatprep.subr.mxu0 0.0
  %275 = vmatpush1.msra.mxu0 0.0
  %276 = vmatprep.subr.mxu0 0.0
  %277 = vmatpush1.msra.mxu0 0.0
  %278 = vmatprep.subr.mxu0 0.0
  %279 = vmatpush1.msra.mxu0 0.0
  %280 = vmatprep.subr.mxu0 0.0
  %281 = vmatpush1.msra.mxu0 0.0
  %282 = vmatprep.subr.mxu0 0.0
  %283 = vmatpush1.msra.mxu0 0.0
  %284 = vmatprep.subr.mxu0 0.0
  %285 = vmatpush1.msra.mxu0 0.0
  %286 = vmatprep.subr.mxu0 0.0
  %287 = vmatpush1.msra.mxu0 0.0
  %288 = vmatprep.subr.mxu0 0.0
  %289 = vmatpush1.msra.mxu0 0.0
  %290 = vmatprep.subr.mxu0 0.0
  %291 = vmatpush1.msra.mxu0 0.0
  %292 = vmatprep.subr.mxu0 0.0
  %293 = vmatpush1.msra.mxu0 0.0
  %294 = vmatprep.subr.mxu0 0.0
  %295 = vmatpush1.msra.mxu0 0.0
  %296 = vmatprep.subr.mxu0 0.0
  %297 = vmatpush1.msra.mxu0 0.0
  %298 = vmatprep.subr.mxu0 0.0
  %299 = vmatpush1.msra.mxu0 0.0
  %300 = vmatprep.subr.mxu0 0.0
  %301 = vmatpush1.msra.mxu0 0.0
  %302 = vmatprep.subr.mxu0 0.0
  %303 = vmatpush1.msra.mxu0 0.0
  %304 = vmatprep.subr.mxu0 0.0
  %305 = vmatpush1.msra.mxu0 0.0
  %306 = vmatprep.subr.mxu0 0.0
  %307 = vmatpush1.msra.mxu0 0.0
  %308 = vmatprep.subr.mxu0 0.0
  %309 = vmatpush1.msra.mxu0 0.0
  %310 = vmatprep.subr.mxu0 0.0
  %311 = vmatpush1.msra.mxu0 0.0
  %312 = vmatprep.subr.mxu0 0.0
  %313 = vmatpush1.msra.mxu0 0.0
  %314 = vmatprep.subr.mxu0 0.0
  %315 = vmatpush1.msra.mxu0 0.0
  %316 = vmatprep.subr.mxu0 0.0
  %317 = vmatpush1.msra.mxu0 0.0
  %318 = vmatprep.subr.mxu0 0.0
  %319 = vmatpush1.msra.mxu0 0.0
  %320 = vmatprep.mubr.f32.mxu0 0.0
  %321 = vmatmul.mubr.f32.gmra.mrb[0].mxu0 %v254
  %v322 = vpop.f32.mrb[0].mxu0
  %v323 = vadd.f32 %v178, %v322
  %v324 = vpop.f32.mrb[0].mxu0
  %v325 = vadd.f32 %v180, %v324
  %326 = vdwg.mxu0
  %327 = vmatprep.subr.mxu0 %v62
  %328 = vmatpush1.msra.mxu0 %v61
  %329 = vmatprep.subr.mxu0 0.0
  %330 = vmatpush1.msra.mxu0 0.0
  %331 = vmatprep.subr.mxu0 0.0
  %332 = vmatpush1.msra.mxu0 0.0
  %333 = vmatprep.subr.mxu0 0.0
  %334 = vmatpush1.msra.mxu0 0.0
  %335 = vmatprep.subr.mxu0 0.0
  %336 = vmatpush1.msra.mxu0 0.0
  %337 = vmatprep.subr.mxu0 0.0
  %338 = vmatpush1.msra.mxu0 0.0
  %339 = vmatprep.subr.mxu0 0.0
  %340 = vmatpush1.msra.mxu0 0.0
  %341 = vmatprep.subr.mxu0 0.0
  %342 = vmatpush1.msra.mxu0 0.0
  %343 = vmatprep.subr.mxu0 0.0
  %344 = vmatpush1.msra.mxu0 0.0
  %345 = vmatprep.subr.mxu0 0.0
  %346 = vmatpush1.msra.mxu0 0.0
  %347 = vmatprep.subr.mxu0 0.0
  %348 = vmatpush1.msra.mxu0 0.0
  %349 = vmatprep.subr.mxu0 0.0
  %350 = vmatpush1.msra.mxu0 0.0
  %351 = vmatprep.subr.mxu0 0.0
  %352 = vmatpush1.msra.mxu0 0.0
  %353 = vmatprep.subr.mxu0 0.0
  %354 = vmatpush1.msra.mxu0 0.0
  %355 = vmatprep.subr.mxu0 0.0
  %356 = vmatpush1.msra.mxu0 0.0
  %357 = vmatprep.subr.mxu0 0.0
  %358 = vmatpush1.msra.mxu0 0.0
  %359 = vmatprep.subr.mxu0 0.0
  %360 = vmatpush1.msra.mxu0 0.0
  %361 = vmatprep.subr.mxu0 0.0
  %362 = vmatpush1.msra.mxu0 0.0
  %363 = vmatprep.subr.mxu0 0.0
  %364 = vmatpush1.msra.mxu0 0.0
  %365 = vmatprep.subr.mxu0 0.0
  %366 = vmatpush1.msra.mxu0 0.0
  %367 = vmatprep.subr.mxu0 0.0
  %368 = vmatpush1.msra.mxu0 0.0
  %369 = vmatprep.subr.mxu0 0.0
  %370 = vmatpush1.msra.mxu0 0.0
  %371 = vmatprep.subr.mxu0 0.0
  %372 = vmatpush1.msra.mxu0 0.0
  %373 = vmatprep.subr.mxu0 0.0
  %374 = vmatpush1.msra.mxu0 0.0
  %375 = vmatprep.subr.mxu0 0.0
  %376 = vmatpush1.msra.mxu0 0.0
  %377 = vmatprep.subr.mxu0 0.0
  %378 = vmatpush1.msra.mxu0 0.0
  %379 = vmatprep.subr.mxu0 0.0
  %380 = vmatpush1.msra.mxu0 0.0
  %381 = vmatprep.subr.mxu0 0.0
  %382 = vmatpush1.msra.mxu0 0.0
  %383 = vmatprep.subr.mxu0 0.0
  %384 = vmatpush1.msra.mxu0 0.0
  %385 = vmatprep.subr.mxu0 0.0
  %386 = vmatpush1.msra.mxu0 0.0
  %387 = vmatprep.subr.mxu0 0.0
  %388 = vmatpush1.msra.mxu0 0.0
  %389 = vmatprep.subr.mxu0 0.0
  %390 = vmatpush1.msra.mxu0 0.0
  %391 = vmatprep.mubr.f32.mxu0 0.0
  %392 = vmatmul.mubr.f32.gmra.mrb[0].mxu0 %v254
  %v393 = vpop.f32.mrb[0].mxu0
  %v394 = vadd.f32 %v249, %v393
  %v395 = vpop.f32.mrb[0].mxu0
  %v396 = vadd.f32 %v251, %v395
  %397 = vdwg.mxu0
  %398 = vrot.lane.b32.xlu0 %v59, 16
  %v399 = vpop.permute.xlu0 %398
  %400 = vrot.lane.b32.xlu0 %v60, 16
  %v401 = vpop.permute.xlu0 %400
  %402 = vrot.lane.b32.xlu0 %v61, 16
  %v403 = vpop.permute.xlu0 %402
  %404 = vrot.lane.b32.xlu0 %v62, 16
  %v405 = vpop.permute.xlu0 %404
  %vm406 = vcmp.lt.s32.totalorder %v81, 16
  %v407 = vsel %vm406, %v403, %v405
  %v408 = vsel %vm406, %v401, %v403
  %v409 = vsel %vm406, %v399, %v401
  %v410 = vsel %vm406, %v405, %v399
  %v411 = vlaneseq
  %v412 = vshrl.u32 %v411, 7
  %v413 = vsub.s32 1, %v412
  %v414 = vrot.slane %v23, %v413
  %v415 = vlaneseq
  %v416 = vshrl.u32 %v415, 7
  %v417 = vsub.s32 1, %v416
  %v418 = vrot.slane %v24, %v417
  %v419 = vlaneseq
  %v420 = vshrl.u32 %v419, 7
  %v421 = vsub.s32 1, %v420
  %v422 = vrot.slane %v25, %v421
  %v423 = vlaneseq
  %v424 = vshrl.u32 %v423, 7
  %v425 = vsub.s32 1, %v424
  %v426 = vrot.slane %v26, %v425
  %v427 = vmul.f32 %v410, %v414
  %v428 = vmul.f32 %v409, %v418
  %v429 = vmul.f32 %v408, %v422
  %v430 = vmul.f32 %v407, %v426
  %v432 = vsel %vm107, %v64, 0
  %434 = vmatprep.subr.mxu0 %v428
  %435 = vmatpush1.msra.mxu0 %v427
  %436 = vmatprep.subr.mxu0 0.0
  %437 = vmatpush1.msra.mxu0 0.0
  %438 = vmatprep.subr.mxu0 0.0
  %439 = vmatpush1.msra.mxu0 0.0
  %440 = vmatprep.subr.mxu0 0.0
  %441 = vmatpush1.msra.mxu0 0.0
  %442 = vmatprep.subr.mxu0 0.0
  %443 = vmatpush1.msra.mxu0 0.0
  %444 = vmatprep.subr.mxu0 0.0
  %445 = vmatpush1.msra.mxu0 0.0
  %446 = vmatprep.subr.mxu0 0.0
  %447 = vmatpush1.msra.mxu0 0.0
  %448 = vmatprep.subr.mxu0 0.0
  %449 = vmatpush1.msra.mxu0 0.0
  %450 = vmatprep.subr.mxu0 0.0
  %451 = vmatpush1.msra.mxu0 0.0
  %452 = vmatprep.subr.mxu0 0.0
  %453 = vmatpush1.msra.mxu0 0.0
  %454 = vmatprep.subr.mxu0 0.0
  %455 = vmatpush1.msra.mxu0 0.0
  %456 = vmatprep.subr.mxu0 0.0
  %457 = vmatpush1.msra.mxu0 0.0
  %458 = vmatprep.subr.mxu0 0.0
  %459 = vmatpush1.msra.mxu0 0.0
  %460 = vmatprep.subr.mxu0 0.0
  %461 = vmatpush1.msra.mxu0 0.0
  %462 = vmatprep.subr.mxu0 0.0
  %463 = vmatpush1.msra.mxu0 0.0
  %464 = vmatprep.subr.mxu0 0.0
  %465 = vmatpush1.msra.mxu0 0.0
  %466 = vmatprep.subr.mxu0 0.0
  %467 = vmatpush1.msra.mxu0 0.0
  %468 = vmatprep.subr.mxu0 0.0
  %469 = vmatpush1.msra.mxu0 0.0
  %470 = vmatprep.subr.mxu0 0.0
  %471 = vmatpush1.msra.mxu0 0.0
  %472 = vmatprep.subr.mxu0 0.0
  %473 = vmatpush1.msra.mxu0 0.0
  %474 = vmatprep.subr.mxu0 0.0
  %475 = vmatpush1.msra.mxu0 0.0
  %476 = vmatprep.subr.mxu0 0.0
  %477 = vmatpush1.msra.mxu0 0.0
  %478 = vmatprep.subr.mxu0 0.0
  %479 = vmatpush1.msra.mxu0 0.0
  %480 = vmatprep.subr.mxu0 0.0
  %481 = vmatpush1.msra.mxu0 0.0
  %482 = vmatprep.subr.mxu0 0.0
  %483 = vmatpush1.msra.mxu0 0.0
  %484 = vmatprep.subr.mxu0 0.0
  %485 = vmatpush1.msra.mxu0 0.0
  %486 = vmatprep.subr.mxu0 0.0
  %487 = vmatpush1.msra.mxu0 0.0
  %488 = vmatprep.subr.mxu0 0.0
  %489 = vmatpush1.msra.mxu0 0.0
  %490 = vmatprep.subr.mxu0 0.0
  %491 = vmatpush1.msra.mxu0 0.0
  %492 = vmatprep.subr.mxu0 0.0
  %493 = vmatpush1.msra.mxu0 0.0
  %494 = vmatprep.subr.mxu0 0.0
  %495 = vmatpush1.msra.mxu0 0.0
  %496 = vmatprep.subr.mxu0 0.0
  %497 = vmatpush1.msra.mxu0 0.0
  %498 = vmatprep.mubr.f32.mxu0 0.0
  %499 = vmatmul.mubr.f32.gmra.mrb[0].mxu0 %v432
  %v500 = vpop.f32.mrb[0].mxu0
  %v501 = vadd.f32 0.0, %v500
  %v502 = vpop.f32.mrb[0].mxu0
  %v503 = vadd.f32 0.0, %v502
  %504 = vdwg.mxu0
  %505 = vmatprep.subr.mxu0 %v430
  %506 = vmatpush1.msra.mxu0 %v429
  %507 = vmatprep.subr.mxu0 0.0
  %508 = vmatpush1.msra.mxu0 0.0
  %509 = vmatprep.subr.mxu0 0.0
  %510 = vmatpush1.msra.mxu0 0.0
  %511 = vmatprep.subr.mxu0 0.0
  %512 = vmatpush1.msra.mxu0 0.0
  %513 = vmatprep.subr.mxu0 0.0
  %514 = vmatpush1.msra.mxu0 0.0
  %515 = vmatprep.subr.mxu0 0.0
  %516 = vmatpush1.msra.mxu0 0.0
  %517 = vmatprep.subr.mxu0 0.0
  %518 = vmatpush1.msra.mxu0 0.0
  %519 = vmatprep.subr.mxu0 0.0
  %520 = vmatpush1.msra.mxu0 0.0
  %521 = vmatprep.subr.mxu0 0.0
  %522 = vmatpush1.msra.mxu0 0.0
  %523 = vmatprep.subr.mxu0 0.0
  %524 = vmatpush1.msra.mxu0 0.0
  %525 = vmatprep.subr.mxu0 0.0
  %526 = vmatpush1.msra.mxu0 0.0
  %527 = vmatprep.subr.mxu0 0.0
  %528 = vmatpush1.msra.mxu0 0.0
  %529 = vmatprep.subr.mxu0 0.0
  %530 = vmatpush1.msra.mxu0 0.0
  %531 = vmatprep.subr.mxu0 0.0
  %532 = vmatpush1.msra.mxu0 0.0
  %533 = vmatprep.subr.mxu0 0.0
  %534 = vmatpush1.msra.mxu0 0.0
  %535 = vmatprep.subr.mxu0 0.0
  %536 = vmatpush1.msra.mxu0 0.0
  %537 = vmatprep.subr.mxu0 0.0
  %538 = vmatpush1.msra.mxu0 0.0
  %539 = vmatprep.subr.mxu0 0.0
  %540 = vmatpush1.msra.mxu0 0.0
  %541 = vmatprep.subr.mxu0 0.0
  %542 = vmatpush1.msra.mxu0 0.0
  %543 = vmatprep.subr.mxu0 0.0
  %544 = vmatpush1.msra.mxu0 0.0
  %545 = vmatprep.subr.mxu0 0.0
  %546 = vmatpush1.msra.mxu0 0.0
  %547 = vmatprep.subr.mxu0 0.0
  %548 = vmatpush1.msra.mxu0 0.0
  %549 = vmatprep.subr.mxu0 0.0
  %550 = vmatpush1.msra.mxu0 0.0
  %551 = vmatprep.subr.mxu0 0.0
  %552 = vmatpush1.msra.mxu0 0.0
  %553 = vmatprep.subr.mxu0 0.0
  %554 = vmatpush1.msra.mxu0 0.0
  %555 = vmatprep.subr.mxu0 0.0
  %556 = vmatpush1.msra.mxu0 0.0
  %557 = vmatprep.subr.mxu0 0.0
  %558 = vmatpush1.msra.mxu0 0.0
  %559 = vmatprep.subr.mxu0 0.0
  %560 = vmatpush1.msra.mxu0 0.0
  %561 = vmatprep.subr.mxu0 0.0
  %562 = vmatpush1.msra.mxu0 0.0
  %563 = vmatprep.subr.mxu0 0.0
  %564 = vmatpush1.msra.mxu0 0.0
  %565 = vmatprep.subr.mxu0 0.0
  %566 = vmatpush1.msra.mxu0 0.0
  %567 = vmatprep.subr.mxu0 0.0
  %568 = vmatpush1.msra.mxu0 0.0
  %569 = vmatprep.mubr.f32.mxu0 0.0
  %570 = vmatmul.mubr.f32.gmra.mrb[0].mxu0 %v432
  %v571 = vpop.f32.mrb[0].mxu0
  %v572 = vadd.f32 0.0, %v571
  %v573 = vpop.f32.mrb[0].mxu0
  %v574 = vadd.f32 0.0, %v573
  %575 = vdwg.mxu0
  %v576 = vadd.f32 %v323, %v501
  %v577 = vadd.f32 %v325, %v503
  %v578 = vadd.f32 %v394, %v572
  %v579 = vadd.f32 %v396, %v574
  %580 = vrot.lane.b32.xlu0 %v59, 15
  %v581 = vpop.permute.xlu0 %580
  %582 = vrot.lane.b32.xlu0 %v60, 15
  %v583 = vpop.permute.xlu0 %582
  %584 = vrot.lane.b32.xlu0 %v61, 15
  %v585 = vpop.permute.xlu0 %584
  %586 = vrot.lane.b32.xlu0 %v62, 15
  %v587 = vpop.permute.xlu0 %586
  %vm588 = vcmp.lt.s32.totalorder %v81, 15
  %v589 = vsel %vm588, %v585, %v587
  %v590 = vsel %vm588, %v583, %v585
  %v591 = vsel %vm588, %v581, %v583
  %v592 = vsel %vm588, %v587, %v581
  %v593 = vlaneseq
  %v594 = vshrl.u32 %v593, 7
  %v595 = vsub.s32 2, %v594
  %v596 = vrot.slane %v23, %v595
  %v597 = vlaneseq
  %v598 = vshrl.u32 %v597, 7
  %v599 = vsub.s32 2, %v598
  %v600 = vrot.slane %v24, %v599
  %v601 = vlaneseq
  %v602 = vshrl.u32 %v601, 7
  %v603 = vsub.s32 2, %v602
  %v604 = vrot.slane %v25, %v603
  %v605 = vlaneseq
  %v606 = vshrl.u32 %v605, 7
  %v607 = vsub.s32 2, %v606
  %v608 = vrot.slane %v26, %v607
  %v609 = vmul.f32 %v592, %v596
  %v610 = vmul.f32 %v591, %v600
  %v611 = vmul.f32 %v590, %v604
  %v612 = vmul.f32 %v589, %v608
  %v614 = vsel %vm107, %v65, 0
  %616 = vmatprep.subr.mxu0 %v610
  %617 = vmatpush1.msra.mxu0 %v609
  %618 = vmatprep.subr.mxu0 0.0
  %619 = vmatpush1.msra.mxu0 0.0
  %620 = vmatprep.subr.mxu0 0.0
  %621 = vmatpush1.msra.mxu0 0.0
  %622 = vmatprep.subr.mxu0 0.0
  %623 = vmatpush1.msra.mxu0 0.0
  %624 = vmatprep.subr.mxu0 0.0
  %625 = vmatpush1.msra.mxu0 0.0
  %626 = vmatprep.subr.mxu0 0.0
  %627 = vmatpush1.msra.mxu0 0.0
  %628 = vmatprep.subr.mxu0 0.0
  %629 = vmatpush1.msra.mxu0 0.0
  %630 = vmatprep.subr.mxu0 0.0
  %631 = vmatpush1.msra.mxu0 0.0
  %632 = vmatprep.subr.mxu0 0.0
  %633 = vmatpush1.msra.mxu0 0.0
  %634 = vmatprep.subr.mxu0 0.0
  %635 = vmatpush1.msra.mxu0 0.0
  %636 = vmatprep.subr.mxu0 0.0
  %637 = vmatpush1.msra.mxu0 0.0
  %638 = vmatprep.subr.mxu0 0.0
  %639 = vmatpush1.msra.mxu0 0.0
  %640 = vmatprep.subr.mxu0 0.0
  %641 = vmatpush1.msra.mxu0 0.0
  %642 = vmatprep.subr.mxu0 0.0
  %643 = vmatpush1.msra.mxu0 0.0
  %644 = vmatprep.subr.mxu0 0.0
  %645 = vmatpush1.msra.mxu0 0.0
  %646 = vmatprep.subr.mxu0 0.0
  %647 = vmatpush1.msra.mxu0 0.0
  %648 = vmatprep.subr.mxu0 0.0
  %649 = vmatpush1.msra.mxu0 0.0
  %650 = vmatprep.subr.mxu0 0.0
  %651 = vmatpush1.msra.mxu0 0.0
  %652 = vmatprep.subr.mxu0 0.0
  %653 = vmatpush1.msra.mxu0 0.0
  %654 = vmatprep.subr.mxu0 0.0
  %655 = vmatpush1.msra.mxu0 0.0
  %656 = vmatprep.subr.mxu0 0.0
  %657 = vmatpush1.msra.mxu0 0.0
  %658 = vmatprep.subr.mxu0 0.0
  %659 = vmatpush1.msra.mxu0 0.0
  %660 = vmatprep.subr.mxu0 0.0
  %661 = vmatpush1.msra.mxu0 0.0
  %662 = vmatprep.subr.mxu0 0.0
  %663 = vmatpush1.msra.mxu0 0.0
  %664 = vmatprep.subr.mxu0 0.0
  %665 = vmatpush1.msra.mxu0 0.0
  %666 = vmatprep.subr.mxu0 0.0
  %667 = vmatpush1.msra.mxu0 0.0
  %668 = vmatprep.subr.mxu0 0.0
  %669 = vmatpush1.msra.mxu0 0.0
  %670 = vmatprep.subr.mxu0 0.0
  %671 = vmatpush1.msra.mxu0 0.0
  %672 = vmatprep.subr.mxu0 0.0
  %673 = vmatpush1.msra.mxu0 0.0
  %674 = vmatprep.subr.mxu0 0.0
  %675 = vmatpush1.msra.mxu0 0.0
  %676 = vmatprep.subr.mxu0 0.0
  %677 = vmatpush1.msra.mxu0 0.0
  %678 = vmatprep.subr.mxu0 0.0
  %679 = vmatpush1.msra.mxu0 0.0
  %680 = vmatprep.mubr.f32.mxu0 0.0
  %681 = vmatmul.mubr.f32.gmra.mrb[0].mxu0 %v614
  %v682 = vpop.f32.mrb[0].mxu0
  %v683 = vadd.f32 0.0, %v682
  %v684 = vpop.f32.mrb[0].mxu0
  %v685 = vadd.f32 0.0, %v684
  %686 = vdwg.mxu0
  %687 = vmatprep.subr.mxu0 %v612
  %688 = vmatpush1.msra.mxu0 %v611
  %689 = vmatprep.subr.mxu0 0.0
  %690 = vmatpush1.msra.mxu0 0.0
  %691 = vmatprep.subr.mxu0 0.0
  %692 = vmatpush1.msra.mxu0 0.0
  %693 = vmatprep.subr.mxu0 0.0
  %694 = vmatpush1.msra.mxu0 0.0
  %695 = vmatprep.subr.mxu0 0.0
  %696 = vmatpush1.msra.mxu0 0.0
  %697 = vmatprep.subr.mxu0 0.0
  %698 = vmatpush1.msra.mxu0 0.0
  %699 = vmatprep.subr.mxu0 0.0
  %700 = vmatpush1.msra.mxu0 0.0
  %701 = vmatprep.subr.mxu0 0.0
  %702 = vmatpush1.msra.mxu0 0.0
  %703 = vmatprep.subr.mxu0 0.0
  %704 = vmatpush1.msra.mxu0 0.0
  %705 = vmatprep.subr.mxu0 0.0
  %706 = vmatpush1.msra.mxu0 0.0
  %707 = vmatprep.subr.mxu0 0.0
  %708 = vmatpush1.msra.mxu0 0.0
  %709 = vmatprep.subr.mxu0 0.0
  %710 = vmatpush1.msra.mxu0 0.0
  %711 = vmatprep.subr.mxu0 0.0
  %712 = vmatpush1.msra.mxu0 0.0
  %713 = vmatprep.subr.mxu0 0.0
  %714 = vmatpush1.msra.mxu0 0.0
  %715 = vmatprep.subr.mxu0 0.0
  %716 = vmatpush1.msra.mxu0 0.0
  %717 = vmatprep.subr.mxu0 0.0
  %718 = vmatpush1.msra.mxu0 0.0
  %719 = vmatprep.subr.mxu0 0.0
  %720 = vmatpush1.msra.mxu0 0.0
  %721 = vmatprep.subr.mxu0 0.0
  %722 = vmatpush1.msra.mxu0 0.0
  %723 = vmatprep.subr.mxu0 0.0
  %724 = vmatpush1.msra.mxu0 0.0
  %725 = vmatprep.subr.mxu0 0.0
  %726 = vmatpush1.msra.mxu0 0.0
  %727 = vmatprep.subr.mxu0 0.0
  %728 = vmatpush1.msra.mxu0 0.0
  %729 = vmatprep.subr.mxu0 0.0
  %730 = vmatpush1.msra.mxu0 0.0
  %731 = vmatprep.subr.mxu0 0.0
  %732 = vmatpush1.msra.mxu0 0.0
  %733 = vmatprep.subr.mxu0 0.0
  %734 = vmatpush1.msra.mxu0 0.0
  %735 = vmatprep.subr.mxu0 0.0
  %736 = vmatpush1.msra.mxu0 0.0
  %737 = vmatprep.subr.mxu0 0.0
  %738 = vmatpush1.msra.mxu0 0.0
  %739 = vmatprep.subr.mxu0 0.0
  %740 = vmatpush1.msra.mxu0 0.0
  %741 = vmatprep.subr.mxu0 0.0
  %742 = vmatpush1.msra.mxu0 0.0
  %743 = vmatprep.subr.mxu0 0.0
  %744 = vmatpush1.msra.mxu0 0.0
  %745 = vmatprep.subr.mxu0 0.0
  %746 = vmatpush1.msra.mxu0 0.0
  %747 = vmatprep.subr.mxu0 0.0
  %748 = vmatpush1.msra.mxu0 0.0
  %749 = vmatprep.subr.mxu0 0.0
  %750 = vmatpush1.msra.mxu0 0.0
  %751 = vmatprep.mubr.f32.mxu0 0.0
  %752 = vmatmul.mubr.f32.gmra.mrb[0].mxu0 %v614
  %v753 = vpop.f32.mrb[0].mxu0
  %v754 = vadd.f32 0.0, %v753
  %v755 = vpop.f32.mrb[0].mxu0
  %v756 = vadd.f32 0.0, %v755
  %757 = vdwg.mxu0
  %v758 = vadd.f32 %v576, %v683
  %v759 = vadd.f32 %v577, %v685
  %v760 = vadd.f32 %v578, %v754
  %v761 = vadd.f32 %v579, %v756
  %762 = vrot.lane.b32.xlu0 %v59, 1
  %v763 = vpop.permute.xlu0 %762
  %764 = vrot.lane.b32.xlu0 %v60, 1
  %v765 = vpop.permute.xlu0 %764
  %766 = vrot.lane.b32.xlu0 %v61, 1
  %v767 = vpop.permute.xlu0 %766
  %768 = vrot.lane.b32.xlu0 %v62, 1
  %v769 = vpop.permute.xlu0 %768
  %vm770 = vcmp.lt.s32.totalorder %v81, 1
  %v771 = vsel %vm770, %v767, %v769
  %v772 = vsel %vm770, %v765, %v767
  %v773 = vsel %vm770, %v763, %v765
  %v774 = vsel %vm770, %v769, %v763
  %v775 = vlaneseq
  %v776 = vshrl.u32 %v775, 7
  %v777 = vsub.s32 3, %v776
  %v778 = vrot.slane %v23, %v777
  %v779 = vlaneseq
  %v780 = vshrl.u32 %v779, 7
  %v781 = vsub.s32 3, %v780
  %v782 = vrot.slane %v24, %v781
  %v783 = vlaneseq
  %v784 = vshrl.u32 %v783, 7
  %v785 = vsub.s32 3, %v784
  %v786 = vrot.slane %v25, %v785
  %v787 = vlaneseq
  %v788 = vshrl.u32 %v787, 7
  %v789 = vsub.s32 3, %v788
  %v790 = vrot.slane %v26, %v789
  %v791 = vmul.f32 %v774, %v778
  %v792 = vmul.f32 %v773, %v782
  %v793 = vmul.f32 %v772, %v786
  %v794 = vmul.f32 %v771, %v790
  %v796 = vsel %vm107, %v66, 0
  %798 = vmatprep.subr.mxu0 %v792
  %799 = vmatpush1.msra.mxu0 %v791
  %800 = vmatprep.subr.mxu0 0.0
  %801 = vmatpush1.msra.mxu0 0.0
  %802 = vmatprep.subr.mxu0 0.0
  %803 = vmatpush1.msra.mxu0 0.0
  %804 = vmatprep.subr.mxu0 0.0
  %805 = vmatpush1.msra.mxu0 0.0
  %806 = vmatprep.subr.mxu0 0.0
  %807 = vmatpush1.msra.mxu0 0.0
  %808 = vmatprep.subr.mxu0 0.0
  %809 = vmatpush1.msra.mxu0 0.0
  %810 = vmatprep.subr.mxu0 0.0
  %811 = vmatpush1.msra.mxu0 0.0
  %812 = vmatprep.subr.mxu0 0.0
  %813 = vmatpush1.msra.mxu0 0.0
  %814 = vmatprep.subr.mxu0 0.0
  %815 = vmatpush1.msra.mxu0 0.0
  %816 = vmatprep.subr.mxu0 0.0
  %817 = vmatpush1.msra.mxu0 0.0
  %818 = vmatprep.subr.mxu0 0.0
  %819 = vmatpush1.msra.mxu0 0.0
  %820 = vmatprep.subr.mxu0 0.0
  %821 = vmatpush1.msra.mxu0 0.0
  %822 = vmatprep.subr.mxu0 0.0
  %823 = vmatpush1.msra.mxu0 0.0
  %824 = vmatprep.subr.mxu0 0.0
  %825 = vmatpush1.msra.mxu0 0.0
  %826 = vmatprep.subr.mxu0 0.0
  %827 = vmatpush1.msra.mxu0 0.0
  %828 = vmatprep.subr.mxu0 0.0
  %829 = vmatpush1.msra.mxu0 0.0
  %830 = vmatprep.subr.mxu0 0.0
  %831 = vmatpush1.msra.mxu0 0.0
  %832 = vmatprep.subr.mxu0 0.0
  %833 = vmatpush1.msra.mxu0 0.0
  %834 = vmatprep.subr.mxu0 0.0
  %835 = vmatpush1.msra.mxu0 0.0
  %836 = vmatprep.subr.mxu0 0.0
  %837 = vmatpush1.msra.mxu0 0.0
  %838 = vmatprep.subr.mxu0 0.0
  %839 = vmatpush1.msra.mxu0 0.0
  %840 = vmatprep.subr.mxu0 0.0
  %841 = vmatpush1.msra.mxu0 0.0
  %842 = vmatprep.subr.mxu0 0.0
  %843 = vmatpush1.msra.mxu0 0.0
  %844 = vmatprep.subr.mxu0 0.0
  %845 = vmatpush1.msra.mxu0 0.0
  %846 = vmatprep.subr.mxu0 0.0
  %847 = vmatpush1.msra.mxu0 0.0
  %848 = vmatprep.subr.mxu0 0.0
  %849 = vmatpush1.msra.mxu0 0.0
  %850 = vmatprep.subr.mxu0 0.0
  %851 = vmatpush1.msra.mxu0 0.0
  %852 = vmatprep.subr.mxu0 0.0
  %853 = vmatpush1.msra.mxu0 0.0
  %854 = vmatprep.subr.mxu0 0.0
  %855 = vmatpush1.msra.mxu0 0.0
  %856 = vmatprep.subr.mxu0 0.0
  %857 = vmatpush1.msra.mxu0 0.0
  %858 = vmatprep.subr.mxu0 0.0
  %859 = vmatpush1.msra.mxu0 0.0
  %860 = vmatprep.subr.mxu0 0.0
  %861 = vmatpush1.msra.mxu0 0.0
  %862 = vmatprep.mubr.f32.mxu0 0.0
  %863 = vmatmul.mubr.f32.gmra.mrb[0].mxu0 %v796
  %v864 = vpop.f32.mrb[0].mxu0
  %v865 = vadd.f32 0.0, %v864
  %v866 = vpop.f32.mrb[0].mxu0
  %v867 = vadd.f32 0.0, %v866
  %868 = vdwg.mxu0
  %869 = vmatprep.subr.mxu0 %v794
  %870 = vmatpush1.msra.mxu0 %v793
  %871 = vmatprep.subr.mxu0 0.0
  %872 = vmatpush1.msra.mxu0 0.0
  %873 = vmatprep.subr.mxu0 0.0
  %874 = vmatpush1.msra.mxu0 0.0
  %875 = vmatprep.subr.mxu0 0.0
  %876 = vmatpush1.msra.mxu0 0.0
  %877 = vmatprep.subr.mxu0 0.0
  %878 = vmatpush1.msra.mxu0 0.0
  %879 = vmatprep.subr.mxu0 0.0
  %880 = vmatpush1.msra.mxu0 0.0
  %881 = vmatprep.subr.mxu0 0.0
  %882 = vmatpush1.msra.mxu0 0.0
  %883 = vmatprep.subr.mxu0 0.0
  %884 = vmatpush1.msra.mxu0 0.0
  %885 = vmatprep.subr.mxu0 0.0
  %886 = vmatpush1.msra.mxu0 0.0
  %887 = vmatprep.subr.mxu0 0.0
  %888 = vmatpush1.msra.mxu0 0.0
  %889 = vmatprep.subr.mxu0 0.0
  %890 = vmatpush1.msra.mxu0 0.0
  %891 = vmatprep.subr.mxu0 0.0
  %892 = vmatpush1.msra.mxu0 0.0
  %893 = vmatprep.subr.mxu0 0.0
  %894 = vmatpush1.msra.mxu0 0.0
  %895 = vmatprep.subr.mxu0 0.0
  %896 = vmatpush1.msra.mxu0 0.0
  %897 = vmatprep.subr.mxu0 0.0
  %898 = vmatpush1.msra.mxu0 0.0
  %899 = vmatprep.subr.mxu0 0.0
  %900 = vmatpush1.msra.mxu0 0.0
  %901 = vmatprep.subr.mxu0 0.0
  %902 = vmatpush1.msra.mxu0 0.0
  %903 = vmatprep.subr.mxu0 0.0
  %904 = vmatpush1.msra.mxu0 0.0
  %905 = vmatprep.subr.mxu0 0.0
  %906 = vmatpush1.msra.mxu0 0.0
  %907 = vmatprep.subr.mxu0 0.0
  %908 = vmatpush1.msra.mxu0 0.0
  %909 = vmatprep.subr.mxu0 0.0
  %910 = vmatpush1.msra.mxu0 0.0
  %911 = vmatprep.subr.mxu0 0.0
  %912 = vmatpush1.msra.mxu0 0.0
  %913 = vmatprep.subr.mxu0 0.0
  %914 = vmatpush1.msra.mxu0 0.0
  %915 = vmatprep.subr.mxu0 0.0
  %916 = vmatpush1.msra.mxu0 0.0
  %917 = vmatprep.subr.mxu0 0.0
  %918 = vmatpush1.msra.mxu0 0.0
  %919 = vmatprep.subr.mxu0 0.0
  %920 = vmatpush1.msra.mxu0 0.0
  %921 = vmatprep.subr.mxu0 0.0
  %922 = vmatpush1.msra.mxu0 0.0
  %923 = vmatprep.subr.mxu0 0.0
  %924 = vmatpush1.msra.mxu0 0.0
  %925 = vmatprep.subr.mxu0 0.0
  %926 = vmatpush1.msra.mxu0 0.0
  %927 = vmatprep.subr.mxu0 0.0
  %928 = vmatpush1.msra.mxu0 0.0
  %929 = vmatprep.subr.mxu0 0.0
  %930 = vmatpush1.msra.mxu0 0.0
  %931 = vmatprep.subr.mxu0 0.0
  %932 = vmatpush1.msra.mxu0 0.0
  %933 = vmatprep.mubr.f32.mxu0 0.0
  %934 = vmatmul.mubr.f32.gmra.mrb[0].mxu0 %v796
  %v935 = vpop.f32.mrb[0].mxu0
  %v936 = vadd.f32 0.0, %v935
  %v937 = vpop.f32.mrb[0].mxu0
  %v938 = vadd.f32 0.0, %v937
  %939 = vdwg.mxu0
  %v940 = vadd.f32 %v758, %v865
  %v941 = vadd.f32 %v759, %v867
  %v942 = vadd.f32 %v760, %v936
  %v943 = vadd.f32 %v761, %v938
  %944 = vrot.lane.b32.xlu0 %v59, 127
  %v945 = vpop.permute.xlu0 %944
  %946 = vrot.lane.b32.xlu0 %v60, 127
  %v947 = vpop.permute.xlu0 %946
  %948 = vrot.lane.b32.xlu0 %v61, 127
  %v949 = vpop.permute.xlu0 %948
  %950 = vrot.lane.b32.xlu0 %v62, 127
  %v951 = vpop.permute.xlu0 %950
  %vm952 = vcmp.lt.s32.totalorder %v81, 127
  %v953 = vsel %vm952, %v949, %v951
  %v954 = vsel %vm952, %v947, %v949
  %v955 = vsel %vm952, %v945, %v947
  %v956 = vsel %vm952, %v951, %v945
  %v957 = vlaneseq
  %v958 = vshrl.u32 %v957, 7
  %v959 = vsub.s32 4, %v958
  %v960 = vrot.slane %v23, %v959
  %v961 = vlaneseq
  %v962 = vshrl.u32 %v961, 7
  %v963 = vsub.s32 4, %v962
  %v964 = vrot.slane %v24, %v963
  %v965 = vlaneseq
  %v966 = vshrl.u32 %v965, 7
  %v967 = vsub.s32 4, %v966
  %v968 = vrot.slane %v25, %v967
  %v969 = vlaneseq
  %v970 = vshrl.u32 %v969, 7
  %v971 = vsub.s32 4, %v970
  %v972 = vrot.slane %v26, %v971
  %v973 = vmul.f32 %v955, %v960
  %v974 = vmul.f32 %v954, %v964
  %v975 = vmul.f32 %v953, %v968
  %v976 = vmul.f32 %v956, %v972
  %v978 = vsel %vm107, %v68, 0
  %980 = vmatprep.subr.mxu0 %v974
  %981 = vmatpush1.msra.mxu0 %v973
  %982 = vmatprep.subr.mxu0 0.0
  %983 = vmatpush1.msra.mxu0 0.0
  %984 = vmatprep.subr.mxu0 0.0
  %985 = vmatpush1.msra.mxu0 0.0
  %986 = vmatprep.subr.mxu0 0.0
  %987 = vmatpush1.msra.mxu0 0.0
  %988 = vmatprep.subr.mxu0 0.0
  %989 = vmatpush1.msra.mxu0 0.0
  %990 = vmatprep.subr.mxu0 0.0
  %991 = vmatpush1.msra.mxu0 0.0
  %992 = vmatprep.subr.mxu0 0.0
  %993 = vmatpush1.msra.mxu0 0.0
  %994 = vmatprep.subr.mxu0 0.0
  %995 = vmatpush1.msra.mxu0 0.0
  %996 = vmatprep.subr.mxu0 0.0
  %997 = vmatpush1.msra.mxu0 0.0
  %998 = vmatprep.subr.mxu0 0.0
  %999 = vmatpush1.msra.mxu0 0.0
  %1000 = vmatprep.subr.mxu0 0.0
  %1001 = vmatpush1.msra.mxu0 0.0
  %1002 = vmatprep.subr.mxu0 0.0
  %1003 = vmatpush1.msra.mxu0 0.0
  %1004 = vmatprep.subr.mxu0 0.0
  %1005 = vmatpush1.msra.mxu0 0.0
  %1006 = vmatprep.subr.mxu0 0.0
  %1007 = vmatpush1.msra.mxu0 0.0
  %1008 = vmatprep.subr.mxu0 0.0
  %1009 = vmatpush1.msra.mxu0 0.0
  %1010 = vmatprep.subr.mxu0 0.0
  %1011 = vmatpush1.msra.mxu0 0.0
  %1012 = vmatprep.subr.mxu0 0.0
  %1013 = vmatpush1.msra.mxu0 0.0
  %1014 = vmatprep.subr.mxu0 0.0
  %1015 = vmatpush1.msra.mxu0 0.0
  %1016 = vmatprep.subr.mxu0 0.0
  %1017 = vmatpush1.msra.mxu0 0.0
  %1018 = vmatprep.subr.mxu0 0.0
  %1019 = vmatpush1.msra.mxu0 0.0
  %1020 = vmatprep.subr.mxu0 0.0
  %1021 = vmatpush1.msra.mxu0 0.0
  %1022 = vmatprep.subr.mxu0 0.0
  %1023 = vmatpush1.msra.mxu0 0.0
  %1024 = vmatprep.subr.mxu0 0.0
  %1025 = vmatpush1.msra.mxu0 0.0
  %1026 = vmatprep.subr.mxu0 0.0
  %1027 = vmatpush1.msra.mxu0 0.0
  %1028 = vmatprep.subr.mxu0 0.0
  %1029 = vmatpush1.msra.mxu0 0.0
  %1030 = vmatprep.subr.mxu0 0.0
  %1031 = vmatpush1.msra.mxu0 0.0
  %1032 = vmatprep.subr.mxu0 0.0
  %1033 = vmatpush1.msra.mxu0 0.0
  %1034 = vmatprep.subr.mxu0 0.0
  %1035 = vmatpush1.msra.mxu0 0.0
  %1036 = vmatprep.subr.mxu0 0.0
  %1037 = vmatpush1.msra.mxu0 0.0
  %1038 = vmatprep.subr.mxu0 0.0
  %1039 = vmatpush1.msra.mxu0 0.0
  %1040 = vmatprep.subr.mxu0 0.0
  %1041 = vmatpush1.msra.mxu0 0.0
  %1042 = vmatprep.subr.mxu0 0.0
  %1043 = vmatpush1.msra.mxu0 0.0
  %1044 = vmatprep.mubr.f32.mxu0 0.0
  %1045 = vmatmul.mubr.f32.gmra.mrb[0].mxu0 %v978
  %v1046 = vpop.f32.mrb[0].mxu0
  %v1047 = vadd.f32 0.0, %v1046
  %v1048 = vpop.f32.mrb[0].mxu0
  %v1049 = vadd.f32 0.0, %v1048
  %1050 = vdwg.mxu0
  %1051 = vmatprep.subr.mxu0 %v976
  %1052 = vmatpush1.msra.mxu0 %v975
  %1053 = vmatprep.subr.mxu0 0.0
  %1054 = vmatpush1.msra.mxu0 0.0
  %1055 = vmatprep.subr.mxu0 0.0
  %1056 = vmatpush1.msra.mxu0 0.0
  %1057 = vmatprep.subr.mxu0 0.0
  %1058 = vmatpush1.msra.mxu0 0.0
  %1059 = vmatprep.subr.mxu0 0.0
  %1060 = vmatpush1.msra.mxu0 0.0
  %1061 = vmatprep.subr.mxu0 0.0
  %1062 = vmatpush1.msra.mxu0 0.0
  %1063 = vmatprep.subr.mxu0 0.0
  %1064 = vmatpush1.msra.mxu0 0.0
  %1065 = vmatprep.subr.mxu0 0.0
  %1066 = vmatpush1.msra.mxu0 0.0
  %1067 = vmatprep.subr.mxu0 0.0
  %1068 = vmatpush1.msra.mxu0 0.0
  %1069 = vmatprep.subr.mxu0 0.0
  %1070 = vmatpush1.msra.mxu0 0.0
  %1071 = vmatprep.subr.mxu0 0.0
  %1072 = vmatpush1.msra.mxu0 0.0
  %1073 = vmatprep.subr.mxu0 0.0
  %1074 = vmatpush1.msra.mxu0 0.0
  %1075 = vmatprep.subr.mxu0 0.0
  %1076 = vmatpush1.msra.mxu0 0.0
  %1077 = vmatprep.subr.mxu0 0.0
  %1078 = vmatpush1.msra.mxu0 0.0
  %1079 = vmatprep.subr.mxu0 0.0
  %1080 = vmatpush1.msra.mxu0 0.0
  %1081 = vmatprep.subr.mxu0 0.0
  %1082 = vmatpush1.msra.mxu0 0.0
  %1083 = vmatprep.subr.mxu0 0.0
  %1084 = vmatpush1.msra.mxu0 0.0
  %1085 = vmatprep.subr.mxu0 0.0
  %1086 = vmatpush1.msra.mxu0 0.0
  %1087 = vmatprep.subr.mxu0 0.0
  %1088 = vmatpush1.msra.mxu0 0.0
  %1089 = vmatprep.subr.mxu0 0.0
  %1090 = vmatpush1.msra.mxu0 0.0
  %1091 = vmatprep.subr.mxu0 0.0
  %1092 = vmatpush1.msra.mxu0 0.0
  %1093 = vmatprep.subr.mxu0 0.0
  %1094 = vmatpush1.msra.mxu0 0.0
  %1095 = vmatprep.subr.mxu0 0.0
  %1096 = vmatpush1.msra.mxu0 0.0
  %1097 = vmatprep.subr.mxu0 0.0
  %1098 = vmatpush1.msra.mxu0 0.0
  %1099 = vmatprep.subr.mxu0 0.0
  %1100 = vmatpush1.msra.mxu0 0.0
  %1101 = vmatprep.subr.mxu0 0.0
  %1102 = vmatpush1.msra.mxu0 0.0
  %1103 = vmatprep.subr.mxu0 0.0
  %1104 = vmatpush1.msra.mxu0 0.0
  %1105 = vmatprep.subr.mxu0 0.0
  %1106 = vmatpush1.msra.mxu0 0.0
  %1107 = vmatprep.subr.mxu0 0.0
  %1108 = vmatpush1.msra.mxu0 0.0
  %1109 = vmatprep.subr.mxu0 0.0
  %1110 = vmatpush1.msra.mxu0 0.0
  %1111 = vmatprep.subr.mxu0 0.0
  %1112 = vmatpush1.msra.mxu0 0.0
  %1113 = vmatprep.subr.mxu0 0.0
  %1114 = vmatpush1.msra.mxu0 0.0
  %1115 = vmatprep.mubr.f32.mxu0 0.0
  %1116 = vmatmul.mubr.f32.gmra.mrb[0].mxu0 %v978
  %v1117 = vpop.f32.mrb[0].mxu0
  %v1118 = vadd.f32 0.0, %v1117
  %v1119 = vpop.f32.mrb[0].mxu0
  %v1120 = vadd.f32 0.0, %v1119
  %1121 = vdwg.mxu0
  %v1122 = vadd.f32 %v940, %v1047
  %v1123 = vadd.f32 %v941, %v1049
  %v1124 = vadd.f32 %v942, %v1118
  %v1125 = vadd.f32 %v943, %v1120
  %1126 = vrot.lane.b32.xlu0 %v59, 113
  %v1127 = vpop.permute.xlu0 %1126
  %1128 = vrot.lane.b32.xlu0 %v60, 113
  %v1129 = vpop.permute.xlu0 %1128
  %1130 = vrot.lane.b32.xlu0 %v61, 113
  %v1131 = vpop.permute.xlu0 %1130
  %1132 = vrot.lane.b32.xlu0 %v62, 113
  %v1133 = vpop.permute.xlu0 %1132
  %vm1134 = vcmp.lt.s32.totalorder %v81, 113
  %v1135 = vsel %vm1134, %v1131, %v1133
  %v1136 = vsel %vm1134, %v1129, %v1131
  %v1137 = vsel %vm1134, %v1127, %v1129
  %v1138 = vsel %vm1134, %v1133, %v1127
  %v1139 = vlaneseq
  %v1140 = vshrl.u32 %v1139, 7
  %v1141 = vsub.s32 5, %v1140
  %v1142 = vrot.slane %v23, %v1141
  %v1143 = vlaneseq
  %v1144 = vshrl.u32 %v1143, 7
  %v1145 = vsub.s32 5, %v1144
  %v1146 = vrot.slane %v24, %v1145
  %v1147 = vlaneseq
  %v1148 = vshrl.u32 %v1147, 7
  %v1149 = vsub.s32 5, %v1148
  %v1150 = vrot.slane %v25, %v1149
  %v1151 = vlaneseq
  %v1152 = vshrl.u32 %v1151, 7
  %v1153 = vsub.s32 5, %v1152
  %v1154 = vrot.slane %v26, %v1153
  %v1155 = vmul.f32 %v1137, %v1142
  %v1156 = vmul.f32 %v1136, %v1146
  %v1157 = vmul.f32 %v1135, %v1150
  %v1158 = vmul.f32 %v1138, %v1154
  %v1160 = vsel %vm107, %v69, 0
  %1162 = vmatprep.subr.mxu0 %v1156
  %1163 = vmatpush1.msra.mxu0 %v1155
  %1164 = vmatprep.subr.mxu0 0.0
  %1165 = vmatpush1.msra.mxu0 0.0
  %1166 = vmatprep.subr.mxu0 0.0
  %1167 = vmatpush1.msra.mxu0 0.0
  %1168 = vmatprep.subr.mxu0 0.0
  %1169 = vmatpush1.msra.mxu0 0.0
  %1170 = vmatprep.subr.mxu0 0.0
  %1171 = vmatpush1.msra.mxu0 0.0
  %1172 = vmatprep.subr.mxu0 0.0
  %1173 = vmatpush1.msra.mxu0 0.0
  %1174 = vmatprep.subr.mxu0 0.0
  %1175 = vmatpush1.msra.mxu0 0.0
  %1176 = vmatprep.subr.mxu0 0.0
  %1177 = vmatpush1.msra.mxu0 0.0
  %1178 = vmatprep.subr.mxu0 0.0
  %1179 = vmatpush1.msra.mxu0 0.0
  %1180 = vmatprep.subr.mxu0 0.0
  %1181 = vmatpush1.msra.mxu0 0.0
  %1182 = vmatprep.subr.mxu0 0.0
  %1183 = vmatpush1.msra.mxu0 0.0
  %1184 = vmatprep.subr.mxu0 0.0
  %1185 = vmatpush1.msra.mxu0 0.0
  %1186 = vmatprep.subr.mxu0 0.0
  %1187 = vmatpush1.msra.mxu0 0.0
  %1188 = vmatprep.subr.mxu0 0.0
  %1189 = vmatpush1.msra.mxu0 0.0
  %1190 = vmatprep.subr.mxu0 0.0
  %1191 = vmatpush1.msra.mxu0 0.0
  %1192 = vmatprep.subr.mxu0 0.0
  %1193 = vmatpush1.msra.mxu0 0.0
  %1194 = vmatprep.subr.mxu0 0.0
  %1195 = vmatpush1.msra.mxu0 0.0
  %1196 = vmatprep.subr.mxu0 0.0
  %1197 = vmatpush1.msra.mxu0 0.0
  %1198 = vmatprep.subr.mxu0 0.0
  %1199 = vmatpush1.msra.mxu0 0.0
  %1200 = vmatprep.subr.mxu0 0.0
  %1201 = vmatpush1.msra.mxu0 0.0
  %1202 = vmatprep.subr.mxu0 0.0
  %1203 = vmatpush1.msra.mxu0 0.0
  %1204 = vmatprep.subr.mxu0 0.0
  %1205 = vmatpush1.msra.mxu0 0.0
  %1206 = vmatprep.subr.mxu0 0.0
  %1207 = vmatpush1.msra.mxu0 0.0
  %1208 = vmatprep.subr.mxu0 0.0
  %1209 = vmatpush1.msra.mxu0 0.0
  %1210 = vmatprep.subr.mxu0 0.0
  %1211 = vmatpush1.msra.mxu0 0.0
  %1212 = vmatprep.subr.mxu0 0.0
  %1213 = vmatpush1.msra.mxu0 0.0
  %1214 = vmatprep.subr.mxu0 0.0
  %1215 = vmatpush1.msra.mxu0 0.0
  %1216 = vmatprep.subr.mxu0 0.0
  %1217 = vmatpush1.msra.mxu0 0.0
  %1218 = vmatprep.subr.mxu0 0.0
  %1219 = vmatpush1.msra.mxu0 0.0
  %1220 = vmatprep.subr.mxu0 0.0
  %1221 = vmatpush1.msra.mxu0 0.0
  %1222 = vmatprep.subr.mxu0 0.0
  %1223 = vmatpush1.msra.mxu0 0.0
  %1224 = vmatprep.subr.mxu0 0.0
  %1225 = vmatpush1.msra.mxu0 0.0
  %1226 = vmatprep.mubr.f32.mxu0 0.0
  %1227 = vmatmul.mubr.f32.gmra.mrb[0].mxu0 %v1160
  %v1228 = vpop.f32.mrb[0].mxu0
  %v1229 = vadd.f32 0.0, %v1228
  %v1230 = vpop.f32.mrb[0].mxu0
  %v1231 = vadd.f32 0.0, %v1230
  %1232 = vdwg.mxu0
  %1233 = vmatprep.subr.mxu0 %v1158
  %1234 = vmatpush1.msra.mxu0 %v1157
  %1235 = vmatprep.subr.mxu0 0.0
  %1236 = vmatpush1.msra.mxu0 0.0
  %1237 = vmatprep.subr.mxu0 0.0
  %1238 = vmatpush1.msra.mxu0 0.0
  %1239 = vmatprep.subr.mxu0 0.0
  %1240 = vmatpush1.msra.mxu0 0.0
  %1241 = vmatprep.subr.mxu0 0.0
  %1242 = vmatpush1.msra.mxu0 0.0
  %1243 = vmatprep.subr.mxu0 0.0
  %1244 = vmatpush1.msra.mxu0 0.0
  %1245 = vmatprep.subr.mxu0 0.0
  %1246 = vmatpush1.msra.mxu0 0.0
  %1247 = vmatprep.subr.mxu0 0.0
  %1248 = vmatpush1.msra.mxu0 0.0
  %1249 = vmatprep.subr.mxu0 0.0
  %1250 = vmatpush1.msra.mxu0 0.0
  %1251 = vmatprep.subr.mxu0 0.0
  %1252 = vmatpush1.msra.mxu0 0.0
  %1253 = vmatprep.subr.mxu0 0.0
  %1254 = vmatpush1.msra.mxu0 0.0
  %1255 = vmatprep.subr.mxu0 0.0
  %1256 = vmatpush1.msra.mxu0 0.0
  %1257 = vmatprep.subr.mxu0 0.0
  %1258 = vmatpush1.msra.mxu0 0.0
  %1259 = vmatprep.subr.mxu0 0.0
  %1260 = vmatpush1.msra.mxu0 0.0
  %1261 = vmatprep.subr.mxu0 0.0
  %1262 = vmatpush1.msra.mxu0 0.0
  %1263 = vmatprep.subr.mxu0 0.0
  %1264 = vmatpush1.msra.mxu0 0.0
  %1265 = vmatprep.subr.mxu0 0.0
  %1266 = vmatpush1.msra.mxu0 0.0
  %1267 = vmatprep.subr.mxu0 0.0
  %1268 = vmatpush1.msra.mxu0 0.0
  %1269 = vmatprep.subr.mxu0 0.0
  %1270 = vmatpush1.msra.mxu0 0.0
  %1271 = vmatprep.subr.mxu0 0.0
  %1272 = vmatpush1.msra.mxu0 0.0
  %1273 = vmatprep.subr.mxu0 0.0
  %1274 = vmatpush1.msra.mxu0 0.0
  %1275 = vmatprep.subr.mxu0 0.0
  %1276 = vmatpush1.msra.mxu0 0.0
  %1277 = vmatprep.subr.mxu0 0.0
  %1278 = vmatpush1.msra.mxu0 0.0
  %1279 = vmatprep.subr.mxu0 0.0
  %1280 = vmatpush1.msra.mxu0 0.0
  %1281 = vmatprep.subr.mxu0 0.0
  %1282 = vmatpush1.msra.mxu0 0.0
  %1283 = vmatprep.subr.mxu0 0.0
  %1284 = vmatpush1.msra.mxu0 0.0
  %1285 = vmatprep.subr.mxu0 0.0
  %1286 = vmatpush1.msra.mxu0 0.0
  %1287 = vmatprep.subr.mxu0 0.0
  %1288 = vmatpush1.msra.mxu0 0.0
  %1289 = vmatprep.subr.mxu0 0.0
  %1290 = vmatpush1.msra.mxu0 0.0
  %1291 = vmatprep.subr.mxu0 0.0
  %1292 = vmatpush1.msra.mxu0 0.0
  %1293 = vmatprep.subr.mxu0 0.0
  %1294 = vmatpush1.msra.mxu0 0.0
  %1295 = vmatprep.subr.mxu0 0.0
  %1296 = vmatpush1.msra.mxu0 0.0
  %1297 = vmatprep.mubr.f32.mxu0 0.0
  %1298 = vmatmul.mubr.f32.gmra.mrb[0].mxu0 %v1160
  %v1299 = vpop.f32.mrb[0].mxu0
  %v1300 = vadd.f32 0.0, %v1299
  %v1301 = vpop.f32.mrb[0].mxu0
  %v1302 = vadd.f32 0.0, %v1301
  %1303 = vdwg.mxu0
  %v1304 = vadd.f32 %v1122, %v1229
  %v1305 = vadd.f32 %v1123, %v1231
  %v1306 = vadd.f32 %v1124, %v1300
  %v1307 = vadd.f32 %v1125, %v1302
  %1308 = vrot.lane.b32.xlu0 %v59, 112
  %v1309 = vpop.permute.xlu0 %1308
  %1310 = vrot.lane.b32.xlu0 %v60, 112
  %v1311 = vpop.permute.xlu0 %1310
  %1312 = vrot.lane.b32.xlu0 %v61, 112
  %v1313 = vpop.permute.xlu0 %1312
  %1314 = vrot.lane.b32.xlu0 %v62, 112
  %v1315 = vpop.permute.xlu0 %1314
  %vm1316 = vcmp.lt.s32.totalorder %v81, 112
  %v1317 = vsel %vm1316, %v1313, %v1315
  %v1318 = vsel %vm1316, %v1311, %v1313
  %v1319 = vsel %vm1316, %v1309, %v1311
  %v1320 = vsel %vm1316, %v1315, %v1309
  %v1321 = vlaneseq
  %v1322 = vshrl.u32 %v1321, 7
  %v1323 = vsub.s32 6, %v1322
  %v1324 = vrot.slane %v23, %v1323
  %v1325 = vlaneseq
  %v1326 = vshrl.u32 %v1325, 7
  %v1327 = vsub.s32 6, %v1326
  %v1328 = vrot.slane %v24, %v1327
  %v1329 = vlaneseq
  %v1330 = vshrl.u32 %v1329, 7
  %v1331 = vsub.s32 6, %v1330
  %v1332 = vrot.slane %v25, %v1331
  %v1333 = vlaneseq
  %v1334 = vshrl.u32 %v1333, 7
  %v1335 = vsub.s32 6, %v1334
  %v1336 = vrot.slane %v26, %v1335
  %v1337 = vmul.f32 %v1319, %v1324
  %v1338 = vmul.f32 %v1318, %v1328
  %v1339 = vmul.f32 %v1317, %v1332
  %v1340 = vmul.f32 %v1320, %v1336
  %v1342 = vsel %vm107, %v70, 0
  %1344 = vmatprep.subr.mxu0 %v1338
  %1345 = vmatpush1.msra.mxu0 %v1337
  %1346 = vmatprep.subr.mxu0 0.0
  %1347 = vmatpush1.msra.mxu0 0.0
  %1348 = vmatprep.subr.mxu0 0.0
  %1349 = vmatpush1.msra.mxu0 0.0
  %1350 = vmatprep.subr.mxu0 0.0
  %1351 = vmatpush1.msra.mxu0 0.0
  %1352 = vmatprep.subr.mxu0 0.0
  %1353 = vmatpush1.msra.mxu0 0.0
  %1354 = vmatprep.subr.mxu0 0.0
  %1355 = vmatpush1.msra.mxu0 0.0
  %1356 = vmatprep.subr.mxu0 0.0
  %1357 = vmatpush1.msra.mxu0 0.0
  %1358 = vmatprep.subr.mxu0 0.0
  %1359 = vmatpush1.msra.mxu0 0.0
  %1360 = vmatprep.subr.mxu0 0.0
  %1361 = vmatpush1.msra.mxu0 0.0
  %1362 = vmatprep.subr.mxu0 0.0
  %1363 = vmatpush1.msra.mxu0 0.0
  %1364 = vmatprep.subr.mxu0 0.0
  %1365 = vmatpush1.msra.mxu0 0.0
  %1366 = vmatprep.subr.mxu0 0.0
  %1367 = vmatpush1.msra.mxu0 0.0
  %1368 = vmatprep.subr.mxu0 0.0
  %1369 = vmatpush1.msra.mxu0 0.0
  %1370 = vmatprep.subr.mxu0 0.0
  %1371 = vmatpush1.msra.mxu0 0.0
  %1372 = vmatprep.subr.mxu0 0.0
  %1373 = vmatpush1.msra.mxu0 0.0
  %1374 = vmatprep.subr.mxu0 0.0
  %1375 = vmatpush1.msra.mxu0 0.0
  %1376 = vmatprep.subr.mxu0 0.0
  %1377 = vmatpush1.msra.mxu0 0.0
  %1378 = vmatprep.subr.mxu0 0.0
  %1379 = vmatpush1.msra.mxu0 0.0
  %1380 = vmatprep.subr.mxu0 0.0
  %1381 = vmatpush1.msra.mxu0 0.0
  %1382 = vmatprep.subr.mxu0 0.0
  %1383 = vmatpush1.msra.mxu0 0.0
  %1384 = vmatprep.subr.mxu0 0.0
  %1385 = vmatpush1.msra.mxu0 0.0
  %1386 = vmatprep.subr.mxu0 0.0
  %1387 = vmatpush1.msra.mxu0 0.0
  %1388 = vmatprep.subr.mxu0 0.0
  %1389 = vmatpush1.msra.mxu0 0.0
  %1390 = vmatprep.subr.mxu0 0.0
  %1391 = vmatpush1.msra.mxu0 0.0
  %1392 = vmatprep.subr.mxu0 0.0
  %1393 = vmatpush1.msra.mxu0 0.0
  %1394 = vmatprep.subr.mxu0 0.0
  %1395 = vmatpush1.msra.mxu0 0.0
  %1396 = vmatprep.subr.mxu0 0.0
  %1397 = vmatpush1.msra.mxu0 0.0
  %1398 = vmatprep.subr.mxu0 0.0
  %1399 = vmatpush1.msra.mxu0 0.0
  %1400 = vmatprep.subr.mxu0 0.0
  %1401 = vmatpush1.msra.mxu0 0.0
  %1402 = vmatprep.subr.mxu0 0.0
  %1403 = vmatpush1.msra.mxu0 0.0
  %1404 = vmatprep.subr.mxu0 0.0
  %1405 = vmatpush1.msra.mxu0 0.0
  %1406 = vmatprep.subr.mxu0 0.0
  %1407 = vmatpush1.msra.mxu0 0.0
  %1408 = vmatprep.mubr.f32.mxu0 0.0
  %1409 = vmatmul.mubr.f32.gmra.mrb[0].mxu0 %v1342
  %v1410 = vpop.f32.mrb[0].mxu0
  %v1411 = vadd.f32 0.0, %v1410
  %v1412 = vpop.f32.mrb[0].mxu0
  %v1413 = vadd.f32 0.0, %v1412
  %1414 = vdwg.mxu0
  %1415 = vmatprep.subr.mxu0 %v1340
  %1416 = vmatpush1.msra.mxu0 %v1339
  %1417 = vmatprep.subr.mxu0 0.0
  %1418 = vmatpush1.msra.mxu0 0.0
  %1419 = vmatprep.subr.mxu0 0.0
  %1420 = vmatpush1.msra.mxu0 0.0
  %1421 = vmatprep.subr.mxu0 0.0
  %1422 = vmatpush1.msra.mxu0 0.0
  %1423 = vmatprep.subr.mxu0 0.0
  %1424 = vmatpush1.msra.mxu0 0.0
  %1425 = vmatprep.subr.mxu0 0.0
  %1426 = vmatpush1.msra.mxu0 0.0
  %1427 = vmatprep.subr.mxu0 0.0
  %1428 = vmatpush1.msra.mxu0 0.0
  %1429 = vmatprep.subr.mxu0 0.0
  %1430 = vmatpush1.msra.mxu0 0.0
  %1431 = vmatprep.subr.mxu0 0.0
  %1432 = vmatpush1.msra.mxu0 0.0
  %1433 = vmatprep.subr.mxu0 0.0
  %1434 = vmatpush1.msra.mxu0 0.0
  %1435 = vmatprep.subr.mxu0 0.0
  %1436 = vmatpush1.msra.mxu0 0.0
  %1437 = vmatprep.subr.mxu0 0.0
  %1438 = vmatpush1.msra.mxu0 0.0
  %1439 = vmatprep.subr.mxu0 0.0
  %1440 = vmatpush1.msra.mxu0 0.0
  %1441 = vmatprep.subr.mxu0 0.0
  %1442 = vmatpush1.msra.mxu0 0.0
  %1443 = vmatprep.subr.mxu0 0.0
  %1444 = vmatpush1.msra.mxu0 0.0
  %1445 = vmatprep.subr.mxu0 0.0
  %1446 = vmatpush1.msra.mxu0 0.0
  %1447 = vmatprep.subr.mxu0 0.0
  %1448 = vmatpush1.msra.mxu0 0.0
  %1449 = vmatprep.subr.mxu0 0.0
  %1450 = vmatpush1.msra.mxu0 0.0
  %1451 = vmatprep.subr.mxu0 0.0
  %1452 = vmatpush1.msra.mxu0 0.0
  %1453 = vmatprep.subr.mxu0 0.0
  %1454 = vmatpush1.msra.mxu0 0.0
  %1455 = vmatprep.subr.mxu0 0.0
  %1456 = vmatpush1.msra.mxu0 0.0
  %1457 = vmatprep.subr.mxu0 0.0
  %1458 = vmatpush1.msra.mxu0 0.0
  %1459 = vmatprep.subr.mxu0 0.0
  %1460 = vmatpush1.msra.mxu0 0.0
  %1461 = vmatprep.subr.mxu0 0.0
  %1462 = vmatpush1.msra.mxu0 0.0
  %1463 = vmatprep.subr.mxu0 0.0
  %1464 = vmatpush1.msra.mxu0 0.0
  %1465 = vmatprep.subr.mxu0 0.0
  %1466 = vmatpush1.msra.mxu0 0.0
  %1467 = vmatprep.subr.mxu0 0.0
  %1468 = vmatpush1.msra.mxu0 0.0
  %1469 = vmatprep.subr.mxu0 0.0
  %1470 = vmatpush1.msra.mxu0 0.0
  %1471 = vmatprep.subr.mxu0 0.0
  %1472 = vmatpush1.msra.mxu0 0.0
  %1473 = vmatprep.subr.mxu0 0.0
  %1474 = vmatpush1.msra.mxu0 0.0
  %1475 = vmatprep.subr.mxu0 0.0
  %1476 = vmatpush1.msra.mxu0 0.0
  %1477 = vmatprep.subr.mxu0 0.0
  %1478 = vmatpush1.msra.mxu0 0.0
  %1479 = vmatprep.mubr.f32.mxu0 0.0
  %1480 = vmatmul.mubr.f32.gmra.mrb[0].mxu0 %v1342
  %v1481 = vpop.f32.mrb[0].mxu0
  %v1482 = vadd.f32 0.0, %v1481
  %v1483 = vpop.f32.mrb[0].mxu0
  %v1484 = vadd.f32 0.0, %v1483
  %1485 = vdwg.mxu0
  %v1486 = vadd.f32 %v1304, %v1411
  %v1487 = vadd.f32 %v1305, %v1413
  %v1488 = vadd.f32 %v1306, %v1482
  %v1489 = vadd.f32 %v1307, %v1484
  %1490 = vrot.lane.b32.xlu0 %v59, 111
  %v1491 = vpop.permute.xlu0 %1490
  %1492 = vrot.lane.b32.xlu0 %v60, 111
  %v1493 = vpop.permute.xlu0 %1492
  %1494 = vrot.lane.b32.xlu0 %v61, 111
  %v1495 = vpop.permute.xlu0 %1494
  %1496 = vrot.lane.b32.xlu0 %v62, 111
  %v1497 = vpop.permute.xlu0 %1496
  %vm1498 = vcmp.lt.s32.totalorder %v81, 111
  %v1499 = vsel %vm1498, %v1495, %v1497
  %v1500 = vsel %vm1498, %v1493, %v1495
  %v1501 = vsel %vm1498, %v1491, %v1493
  %v1502 = vsel %vm1498, %v1497, %v1491
  %v1503 = vlaneseq
  %v1504 = vshrl.u32 %v1503, 7
  %v1505 = vsub.s32 7, %v1504
  %v1506 = vrot.slane %v23, %v1505
  %v1507 = vlaneseq
  %v1508 = vshrl.u32 %v1507, 7
  %v1509 = vsub.s32 7, %v1508
  %v1510 = vrot.slane %v24, %v1509
  %v1511 = vlaneseq
  %v1512 = vshrl.u32 %v1511, 7
  %v1513 = vsub.s32 7, %v1512
  %v1514 = vrot.slane %v25, %v1513
  %v1515 = vlaneseq
  %v1516 = vshrl.u32 %v1515, 7
  %v1517 = vsub.s32 7, %v1516
  %v1518 = vrot.slane %v26, %v1517
  %v1519 = vmul.f32 %v1501, %v1506
  %v1520 = vmul.f32 %v1500, %v1510
  %v1521 = vmul.f32 %v1499, %v1514
  %v1522 = vmul.f32 %v1502, %v1518
  %v1524 = vsel %vm107, %v71, 0
  %1526 = vmatprep.subr.mxu0 %v1520
  %1527 = vmatpush1.msra.mxu0 %v1519
  %1528 = vmatprep.subr.mxu0 0.0
  %1529 = vmatpush1.msra.mxu0 0.0
  %1530 = vmatprep.subr.mxu0 0.0
  %1531 = vmatpush1.msra.mxu0 0.0
  %1532 = vmatprep.subr.mxu0 0.0
  %1533 = vmatpush1.msra.mxu0 0.0
  %1534 = vmatprep.subr.mxu0 0.0
  %1535 = vmatpush1.msra.mxu0 0.0
  %1536 = vmatprep.subr.mxu0 0.0
  %1537 = vmatpush1.msra.mxu0 0.0
  %1538 = vmatprep.subr.mxu0 0.0
  %1539 = vmatpush1.msra.mxu0 0.0
  %1540 = vmatprep.subr.mxu0 0.0
  %1541 = vmatpush1.msra.mxu0 0.0
  %1542 = vmatprep.subr.mxu0 0.0
  %1543 = vmatpush1.msra.mxu0 0.0
  %1544 = vmatprep.subr.mxu0 0.0
  %1545 = vmatpush1.msra.mxu0 0.0
  %1546 = vmatprep.subr.mxu0 0.0
  %1547 = vmatpush1.msra.mxu0 0.0
  %1548 = vmatprep.subr.mxu0 0.0
  %1549 = vmatpush1.msra.mxu0 0.0
  %1550 = vmatprep.subr.mxu0 0.0
  %1551 = vmatpush1.msra.mxu0 0.0
  %1552 = vmatprep.subr.mxu0 0.0
  %1553 = vmatpush1.msra.mxu0 0.0
  %1554 = vmatprep.subr.mxu0 0.0
  %1555 = vmatpush1.msra.mxu0 0.0
  %1556 = vmatprep.subr.mxu0 0.0
  %1557 = vmatpush1.msra.mxu0 0.0
  %1558 = vmatprep.subr.mxu0 0.0
  %1559 = vmatpush1.msra.mxu0 0.0
  %1560 = vmatprep.subr.mxu0 0.0
  %1561 = vmatpush1.msra.mxu0 0.0
  %1562 = vmatprep.subr.mxu0 0.0
  %1563 = vmatpush1.msra.mxu0 0.0
  %1564 = vmatprep.subr.mxu0 0.0
  %1565 = vmatpush1.msra.mxu0 0.0
  %1566 = vmatprep.subr.mxu0 0.0
  %1567 = vmatpush1.msra.mxu0 0.0
  %1568 = vmatprep.subr.mxu0 0.0
  %1569 = vmatpush1.msra.mxu0 0.0
  %1570 = vmatprep.subr.mxu0 0.0
  %1571 = vmatpush1.msra.mxu0 0.0
  %1572 = vmatprep.subr.mxu0 0.0
  %1573 = vmatpush1.msra.mxu0 0.0
  %1574 = vmatprep.subr.mxu0 0.0
  %1575 = vmatpush1.msra.mxu0 0.0
  %1576 = vmatprep.subr.mxu0 0.0
  %1577 = vmatpush1.msra.mxu0 0.0
  %1578 = vmatprep.subr.mxu0 0.0
  %1579 = vmatpush1.msra.mxu0 0.0
  %1580 = vmatprep.subr.mxu0 0.0
  %1581 = vmatpush1.msra.mxu0 0.0
  %1582 = vmatprep.subr.mxu0 0.0
  %1583 = vmatpush1.msra.mxu0 0.0
  %1584 = vmatprep.subr.mxu0 0.0
  %1585 = vmatpush1.msra.mxu0 0.0
  %1586 = vmatprep.subr.mxu0 0.0
  %1587 = vmatpush1.msra.mxu0 0.0
  %1588 = vmatprep.subr.mxu0 0.0
  %1589 = vmatpush1.msra.mxu0 0.0
  %1590 = vmatprep.mubr.f32.mxu0 0.0
  %1591 = vmatmul.mubr.f32.gmra.mrb[0].mxu0 %v1524
  %v1592 = vpop.f32.mrb[0].mxu0
  %v1593 = vadd.f32 0.0, %v1592
  %v1594 = vpop.f32.mrb[0].mxu0
  %v1595 = vadd.f32 0.0, %v1594
  %1596 = vdwg.mxu0
  %1597 = vmatprep.subr.mxu0 %v1522
  %1598 = vmatpush1.msra.mxu0 %v1521
  %1599 = vmatprep.subr.mxu0 0.0
  %1600 = vmatpush1.msra.mxu0 0.0
  %1601 = vmatprep.subr.mxu0 0.0
  %1602 = vmatpush1.msra.mxu0 0.0
  %1603 = vmatprep.subr.mxu0 0.0
  %1604 = vmatpush1.msra.mxu0 0.0
  %1605 = vmatprep.subr.mxu0 0.0
  %1606 = vmatpush1.msra.mxu0 0.0
  %1607 = vmatprep.subr.mxu0 0.0
  %1608 = vmatpush1.msra.mxu0 0.0
  %1609 = vmatprep.subr.mxu0 0.0
  %1610 = vmatpush1.msra.mxu0 0.0
  %1611 = vmatprep.subr.mxu0 0.0
  %1612 = vmatpush1.msra.mxu0 0.0
  %1613 = vmatprep.subr.mxu0 0.0
  %1614 = vmatpush1.msra.mxu0 0.0
  %1615 = vmatprep.subr.mxu0 0.0
  %1616 = vmatpush1.msra.mxu0 0.0
  %1617 = vmatprep.subr.mxu0 0.0
  %1618 = vmatpush1.msra.mxu0 0.0
  %1619 = vmatprep.subr.mxu0 0.0
  %1620 = vmatpush1.msra.mxu0 0.0
  %1621 = vmatprep.subr.mxu0 0.0
  %1622 = vmatpush1.msra.mxu0 0.0
  %1623 = vmatprep.subr.mxu0 0.0
  %1624 = vmatpush1.msra.mxu0 0.0
  %1625 = vmatprep.subr.mxu0 0.0
  %1626 = vmatpush1.msra.mxu0 0.0
  %1627 = vmatprep.subr.mxu0 0.0
  %1628 = vmatpush1.msra.mxu0 0.0
  %1629 = vmatprep.subr.mxu0 0.0
  %1630 = vmatpush1.msra.mxu0 0.0
  %1631 = vmatprep.subr.mxu0 0.0
  %1632 = vmatpush1.msra.mxu0 0.0
  %1633 = vmatprep.subr.mxu0 0.0
  %1634 = vmatpush1.msra.mxu0 0.0
  %1635 = vmatprep.subr.mxu0 0.0
  %1636 = vmatpush1.msra.mxu0 0.0
  %1637 = vmatprep.subr.mxu0 0.0
  %1638 = vmatpush1.msra.mxu0 0.0
  %1639 = vmatprep.subr.mxu0 0.0
  %1640 = vmatpush1.msra.mxu0 0.0
  %1641 = vmatprep.subr.mxu0 0.0
  %1642 = vmatpush1.msra.mxu0 0.0
  %1643 = vmatprep.subr.mxu0 0.0
  %1644 = vmatpush1.msra.mxu0 0.0
  %1645 = vmatprep.subr.mxu0 0.0
  %1646 = vmatpush1.msra.mxu0 0.0
  %1647 = vmatprep.subr.mxu0 0.0
  %1648 = vmatpush1.msra.mxu0 0.0
  %1649 = vmatprep.subr.mxu0 0.0
  %1650 = vmatpush1.msra.mxu0 0.0
  %1651 = vmatprep.subr.mxu0 0.0
  %1652 = vmatpush1.msra.mxu0 0.0
  %1653 = vmatprep.subr.mxu0 0.0
  %1654 = vmatpush1.msra.mxu0 0.0
  %1655 = vmatprep.subr.mxu0 0.0
  %1656 = vmatpush1.msra.mxu0 0.0
  %1657 = vmatprep.subr.mxu0 0.0
  %1658 = vmatpush1.msra.mxu0 0.0
  %1659 = vmatprep.subr.mxu0 0.0
  %1660 = vmatpush1.msra.mxu0 0.0
  %1661 = vmatprep.mubr.f32.mxu0 0.0
  %1662 = vmatmul.mubr.f32.gmra.mrb[0].mxu0 %v1524
  %v1663 = vpop.f32.mrb[0].mxu0
  %v1664 = vadd.f32 0.0, %v1663
  %v1665 = vpop.f32.mrb[0].mxu0
  %v1666 = vadd.f32 0.0, %v1665
  %1667 = vdwg.mxu0
  %v1668 = vadd.f32 %v1486, %v1593
  %v1669 = vadd.f32 %v1487, %v1595
  %v1670 = vadd.f32 %v1488, %v1664
  %v1671 = vadd.f32 %v1489, %v1666
  %1672 = vst [vmem:[%s6 + $0x20] sm:$0xff] %v1668
  %1673 = vst [vmem:[%s6 + $0x28] sm:$0xff] %v1669
  %1674 = vst [vmem:[%s6 + $0x30] sm:$0xff] %v1670
  %1675 = vst [vmem:[%s6 + $0x38] sm:$0xff] %v1671
  %v1676 = vld [vmem:[%s2 + $0x8] sm:$0xff]
  %v1677 = vld [vmem:[%s2 + $0x10] sm:$0xff]
  %v1678 = vld [vmem:[%s3 + $0x8] sm:$0xff]
  %v1679 = vld [vmem:[%s3 + $0x10] sm:$0xff]
  %v1680 = vld [vmem:[%s6] sm:$0xff]
  %v1681 = vld [vmem:[%s6 + $0x8] sm:$0xff]
  %v1682 = vld [vmem:[%s6 + $0x10] sm:$0xff]
  %v1683 = vld [vmem:[%s6 + $0x18] sm:$0xff]
  %v1684 = vld [vmem:[%s6 + $0x20] sm:$0xff]
  %v1685 = vld [vmem:[%s6 + $0x28] sm:$0xff]
  %v1686 = vld [vmem:[%s6 + $0x30] sm:$0xff]
  %v1687 = vld [vmem:[%s6 + $0x38] sm:$0xff]
  %1689 = vset.pattern.permute.xlu0 0
  %1690 = vperm.xlu0 %1689, %v1676
  %v1691 = vpop.permute.xlu0 %1690
  %1694 = vset.pattern.permute.xlu0 0
  %1695 = vperm.xlu0 %1694, %v1677
  %v1696 = vpop.permute.xlu0 %1695
  %v1698 = vmul.f32 %v1680, %v1691
  %v1699 = vmul.f32 %v1681, %v1691
  %v1700 = vmul.f32 %v1682, %v1691
  %v1701 = vmul.f32 %v1683, %v1691
  %v1702 = vmul.f32 %v1684, %v1696
  %v1703 = vmul.f32 %v1685, %v1696
  %v1704 = vmul.f32 %v1686, %v1696
  %v1705 = vmul.f32 %v1687, %v1696
  %1707 = vset.pattern.permute.xlu0 0
  %1708 = vperm.xlu0 %1707, %v1678
  %v1709 = vpop.permute.xlu0 %1708
  %1712 = vset.pattern.permute.xlu0 0
  %1713 = vperm.xlu0 %1712, %v1679
  %v1714 = vpop.permute.xlu0 %1713
  %v1716 = vadd.f32 %v1698, %v1709
  %v1717 = vadd.f32 %v1699, %v1709
  %v1718 = vadd.f32 %v1700, %v1709
  %v1719 = vadd.f32 %v1701, %v1709
  %v1720 = vadd.f32 %v1702, %v1714
  %v1721 = vadd.f32 %v1703, %v1714
  %v1722 = vadd.f32 %v1704, %v1714
  %v1723 = vadd.f32 %v1705, %v1714
  %v1724 = vmax.f32 %v1716, 0.0
  %v1725 = vmax.f32 %v1717, 0.0
  %v1726 = vmax.f32 %v1718, 0.0
  %v1727 = vmax.f32 %v1719, 0.0
  %v1728 = vmax.f32 %v1720, 0.0
  %v1729 = vmax.f32 %v1721, 0.0
  %v1730 = vmax.f32 %v1722, 0.0
  %v1731 = vmax.f32 %v1723, 0.0
  %v1732 = vld [vmem:[%s5] sm:$0xff]
  %v1733 = vld [vmem:[%s5 + $0x8] sm:$0xff]
  %v1734 = vld [vmem:[%s5 + $0x10] sm:$0xff]
  %v1735 = vld [vmem:[%s5 + $0x18] sm:$0xff]
  %v1736 = vld [vmem:[%s5 + $0x20] sm:$0xff]
  %v1737 = vld [vmem:[%s5 + $0x28] sm:$0xff]
  %v1738 = vld [vmem:[%s5 + $0x30] sm:$0xff]
  %v1739 = vld [vmem:[%s5 + $0x38] sm:$0xff]
  %v1740 = vld [vmem:[%s5 + $0x40] sm:$0xff]
  %1741 = vrot.lane.b32.xlu0 %v1724, 17
  %v1742 = vpop.permute.xlu0 %1741
  %1743 = vrot.lane.b32.xlu0 %v1728, 17
  %v1744 = vpop.permute.xlu0 %1743
  %1745 = vrot.lane.b32.xlu0 %v1725, 17
  %v1746 = vpop.permute.xlu0 %1745
  %1747 = vrot.lane.b32.xlu0 %v1729, 17
  %v1748 = vpop.permute.xlu0 %1747
  %1749 = vrot.lane.b32.xlu0 %v1726, 17
  %v1750 = vpop.permute.xlu0 %1749
  %1751 = vrot.lane.b32.xlu0 %v1730, 17
  %v1752 = vpop.permute.xlu0 %1751
  %1753 = vrot.lane.b32.xlu0 %v1727, 17
  %v1754 = vpop.permute.xlu0 %1753
  %1755 = vrot.lane.b32.xlu0 %v1731, 17
  %v1756 = vpop.permute.xlu0 %1755
  %v1757 = vsel %vm82, %v1750, %v1754
  %v1758 = vsel %vm82, %v1752, %v1756
  %v1759 = vsel %vm82, %v1746, %v1750
  %v1760 = vsel %vm82, %v1748, %v1752
  %v1761 = vsel %vm82, %v1742, %v1746
  %v1762 = vsel %vm82, %v1744, %v1748
  %v1763 = vsel %vm82, %v1754, %v1742
  %v1764 = vsel %vm82, %v1756, %v1744
  %v1765 = vmul.f32 %v1763, %v90
  %v1766 = vmul.f32 %v1761, %v94
  %v1767 = vmul.f32 %v1759, %v98
  %v1768 = vmul.f32 %v1757, %v102
  %v1769 = vmul.f32 %v1764, %v90
  %v1770 = vmul.f32 %v1762, %v94
  %v1771 = vmul.f32 %v1760, %v98
  %v1772 = vmul.f32 %v1758, %v102
  %vm1773 = vcmask 130048
  %v1775 = vsel %vm1773, %v1732, 0
  %1777 = vmatprep.subr.mxu0 %v1766
  %1778 = vmatpush1.msra.mxu0 %v1765
  %1779 = vmatprep.subr.mxu0 %v1770
  %1780 = vmatpush1.msra.mxu0 %v1769
  %1781 = vmatprep.subr.mxu0 0.0
  %1782 = vmatpush1.msra.mxu0 0.0
  %1783 = vmatprep.subr.mxu0 0.0
  %1784 = vmatpush1.msra.mxu0 0.0
  %1785 = vmatprep.subr.mxu0 0.0
  %1786 = vmatpush1.msra.mxu0 0.0
  %1787 = vmatprep.subr.mxu0 0.0
  %1788 = vmatpush1.msra.mxu0 0.0
  %1789 = vmatprep.subr.mxu0 0.0
  %1790 = vmatpush1.msra.mxu0 0.0
  %1791 = vmatprep.subr.mxu0 0.0
  %1792 = vmatpush1.msra.mxu0 0.0
  %1793 = vmatprep.subr.mxu0 0.0
  %1794 = vmatpush1.msra.mxu0 0.0
  %1795 = vmatprep.subr.mxu0 0.0
  %1796 = vmatpush1.msra.mxu0 0.0
  %1797 = vmatprep.subr.mxu0 0.0
  %1798 = vmatpush1.msra.mxu0 0.0
  %1799 = vmatprep.subr.mxu0 0.0
  %1800 = vmatpush1.msra.mxu0 0.0
  %1801 = vmatprep.subr.mxu0 0.0
  %1802 = vmatpush1.msra.mxu0 0.0
  %1803 = vmatprep.subr.mxu0 0.0
  %1804 = vmatpush1.msra.mxu0 0.0
  %1805 = vmatprep.subr.mxu0 0.0
  %1806 = vmatpush1.msra.mxu0 0.0
  %1807 = vmatprep.subr.mxu0 0.0
  %1808 = vmatpush1.msra.mxu0 0.0
  %1809 = vmatprep.subr.mxu0 0.0
  %1810 = vmatpush1.msra.mxu0 0.0
  %1811 = vmatprep.subr.mxu0 0.0
  %1812 = vmatpush1.msra.mxu0 0.0
  %1813 = vmatprep.subr.mxu0 0.0
  %1814 = vmatpush1.msra.mxu0 0.0
  %1815 = vmatprep.subr.mxu0 0.0
  %1816 = vmatpush1.msra.mxu0 0.0
  %1817 = vmatprep.subr.mxu0 0.0
  %1818 = vmatpush1.msra.mxu0 0.0
  %1819 = vmatprep.subr.mxu0 0.0
  %1820 = vmatpush1.msra.mxu0 0.0
  %1821 = vmatprep.subr.mxu0 0.0
  %1822 = vmatpush1.msra.mxu0 0.0
  %1823 = vmatprep.subr.mxu0 0.0
  %1824 = vmatpush1.msra.mxu0 0.0
  %1825 = vmatprep.subr.mxu0 0.0
  %1826 = vmatpush1.msra.mxu0 0.0
  %1827 = vmatprep.subr.mxu0 0.0
  %1828 = vmatpush1.msra.mxu0 0.0
  %1829 = vmatprep.subr.mxu0 0.0
  %1830 = vmatpush1.msra.mxu0 0.0
  %1831 = vmatprep.subr.mxu0 0.0
  %1832 = vmatpush1.msra.mxu0 0.0
  %1833 = vmatprep.subr.mxu0 0.0
  %1834 = vmatpush1.msra.mxu0 0.0
  %1835 = vmatprep.subr.mxu0 0.0
  %1836 = vmatpush1.msra.mxu0 0.0
  %1837 = vmatprep.subr.mxu0 0.0
  %1838 = vmatpush1.msra.mxu0 0.0
  %1839 = vmatprep.subr.mxu0 0.0
  %1840 = vmatpush1.msra.mxu0 0.0
  %1841 = vmatprep.mubr.f32.mxu0 0.0
  %1842 = vmatmul.mubr.f32.gmra.mrb[0].mxu0 %v1775
  %v1843 = vpop.f32.mrb[0].mxu0
  %v1844 = vadd.f32 0.0, %v1843
  %v1845 = vpop.f32.mrb[0].mxu0
  %v1846 = vadd.f32 0.0, %v1845
  %1847 = vdwg.mxu0
  %1848 = vmatprep.subr.mxu0 %v1768
  %1849 = vmatpush1.msra.mxu0 %v1767
  %1850 = vmatprep.subr.mxu0 %v1772
  %1851 = vmatpush1.msra.mxu0 %v1771
  %1852 = vmatprep.subr.mxu0 0.0
  %1853 = vmatpush1.msra.mxu0 0.0
  %1854 = vmatprep.subr.mxu0 0.0
  %1855 = vmatpush1.msra.mxu0 0.0
  %1856 = vmatprep.subr.mxu0 0.0
  %1857 = vmatpush1.msra.mxu0 0.0
  %1858 = vmatprep.subr.mxu0 0.0
  %1859 = vmatpush1.msra.mxu0 0.0
  %1860 = vmatprep.subr.mxu0 0.0
  %1861 = vmatpush1.msra.mxu0 0.0
  %1862 = vmatprep.subr.mxu0 0.0
  %1863 = vmatpush1.msra.mxu0 0.0
  %1864 = vmatprep.subr.mxu0 0.0
  %1865 = vmatpush1.msra.mxu0 0.0
  %1866 = vmatprep.subr.mxu0 0.0
  %1867 = vmatpush1.msra.mxu0 0.0
  %1868 = vmatprep.subr.mxu0 0.0
  %1869 = vmatpush1.msra.mxu0 0.0
  %1870 = vmatprep.subr.mxu0 0.0
  %1871 = vmatpush1.msra.mxu0 0.0
  %1872 = vmatprep.subr.mxu0 0.0
  %1873 = vmatpush1.msra.mxu0 0.0
  %1874 = vmatprep.subr.mxu0 0.0
  %1875 = vmatpush1.msra.mxu0 0.0
  %1876 = vmatprep.subr.mxu0 0.0
  %1877 = vmatpush1.msra.mxu0 0.0
  %1878 = vmatprep.subr.mxu0 0.0
  %1879 = vmatpush1.msra.mxu0 0.0
  %1880 = vmatprep.subr.mxu0 0.0
  %1881 = vmatpush1.msra.mxu0 0.0
  %1882 = vmatprep.subr.mxu0 0.0
  %1883 = vmatpush1.msra.mxu0 0.0
  %1884 = vmatprep.subr.mxu0 0.0
  %1885 = vmatpush1.msra.mxu0 0.0
  %1886 = vmatprep.subr.mxu0 0.0
  %1887 = vmatpush1.msra.mxu0 0.0
  %1888 = vmatprep.subr.mxu0 0.0
  %1889 = vmatpush1.msra.mxu0 0.0
  %1890 = vmatprep.subr.mxu0 0.0
  %1891 = vmatpush1.msra.mxu0 0.0
  %1892 = vmatprep.subr.mxu0 0.0
  %1893 = vmatpush1.msra.mxu0 0.0
  %1894 = vmatprep.subr.mxu0 0.0
  %1895 = vmatpush1.msra.mxu0 0.0
  %1896 = vmatprep.subr.mxu0 0.0
  %1897 = vmatpush1.msra.mxu0 0.0
  %1898 = vmatprep.subr.mxu0 0.0
  %1899 = vmatpush1.msra.mxu0 0.0
  %1900 = vmatprep.subr.mxu0 0.0
  %1901 = vmatpush1.msra.mxu0 0.0
  %1902 = vmatprep.subr.mxu0 0.0
  %1903 = vmatpush1.msra.mxu0 0.0
  %1904 = vmatprep.subr.mxu0 0.0
  %1905 = vmatpush1.msra.mxu0 0.0
  %1906 = vmatprep.subr.mxu0 0.0
  %1907 = vmatpush1.msra.mxu0 0.0
  %1908 = vmatprep.subr.mxu0 0.0
  %1909 = vmatpush1.msra.mxu0 0.0
  %1910 = vmatprep.subr.mxu0 0.0
  %1911 = vmatpush1.msra.mxu0 0.0
  %1912 = vmatprep.mubr.f32.mxu0 0.0
  %1913 = vmatmul.mubr.f32.gmra.mrb[0].mxu0 %v1775
  %v1914 = vpop.f32.mrb[0].mxu0
  %v1915 = vadd.f32 0.0, %v1914
  %v1916 = vpop.f32.mrb[0].mxu0
  %v1917 = vadd.f32 0.0, %v1916
  %1918 = vdwg.mxu0
  %v1920 = vsel %vm1773, %v1736, 0
  %1922 = vmatprep.subr.mxu0 %v1725
  %1923 = vmatpush1.msra.mxu0 %v1724
  %1924 = vmatprep.subr.mxu0 %v1729
  %1925 = vmatpush1.msra.mxu0 %v1728
  %1926 = vmatprep.subr.mxu0 0.0
  %1927 = vmatpush1.msra.mxu0 0.0
  %1928 = vmatprep.subr.mxu0 0.0
  %1929 = vmatpush1.msra.mxu0 0.0
  %1930 = vmatprep.subr.mxu0 0.0
  %1931 = vmatpush1.msra.mxu0 0.0
  %1932 = vmatprep.subr.mxu0 0.0
  %1933 = vmatpush1.msra.mxu0 0.0
  %1934 = vmatprep.subr.mxu0 0.0
  %1935 = vmatpush1.msra.mxu0 0.0
  %1936 = vmatprep.subr.mxu0 0.0
  %1937 = vmatpush1.msra.mxu0 0.0
  %1938 = vmatprep.subr.mxu0 0.0
  %1939 = vmatpush1.msra.mxu0 0.0
  %1940 = vmatprep.subr.mxu0 0.0
  %1941 = vmatpush1.msra.mxu0 0.0
  %1942 = vmatprep.subr.mxu0 0.0
  %1943 = vmatpush1.msra.mxu0 0.0
  %1944 = vmatprep.subr.mxu0 0.0
  %1945 = vmatpush1.msra.mxu0 0.0
  %1946 = vmatprep.subr.mxu0 0.0
  %1947 = vmatpush1.msra.mxu0 0.0
  %1948 = vmatprep.subr.mxu0 0.0
  %1949 = vmatpush1.msra.mxu0 0.0
  %1950 = vmatprep.subr.mxu0 0.0
  %1951 = vmatpush1.msra.mxu0 0.0
  %1952 = vmatprep.subr.mxu0 0.0
  %1953 = vmatpush1.msra.mxu0 0.0
  %1954 = vmatprep.subr.mxu0 0.0
  %1955 = vmatpush1.msra.mxu0 0.0
  %1956 = vmatprep.subr.mxu0 0.0
  %1957 = vmatpush1.msra.mxu0 0.0
  %1958 = vmatprep.subr.mxu0 0.0
  %1959 = vmatpush1.msra.mxu0 0.0
  %1960 = vmatprep.subr.mxu0 0.0
  %1961 = vmatpush1.msra.mxu0 0.0
  %1962 = vmatprep.subr.mxu0 0.0
  %1963 = vmatpush1.msra.mxu0 0.0
  %1964 = vmatprep.subr.mxu0 0.0
  %1965 = vmatpush1.msra.mxu0 0.0
  %1966 = vmatprep.subr.mxu0 0.0
  %1967 = vmatpush1.msra.mxu0 0.0
  %1968 = vmatprep.subr.mxu0 0.0
  %1969 = vmatpush1.msra.mxu0 0.0
  %1970 = vmatprep.subr.mxu0 0.0
  %1971 = vmatpush1.msra.mxu0 0.0
  %1972 = vmatprep.subr.mxu0 0.0
  %1973 = vmatpush1.msra.mxu0 0.0
  %1974 = vmatprep.subr.mxu0 0.0
  %1975 = vmatpush1.msra.mxu0 0.0
  %1976 = vmatprep.subr.mxu0 0.0
  %1977 = vmatpush1.msra.mxu0 0.0
  %1978 = vmatprep.subr.mxu0 0.0
  %1979 = vmatpush1.msra.mxu0 0.0
  %1980 = vmatprep.subr.mxu0 0.0
  %1981 = vmatpush1.msra.mxu0 0.0
  %1982 = vmatprep.subr.mxu0 0.0
  %1983 = vmatpush1.msra.mxu0 0.0
  %1984 = vmatprep.subr.mxu0 0.0
  %1985 = vmatpush1.msra.mxu0 0.0
  %1986 = vmatprep.mubr.f32.mxu0 0.0
  %1987 = vmatmul.mubr.f32.gmra.mrb[0].mxu0 %v1920
  %v1988 = vpop.f32.mrb[0].mxu0
  %v1989 = vadd.f32 %v1844, %v1988
  %v1990 = vpop.f32.mrb[0].mxu0
  %v1991 = vadd.f32 %v1846, %v1990
  %1992 = vdwg.mxu0
  %1993 = vmatprep.subr.mxu0 %v1727
  %1994 = vmatpush1.msra.mxu0 %v1726
  %1995 = vmatprep.subr.mxu0 %v1731
  %1996 = vmatpush1.msra.mxu0 %v1730
  %1997 = vmatprep.subr.mxu0 0.0
  %1998 = vmatpush1.msra.mxu0 0.0
  %1999 = vmatprep.subr.mxu0 0.0
  %2000 = vmatpush1.msra.mxu0 0.0
  %2001 = vmatprep.subr.mxu0 0.0
  %2002 = vmatpush1.msra.mxu0 0.0
  %2003 = vmatprep.subr.mxu0 0.0
  %2004 = vmatpush1.msra.mxu0 0.0
  %2005 = vmatprep.subr.mxu0 0.0
  %2006 = vmatpush1.msra.mxu0 0.0
  %2007 = vmatprep.subr.mxu0 0.0
  %2008 = vmatpush1.msra.mxu0 0.0
  %2009 = vmatprep.subr.mxu0 0.0
  %2010 = vmatpush1.msra.mxu0 0.0
  %2011 = vmatprep.subr.mxu0 0.0
  %2012 = vmatpush1.msra.mxu0 0.0
  %2013 = vmatprep.subr.mxu0 0.0
  %2014 = vmatpush1.msra.mxu0 0.0
  %2015 = vmatprep.subr.mxu0 0.0
  %2016 = vmatpush1.msra.mxu0 0.0
  %2017 = vmatprep.subr.mxu0 0.0
  %2018 = vmatpush1.msra.mxu0 0.0
  %2019 = vmatprep.subr.mxu0 0.0
  %2020 = vmatpush1.msra.mxu0 0.0
  %2021 = vmatprep.subr.mxu0 0.0
  %2022 = vmatpush1.msra.mxu0 0.0
  %2023 = vmatprep.subr.mxu0 0.0
  %2024 = vmatpush1.msra.mxu0 0.0
  %2025 = vmatprep.subr.mxu0 0.0
  %2026 = vmatpush1.msra.mxu0 0.0
  %2027 = vmatprep.subr.mxu0 0.0
  %2028 = vmatpush1.msra.mxu0 0.0
  %2029 = vmatprep.subr.mxu0 0.0
  %2030 = vmatpush1.msra.mxu0 0.0
  %2031 = vmatprep.subr.mxu0 0.0
  %2032 = vmatpush1.msra.mxu0 0.0
  %2033 = vmatprep.subr.mxu0 0.0
  %2034 = vmatpush1.msra.mxu0 0.0
  %2035 = vmatprep.subr.mxu0 0.0
  %2036 = vmatpush1.msra.mxu0 0.0
  %2037 = vmatprep.subr.mxu0 0.0
  %2038 = vmatpush1.msra.mxu0 0.0
  %2039 = vmatprep.subr.mxu0 0.0
  %2040 = vmatpush1.msra.mxu0 0.0
  %2041 = vmatprep.subr.mxu0 0.0
  %2042 = vmatpush1.msra.mxu0 0.0
  %2043 = vmatprep.subr.mxu0 0.0
  %2044 = vmatpush1.msra.mxu0 0.0
  %2045 = vmatprep.subr.mxu0 0.0
  %2046 = vmatpush1.msra.mxu0 0.0
  %2047 = vmatprep.subr.mxu0 0.0
  %2048 = vmatpush1.msra.mxu0 0.0
  %2049 = vmatprep.subr.mxu0 0.0
  %2050 = vmatpush1.msra.mxu0 0.0
  %2051 = vmatprep.subr.mxu0 0.0
  %2052 = vmatpush1.msra.mxu0 0.0
  %2053 = vmatprep.subr.mxu0 0.0
  %2054 = vmatpush1.msra.mxu0 0.0
  %2055 = vmatprep.subr.mxu0 0.0
  %2056 = vmatpush1.msra.mxu0 0.0
  %2057 = vmatprep.mubr.f32.mxu0 0.0
  %2058 = vmatmul.mubr.f32.gmra.mrb[0].mxu0 %v1920
  %v2059 = vpop.f32.mrb[0].mxu0
  %v2060 = vadd.f32 %v1915, %v2059
  %v2061 = vpop.f32.mrb[0].mxu0
  %v2062 = vadd.f32 %v1917, %v2061
  %2063 = vdwg.mxu0
  %2064 = vrot.lane.b32.xlu0 %v1724, 16
  %v2065 = vpop.permute.xlu0 %2064
  %2066 = vrot.lane.b32.xlu0 %v1728, 16
  %v2067 = vpop.permute.xlu0 %2066
  %2068 = vrot.lane.b32.xlu0 %v1725, 16
  %v2069 = vpop.permute.xlu0 %2068
  %2070 = vrot.lane.b32.xlu0 %v1729, 16
  %v2071 = vpop.permute.xlu0 %2070
  %2072 = vrot.lane.b32.xlu0 %v1726, 16
  %v2073 = vpop.permute.xlu0 %2072
  %2074 = vrot.lane.b32.xlu0 %v1730, 16
  %v2075 = vpop.permute.xlu0 %2074
  %2076 = vrot.lane.b32.xlu0 %v1727, 16
  %v2077 = vpop.permute.xlu0 %2076
  %2078 = vrot.lane.b32.xlu0 %v1731, 16
  %v2079 = vpop.permute.xlu0 %2078
  %v2080 = vsel %vm406, %v2073, %v2077
  %v2081 = vsel %vm406, %v2075, %v2079
  %v2082 = vsel %vm406, %v2069, %v2073
  %v2083 = vsel %vm406, %v2071, %v2075
  %v2084 = vsel %vm406, %v2065, %v2069
  %v2085 = vsel %vm406, %v2067, %v2071
  %v2086 = vsel %vm406, %v2077, %v2065
  %v2087 = vsel %vm406, %v2079, %v2067
  %v2088 = vmul.f32 %v2086, %v414
  %v2089 = vmul.f32 %v2084, %v418
  %v2090 = vmul.f32 %v2082, %v422
  %v2091 = vmul.f32 %v2080, %v426
  %v2092 = vmul.f32 %v2087, %v414
  %v2093 = vmul.f32 %v2085, %v418
  %v2094 = vmul.f32 %v2083, %v422
  %v2095 = vmul.f32 %v2081, %v426
  %v2097 = vsel %vm1773, %v1733, 0
  %2099 = vmatprep.subr.mxu0 %v2089
  %2100 = vmatpush1.msra.mxu0 %v2088
  %2101 = vmatprep.subr.mxu0 %v2093
  %2102 = vmatpush1.msra.mxu0 %v2092
  %2103 = vmatprep.subr.mxu0 0.0
  %2104 = vmatpush1.msra.mxu0 0.0
  %2105 = vmatprep.subr.mxu0 0.0
  %2106 = vmatpush1.msra.mxu0 0.0
  %2107 = vmatprep.subr.mxu0 0.0
  %2108 = vmatpush1.msra.mxu0 0.0
  %2109 = vmatprep.subr.mxu0 0.0
  %2110 = vmatpush1.msra.mxu0 0.0
  %2111 = vmatprep.subr.mxu0 0.0
  %2112 = vmatpush1.msra.mxu0 0.0
  %2113 = vmatprep.subr.mxu0 0.0
  %2114 = vmatpush1.msra.mxu0 0.0
  %2115 = vmatprep.subr.mxu0 0.0
  %2116 = vmatpush1.msra.mxu0 0.0
  %2117 = vmatprep.subr.mxu0 0.0
  %2118 = vmatpush1.msra.mxu0 0.0
  %2119 = vmatprep.subr.mxu0 0.0
  %2120 = vmatpush1.msra.mxu0 0.0
  %2121 = vmatprep.subr.mxu0 0.0
  %2122 = vmatpush1.msra.mxu0 0.0
  %2123 = vmatprep.subr.mxu0 0.0
  %2124 = vmatpush1.msra.mxu0 0.0
  %2125 = vmatprep.subr.mxu0 0.0
  %2126 = vmatpush1.msra.mxu0 0.0
  %2127 = vmatprep.subr.mxu0 0.0
  %2128 = vmatpush1.msra.mxu0 0.0
  %2129 = vmatprep.subr.mxu0 0.0
  %2130 = vmatpush1.msra.mxu0 0.0
  %2131 = vmatprep.subr.mxu0 0.0
  %2132 = vmatpush1.msra.mxu0 0.0
  %2133 = vmatprep.subr.mxu0 0.0
  %2134 = vmatpush1.msra.mxu0 0.0
  %2135 = vmatprep.subr.mxu0 0.0
  %2136 = vmatpush1.msra.mxu0 0.0
  %2137 = vmatprep.subr.mxu0 0.0
  %2138 = vmatpush1.msra.mxu0 0.0
  %2139 = vmatprep.subr.mxu0 0.0
  %2140 = vmatpush1.msra.mxu0 0.0
  %2141 = vmatprep.subr.mxu0 0.0
  %2142 = vmatpush1.msra.mxu0 0.0
  %2143 = vmatprep.subr.mxu0 0.0
  %2144 = vmatpush1.msra.mxu0 0.0
  %2145 = vmatprep.subr.mxu0 0.0
  %2146 = vmatpush1.msra.mxu0 0.0
  %2147 = vmatprep.subr.mxu0 0.0
  %2148 = vmatpush1.msra.mxu0 0.0
  %2149 = vmatprep.subr.mxu0 0.0
  %2150 = vmatpush1.msra.mxu0 0.0
  %2151 = vmatprep.subr.mxu0 0.0
  %2152 = vmatpush1.msra.mxu0 0.0
  %2153 = vmatprep.subr.mxu0 0.0
  %2154 = vmatpush1.msra.mxu0 0.0
  %2155 = vmatprep.subr.mxu0 0.0
  %2156 = vmatpush1.msra.mxu0 0.0
  %2157 = vmatprep.subr.mxu0 0.0
  %2158 = vmatpush1.msra.mxu0 0.0
  %2159 = vmatprep.subr.mxu0 0.0
  %2160 = vmatpush1.msra.mxu0 0.0
  %2161 = vmatprep.subr.mxu0 0.0
  %2162 = vmatpush1.msra.mxu0 0.0
  %2163 = vmatprep.mubr.f32.mxu0 0.0
  %2164 = vmatmul.mubr.f32.gmra.mrb[0].mxu0 %v2097
  %v2165 = vpop.f32.mrb[0].mxu0
  %v2166 = vadd.f32 0.0, %v2165
  %v2167 = vpop.f32.mrb[0].mxu0
  %v2168 = vadd.f32 0.0, %v2167
  %2169 = vdwg.mxu0
  %2170 = vmatprep.subr.mxu0 %v2091
  %2171 = vmatpush1.msra.mxu0 %v2090
  %2172 = vmatprep.subr.mxu0 %v2095
  %2173 = vmatpush1.msra.mxu0 %v2094
  %2174 = vmatprep.subr.mxu0 0.0
  %2175 = vmatpush1.msra.mxu0 0.0
  %2176 = vmatprep.subr.mxu0 0.0
  %2177 = vmatpush1.msra.mxu0 0.0
  %2178 = vmatprep.subr.mxu0 0.0
  %2179 = vmatpush1.msra.mxu0 0.0
  %2180 = vmatprep.subr.mxu0 0.0
  %2181 = vmatpush1.msra.mxu0 0.0
  %2182 = vmatprep.subr.mxu0 0.0
  %2183 = vmatpush1.msra.mxu0 0.0
  %2184 = vmatprep.subr.mxu0 0.0
  %2185 = vmatpush1.msra.mxu0 0.0
  %2186 = vmatprep.subr.mxu0 0.0
  %2187 = vmatpush1.msra.mxu0 0.0
  %2188 = vmatprep.subr.mxu0 0.0
  %2189 = vmatpush1.msra.mxu0 0.0
  %2190 = vmatprep.subr.mxu0 0.0
  %2191 = vmatpush1.msra.mxu0 0.0
  %2192 = vmatprep.subr.mxu0 0.0
  %2193 = vmatpush1.msra.mxu0 0.0
  %2194 = vmatprep.subr.mxu0 0.0
  %2195 = vmatpush1.msra.mxu0 0.0
  %2196 = vmatprep.subr.mxu0 0.0
  %2197 = vmatpush1.msra.mxu0 0.0
  %2198 = vmatprep.subr.mxu0 0.0
  %2199 = vmatpush1.msra.mxu0 0.0
  %2200 = vmatprep.subr.mxu0 0.0
  %2201 = vmatpush1.msra.mxu0 0.0
  %2202 = vmatprep.subr.mxu0 0.0
  %2203 = vmatpush1.msra.mxu0 0.0
  %2204 = vmatprep.subr.mxu0 0.0
  %2205 = vmatpush1.msra.mxu0 0.0
  %2206 = vmatprep.subr.mxu0 0.0
  %2207 = vmatpush1.msra.mxu0 0.0
  %2208 = vmatprep.subr.mxu0 0.0
  %2209 = vmatpush1.msra.mxu0 0.0
  %2210 = vmatprep.subr.mxu0 0.0
  %2211 = vmatpush1.msra.mxu0 0.0
  %2212 = vmatprep.subr.mxu0 0.0
  %2213 = vmatpush1.msra.mxu0 0.0
  %2214 = vmatprep.subr.mxu0 0.0
  %2215 = vmatpush1.msra.mxu0 0.0
  %2216 = vmatprep.subr.mxu0 0.0
  %2217 = vmatpush1.msra.mxu0 0.0
  %2218 = vmatprep.subr.mxu0 0.0
  %2219 = vmatpush1.msra.mxu0 0.0
  %2220 = vmatprep.subr.mxu0 0.0
  %2221 = vmatpush1.msra.mxu0 0.0
  %2222 = vmatprep.subr.mxu0 0.0
  %2223 = vmatpush1.msra.mxu0 0.0
  %2224 = vmatprep.subr.mxu0 0.0
  %2225 = vmatpush1.msra.mxu0 0.0
  %2226 = vmatprep.subr.mxu0 0.0
  %2227 = vmatpush1.msra.mxu0 0.0
  %2228 = vmatprep.subr.mxu0 0.0
  %2229 = vmatpush1.msra.mxu0 0.0
  %2230 = vmatprep.subr.mxu0 0.0
  %2231 = vmatpush1.msra.mxu0 0.0
  %2232 = vmatprep.subr.mxu0 0.0
  %2233 = vmatpush1.msra.mxu0 0.0
  %2234 = vmatprep.mubr.f32.mxu0 0.0
  %2235 = vmatmul.mubr.f32.gmra.mrb[0].mxu0 %v2097
  %v2236 = vpop.f32.mrb[0].mxu0
  %v2237 = vadd.f32 0.0, %v2236
  %v2238 = vpop.f32.mrb[0].mxu0
  %v2239 = vadd.f32 0.0, %v2238
  %2240 = vdwg.mxu0
  %v2241 = vadd.f32 %v1989, %v2166
  %v2242 = vadd.f32 %v1991, %v2168
  %v2243 = vadd.f32 %v2060, %v2237
  %v2244 = vadd.f32 %v2062, %v2239
  %2245 = vrot.lane.b32.xlu0 %v1724, 15
  %v2246 = vpop.permute.xlu0 %2245
  %2247 = vrot.lane.b32.xlu0 %v1728, 15
  %v2248 = vpop.permute.xlu0 %2247
  %2249 = vrot.lane.b32.xlu0 %v1725, 15
  %v2250 = vpop.permute.xlu0 %2249
  %2251 = vrot.lane.b32.xlu0 %v1729, 15
  %v2252 = vpop.permute.xlu0 %2251
  %2253 = vrot.lane.b32.xlu0 %v1726, 15
  %v2254 = vpop.permute.xlu0 %2253
  %2255 = vrot.lane.b32.xlu0 %v1730, 15
  %v2256 = vpop.permute.xlu0 %2255
  %2257 = vrot.lane.b32.xlu0 %v1727, 15
  %v2258 = vpop.permute.xlu0 %2257
  %2259 = vrot.lane.b32.xlu0 %v1731, 15
  %v2260 = vpop.permute.xlu0 %2259
  %v2261 = vsel %vm588, %v2254, %v2258
  %v2262 = vsel %vm588, %v2256, %v2260
  %v2263 = vsel %vm588, %v2250, %v2254
  %v2264 = vsel %vm588, %v2252, %v2256
  %v2265 = vsel %vm588, %v2246, %v2250
  %v2266 = vsel %vm588, %v2248, %v2252
  %v2267 = vsel %vm588, %v2258, %v2246
  %v2268 = vsel %vm588, %v2260, %v2248
  %v2269 = vmul.f32 %v2267, %v596
  %v2270 = vmul.f32 %v2265, %v600
  %v2271 = vmul.f32 %v2263, %v604
  %v2272 = vmul.f32 %v2261, %v608
  %v2273 = vmul.f32 %v2268, %v596
  %v2274 = vmul.f32 %v2266, %v600
  %v2275 = vmul.f32 %v2264, %v604
  %v2276 = vmul.f32 %v2262, %v608
  %v2278 = vsel %vm1773, %v1734, 0
  %2280 = vmatprep.subr.mxu0 %v2270
  %2281 = vmatpush1.msra.mxu0 %v2269
  %2282 = vmatprep.subr.mxu0 %v2274
  %2283 = vmatpush1.msra.mxu0 %v2273
  %2284 = vmatprep.subr.mxu0 0.0
  %2285 = vmatpush1.msra.mxu0 0.0
  %2286 = vmatprep.subr.mxu0 0.0
  %2287 = vmatpush1.msra.mxu0 0.0
  %2288 = vmatprep.subr.mxu0 0.0
  %2289 = vmatpush1.msra.mxu0 0.0
  %2290 = vmatprep.subr.mxu0 0.0
  %2291 = vmatpush1.msra.mxu0 0.0
  %2292 = vmatprep.subr.mxu0 0.0
  %2293 = vmatpush1.msra.mxu0 0.0
  %2294 = vmatprep.subr.mxu0 0.0
  %2295 = vmatpush1.msra.mxu0 0.0
  %2296 = vmatprep.subr.mxu0 0.0
  %2297 = vmatpush1.msra.mxu0 0.0
  %2298 = vmatprep.subr.mxu0 0.0
  %2299 = vmatpush1.msra.mxu0 0.0
  %2300 = vmatprep.subr.mxu0 0.0
  %2301 = vmatpush1.msra.mxu0 0.0
  %2302 = vmatprep.subr.mxu0 0.0
  %2303 = vmatpush1.msra.mxu0 0.0
  %2304 = vmatprep.subr.mxu0 0.0
  %2305 = vmatpush1.msra.mxu0 0.0
  %2306 = vmatprep.subr.mxu0 0.0
  %2307 = vmatpush1.msra.mxu0 0.0
  %2308 = vmatprep.subr.mxu0 0.0
  %2309 = vmatpush1.msra.mxu0 0.0
  %2310 = vmatprep.subr.mxu0 0.0
  %2311 = vmatpush1.msra.mxu0 0.0
  %2312 = vmatprep.subr.mxu0 0.0
  %2313 = vmatpush1.msra.mxu0 0.0
  %2314 = vmatprep.subr.mxu0 0.0
  %2315 = vmatpush1.msra.mxu0 0.0
  %2316 = vmatprep.subr.mxu0 0.0
  %2317 = vmatpush1.msra.mxu0 0.0
  %2318 = vmatprep.subr.mxu0 0.0
  %2319 = vmatpush1.msra.mxu0 0.0
  %2320 = vmatprep.subr.mxu0 0.0
  %2321 = vmatpush1.msra.mxu0 0.0
  %2322 = vmatprep.subr.mxu0 0.0
  %2323 = vmatpush1.msra.mxu0 0.0
  %2324 = vmatprep.subr.mxu0 0.0
  %2325 = vmatpush1.msra.mxu0 0.0
  %2326 = vmatprep.subr.mxu0 0.0
  %2327 = vmatpush1.msra.mxu0 0.0
  %2328 = vmatprep.subr.mxu0 0.0
  %2329 = vmatpush1.msra.mxu0 0.0
  %2330 = vmatprep.subr.mxu0 0.0
  %2331 = vmatpush1.msra.mxu0 0.0
  %2332 = vmatprep.subr.mxu0 0.0
  %2333 = vmatpush1.msra.mxu0 0.0
  %2334 = vmatprep.subr.mxu0 0.0
  %2335 = vmatpush1.msra.mxu0 0.0
  %2336 = vmatprep.subr.mxu0 0.0
  %2337 = vmatpush1.msra.mxu0 0.0
  %2338 = vmatprep.subr.mxu0 0.0
  %2339 = vmatpush1.msra.mxu0 0.0
  %2340 = vmatprep.subr.mxu0 0.0
  %2341 = vmatpush1.msra.mxu0 0.0
  %2342 = vmatprep.subr.mxu0 0.0
  %2343 = vmatpush1.msra.mxu0 0.0
  %2344 = vmatprep.mubr.f32.mxu0 0.0
  %2345 = vmatmul.mubr.f32.gmra.mrb[0].mxu0 %v2278
  %v2346 = vpop.f32.mrb[0].mxu0
  %v2347 = vadd.f32 0.0, %v2346
  %v2348 = vpop.f32.mrb[0].mxu0
  %v2349 = vadd.f32 0.0, %v2348
  %2350 = vdwg.mxu0
  %2351 = vmatprep.subr.mxu0 %v2272
  %2352 = vmatpush1.msra.mxu0 %v2271
  %2353 = vmatprep.subr.mxu0 %v2276
  %2354 = vmatpush1.msra.mxu0 %v2275
  %2355 = vmatprep.subr.mxu0 0.0
  %2356 = vmatpush1.msra.mxu0 0.0
  %2357 = vmatprep.subr.mxu0 0.0
  %2358 = vmatpush1.msra.mxu0 0.0
  %2359 = vmatprep.subr.mxu0 0.0
  %2360 = vmatpush1.msra.mxu0 0.0
  %2361 = vmatprep.subr.mxu0 0.0
  %2362 = vmatpush1.msra.mxu0 0.0
  %2363 = vmatprep.subr.mxu0 0.0
  %2364 = vmatpush1.msra.mxu0 0.0
  %2365 = vmatprep.subr.mxu0 0.0
  %2366 = vmatpush1.msra.mxu0 0.0
  %2367 = vmatprep.subr.mxu0 0.0
  %2368 = vmatpush1.msra.mxu0 0.0
  %2369 = vmatprep.subr.mxu0 0.0
  %2370 = vmatpush1.msra.mxu0 0.0
  %2371 = vmatprep.subr.mxu0 0.0
  %2372 = vmatpush1.msra.mxu0 0.0
  %2373 = vmatprep.subr.mxu0 0.0
  %2374 = vmatpush1.msra.mxu0 0.0
  %2375 = vmatprep.subr.mxu0 0.0
  %2376 = vmatpush1.msra.mxu0 0.0
  %2377 = vmatprep.subr.mxu0 0.0
  %2378 = vmatpush1.msra.mxu0 0.0
  %2379 = vmatprep.subr.mxu0 0.0
  %2380 = vmatpush1.msra.mxu0 0.0
  %2381 = vmatprep.subr.mxu0 0.0
  %2382 = vmatpush1.msra.mxu0 0.0
  %2383 = vmatprep.subr.mxu0 0.0
  %2384 = vmatpush1.msra.mxu0 0.0
  %2385 = vmatprep.subr.mxu0 0.0
  %2386 = vmatpush1.msra.mxu0 0.0
  %2387 = vmatprep.subr.mxu0 0.0
  %2388 = vmatpush1.msra.mxu0 0.0
  %2389 = vmatprep.subr.mxu0 0.0
  %2390 = vmatpush1.msra.mxu0 0.0
  %2391 = vmatprep.subr.mxu0 0.0
  %2392 = vmatpush1.msra.mxu0 0.0
  %2393 = vmatprep.subr.mxu0 0.0
  %2394 = vmatpush1.msra.mxu0 0.0
  %2395 = vmatprep.subr.mxu0 0.0
  %2396 = vmatpush1.msra.mxu0 0.0
  %2397 = vmatprep.subr.mxu0 0.0
  %2398 = vmatpush1.msra.mxu0 0.0
  %2399 = vmatprep.subr.mxu0 0.0
  %2400 = vmatpush1.msra.mxu0 0.0
  %2401 = vmatprep.subr.mxu0 0.0
  %2402 = vmatpush1.msra.mxu0 0.0
  %2403 = vmatprep.subr.mxu0 0.0
  %2404 = vmatpush1.msra.mxu0 0.0
  %2405 = vmatprep.subr.mxu0 0.0
  %2406 = vmatpush1.msra.mxu0 0.0
  %2407 = vmatprep.subr.mxu0 0.0
  %2408 = vmatpush1.msra.mxu0 0.0
  %2409 = vmatprep.subr.mxu0 0.0
  %2410 = vmatpush1.msra.mxu0 0.0
  %2411 = vmatprep.subr.mxu0 0.0
  %2412 = vmatpush1.msra.mxu0 0.0
  %2413 = vmatprep.subr.mxu0 0.0
  %2414 = vmatpush1.msra.mxu0 0.0
  %2415 = vmatprep.mubr.f32.mxu0 0.0
  %2416 = vmatmul.mubr.f32.gmra.mrb[0].mxu0 %v2278
  %v2417 = vpop.f32.mrb[0].mxu0
  %v2418 = vadd.f32 0.0, %v2417
  %v2419 = vpop.f32.mrb[0].mxu0
  %v2420 = vadd.f32 0.0, %v2419
  %2421 = vdwg.mxu0
  %v2422 = vadd.f32 %v2241, %v2347
  %v2423 = vadd.f32 %v2242, %v2349
  %v2424 = vadd.f32 %v2243, %v2418
  %v2425 = vadd.f32 %v2244, %v2420
  %2426 = vrot.lane.b32.xlu0 %v1724, 1
  %v2427 = vpop.permute.xlu0 %2426
  %2428 = vrot.lane.b32.xlu0 %v1728, 1
  %v2429 = vpop.permute.xlu0 %2428
  %2430 = vrot.lane.b32.xlu0 %v1725, 1
  %v2431 = vpop.permute.xlu0 %2430
  %2432 = vrot.lane.b32.xlu0 %v1729, 1
  %v2433 = vpop.permute.xlu0 %2432
  %2434 = vrot.lane.b32.xlu0 %v1726, 1
  %v2435 = vpop.permute.xlu0 %2434
  %2436 = vrot.lane.b32.xlu0 %v1730, 1
  %v2437 = vpop.permute.xlu0 %2436
  %2438 = vrot.lane.b32.xlu0 %v1727, 1
  %v2439 = vpop.permute.xlu0 %2438
  %2440 = vrot.lane.b32.xlu0 %v1731, 1
  %v2441 = vpop.permute.xlu0 %2440
  %v2442 = vsel %vm770, %v2435, %v2439
  %v2443 = vsel %vm770, %v2437, %v2441
  %v2444 = vsel %vm770, %v2431, %v2435
  %v2445 = vsel %vm770, %v2433, %v2437
  %v2446 = vsel %vm770, %v2427, %v2431
  %v2447 = vsel %vm770, %v2429, %v2433
  %v2448 = vsel %vm770, %v2439, %v2427
  %v2449 = vsel %vm770, %v2441, %v2429
  %v2450 = vmul.f32 %v2448, %v778
  %v2451 = vmul.f32 %v2446, %v782
  %v2452 = vmul.f32 %v2444, %v786
  %v2453 = vmul.f32 %v2442, %v790
  %v2454 = vmul.f32 %v2449, %v778
  %v2455 = vmul.f32 %v2447, %v782
  %v2456 = vmul.f32 %v2445, %v786
  %v2457 = vmul.f32 %v2443, %v790
  %v2459 = vsel %vm1773, %v1735, 0
  %2461 = vmatprep.subr.mxu0 %v2451
  %2462 = vmatpush1.msra.mxu0 %v2450
  %2463 = vmatprep.subr.mxu0 %v2455
  %2464 = vmatpush1.msra.mxu0 %v2454
  %2465 = vmatprep.subr.mxu0 0.0
  %2466 = vmatpush1.msra.mxu0 0.0
  %2467 = vmatprep.subr.mxu0 0.0
  %2468 = vmatpush1.msra.mxu0 0.0
  %2469 = vmatprep.subr.mxu0 0.0
  %2470 = vmatpush1.msra.mxu0 0.0
  %2471 = vmatprep.subr.mxu0 0.0
  %2472 = vmatpush1.msra.mxu0 0.0
  %2473 = vmatprep.subr.mxu0 0.0
  %2474 = vmatpush1.msra.mxu0 0.0
  %2475 = vmatprep.subr.mxu0 0.0
  %2476 = vmatpush1.msra.mxu0 0.0
  %2477 = vmatprep.subr.mxu0 0.0
  %2478 = vmatpush1.msra.mxu0 0.0
  %2479 = vmatprep.subr.mxu0 0.0
  %2480 = vmatpush1.msra.mxu0 0.0
  %2481 = vmatprep.subr.mxu0 0.0
  %2482 = vmatpush1.msra.mxu0 0.0
  %2483 = vmatprep.subr.mxu0 0.0
  %2484 = vmatpush1.msra.mxu0 0.0
  %2485 = vmatprep.subr.mxu0 0.0
  %2486 = vmatpush1.msra.mxu0 0.0
  %2487 = vmatprep.subr.mxu0 0.0
  %2488 = vmatpush1.msra.mxu0 0.0
  %2489 = vmatprep.subr.mxu0 0.0
  %2490 = vmatpush1.msra.mxu0 0.0
  %2491 = vmatprep.subr.mxu0 0.0
  %2492 = vmatpush1.msra.mxu0 0.0
  %2493 = vmatprep.subr.mxu0 0.0
  %2494 = vmatpush1.msra.mxu0 0.0
  %2495 = vmatprep.subr.mxu0 0.0
  %2496 = vmatpush1.msra.mxu0 0.0
  %2497 = vmatprep.subr.mxu0 0.0
  %2498 = vmatpush1.msra.mxu0 0.0
  %2499 = vmatprep.subr.mxu0 0.0
  %2500 = vmatpush1.msra.mxu0 0.0
  %2501 = vmatprep.subr.mxu0 0.0
  %2502 = vmatpush1.msra.mxu0 0.0
  %2503 = vmatprep.subr.mxu0 0.0
  %2504 = vmatpush1.msra.mxu0 0.0
  %2505 = vmatprep.subr.mxu0 0.0
  %2506 = vmatpush1.msra.mxu0 0.0
  %2507 = vmatprep.subr.mxu0 0.0
  %2508 = vmatpush1.msra.mxu0 0.0
  %2509 = vmatprep.subr.mxu0 0.0
  %2510 = vmatpush1.msra.mxu0 0.0
  %2511 = vmatprep.subr.mxu0 0.0
  %2512 = vmatpush1.msra.mxu0 0.0
  %2513 = vmatprep.subr.mxu0 0.0
  %2514 = vmatpush1.msra.mxu0 0.0
  %2515 = vmatprep.subr.mxu0 0.0
  %2516 = vmatpush1.msra.mxu0 0.0
  %2517 = vmatprep.subr.mxu0 0.0
  %2518 = vmatpush1.msra.mxu0 0.0
  %2519 = vmatprep.subr.mxu0 0.0
  %2520 = vmatpush1.msra.mxu0 0.0
  %2521 = vmatprep.subr.mxu0 0.0
  %2522 = vmatpush1.msra.mxu0 0.0
  %2523 = vmatprep.subr.mxu0 0.0
  %2524 = vmatpush1.msra.mxu0 0.0
  %2525 = vmatprep.mubr.f32.mxu0 0.0
  %2526 = vmatmul.mubr.f32.gmra.mrb[0].mxu0 %v2459
  %v2527 = vpop.f32.mrb[0].mxu0
  %v2528 = vadd.f32 0.0, %v2527
  %v2529 = vpop.f32.mrb[0].mxu0
  %v2530 = vadd.f32 0.0, %v2529
  %2531 = vdwg.mxu0
  %2532 = vmatprep.subr.mxu0 %v2453
  %2533 = vmatpush1.msra.mxu0 %v2452
  %2534 = vmatprep.subr.mxu0 %v2457
  %2535 = vmatpush1.msra.mxu0 %v2456
  %2536 = vmatprep.subr.mxu0 0.0
  %2537 = vmatpush1.msra.mxu0 0.0
  %2538 = vmatprep.subr.mxu0 0.0
  %2539 = vmatpush1.msra.mxu0 0.0
  %2540 = vmatprep.subr.mxu0 0.0
  %2541 = vmatpush1.msra.mxu0 0.0
  %2542 = vmatprep.subr.mxu0 0.0
  %2543 = vmatpush1.msra.mxu0 0.0
  %2544 = vmatprep.subr.mxu0 0.0
  %2545 = vmatpush1.msra.mxu0 0.0
  %2546 = vmatprep.subr.mxu0 0.0
  %2547 = vmatpush1.msra.mxu0 0.0
  %2548 = vmatprep.subr.mxu0 0.0
  %2549 = vmatpush1.msra.mxu0 0.0
  %2550 = vmatprep.subr.mxu0 0.0
  %2551 = vmatpush1.msra.mxu0 0.0
  %2552 = vmatprep.subr.mxu0 0.0
  %2553 = vmatpush1.msra.mxu0 0.0
  %2554 = vmatprep.subr.mxu0 0.0
  %2555 = vmatpush1.msra.mxu0 0.0
  %2556 = vmatprep.subr.mxu0 0.0
  %2557 = vmatpush1.msra.mxu0 0.0
  %2558 = vmatprep.subr.mxu0 0.0
  %2559 = vmatpush1.msra.mxu0 0.0
  %2560 = vmatprep.subr.mxu0 0.0
  %2561 = vmatpush1.msra.mxu0 0.0
  %2562 = vmatprep.subr.mxu0 0.0
  %2563 = vmatpush1.msra.mxu0 0.0
  %2564 = vmatprep.subr.mxu0 0.0
  %2565 = vmatpush1.msra.mxu0 0.0
  %2566 = vmatprep.subr.mxu0 0.0
  %2567 = vmatpush1.msra.mxu0 0.0
  %2568 = vmatprep.subr.mxu0 0.0
  %2569 = vmatpush1.msra.mxu0 0.0
  %2570 = vmatprep.subr.mxu0 0.0
  %2571 = vmatpush1.msra.mxu0 0.0
  %2572 = vmatprep.subr.mxu0 0.0
  %2573 = vmatpush1.msra.mxu0 0.0
  %2574 = vmatprep.subr.mxu0 0.0
  %2575 = vmatpush1.msra.mxu0 0.0
  %2576 = vmatprep.subr.mxu0 0.0
  %2577 = vmatpush1.msra.mxu0 0.0
  %2578 = vmatprep.subr.mxu0 0.0
  %2579 = vmatpush1.msra.mxu0 0.0
  %2580 = vmatprep.subr.mxu0 0.0
  %2581 = vmatpush1.msra.mxu0 0.0
  %2582 = vmatprep.subr.mxu0 0.0
  %2583 = vmatpush1.msra.mxu0 0.0
  %2584 = vmatprep.subr.mxu0 0.0
  %2585 = vmatpush1.msra.mxu0 0.0
  %2586 = vmatprep.subr.mxu0 0.0
  %2587 = vmatpush1.msra.mxu0 0.0
  %2588 = vmatprep.subr.mxu0 0.0
  %2589 = vmatpush1.msra.mxu0 0.0
  %2590 = vmatprep.subr.mxu0 0.0
  %2591 = vmatpush1.msra.mxu0 0.0
  %2592 = vmatprep.subr.mxu0 0.0
  %2593 = vmatpush1.msra.mxu0 0.0
  %2594 = vmatprep.subr.mxu0 0.0
  %2595 = vmatpush1.msra.mxu0 0.0
  %2596 = vmatprep.mubr.f32.mxu0 0.0
  %2597 = vmatmul.mubr.f32.gmra.mrb[0].mxu0 %v2459
  %v2598 = vpop.f32.mrb[0].mxu0
  %v2599 = vadd.f32 0.0, %v2598
  %v2600 = vpop.f32.mrb[0].mxu0
  %v2601 = vadd.f32 0.0, %v2600
  %2602 = vdwg.mxu0
  %v2603 = vadd.f32 %v2422, %v2528
  %v2604 = vadd.f32 %v2423, %v2530
  %v2605 = vadd.f32 %v2424, %v2599
  %v2606 = vadd.f32 %v2425, %v2601
  %2607 = vrot.lane.b32.xlu0 %v1724, 127
  %v2608 = vpop.permute.xlu0 %2607
  %2609 = vrot.lane.b32.xlu0 %v1728, 127
  %v2610 = vpop.permute.xlu0 %2609
  %2611 = vrot.lane.b32.xlu0 %v1725, 127
  %v2612 = vpop.permute.xlu0 %2611
  %2613 = vrot.lane.b32.xlu0 %v1729, 127
  %v2614 = vpop.permute.xlu0 %2613
  %2615 = vrot.lane.b32.xlu0 %v1726, 127
  %v2616 = vpop.permute.xlu0 %2615
  %2617 = vrot.lane.b32.xlu0 %v1730, 127
  %v2618 = vpop.permute.xlu0 %2617
  %2619 = vrot.lane.b32.xlu0 %v1727, 127
  %v2620 = vpop.permute.xlu0 %2619
  %2621 = vrot.lane.b32.xlu0 %v1731, 127
  %v2622 = vpop.permute.xlu0 %2621
  %v2623 = vsel %vm952, %v2616, %v2620
  %v2624 = vsel %vm952, %v2618, %v2622
  %v2625 = vsel %vm952, %v2612, %v2616
  %v2626 = vsel %vm952, %v2614, %v2618
  %v2627 = vsel %vm952, %v2608, %v2612
  %v2628 = vsel %vm952, %v2610, %v2614
  %v2629 = vsel %vm952, %v2620, %v2608
  %v2630 = vsel %vm952, %v2622, %v2610
  %v2631 = vmul.f32 %v2627, %v960
  %v2632 = vmul.f32 %v2625, %v964
  %v2633 = vmul.f32 %v2623, %v968
  %v2634 = vmul.f32 %v2629, %v972
  %v2635 = vmul.f32 %v2628, %v960
  %v2636 = vmul.f32 %v2626, %v964
  %v2637 = vmul.f32 %v2624, %v968
  %v2638 = vmul.f32 %v2630, %v972
  %v2640 = vsel %vm1773, %v1737, 0
  %2642 = vmatprep.subr.mxu0 %v2632
  %2643 = vmatpush1.msra.mxu0 %v2631
  %2644 = vmatprep.subr.mxu0 %v2636
  %2645 = vmatpush1.msra.mxu0 %v2635
  %2646 = vmatprep.subr.mxu0 0.0
  %2647 = vmatpush1.msra.mxu0 0.0
  %2648 = vmatprep.subr.mxu0 0.0
  %2649 = vmatpush1.msra.mxu0 0.0
  %2650 = vmatprep.subr.mxu0 0.0
  %2651 = vmatpush1.msra.mxu0 0.0
  %2652 = vmatprep.subr.mxu0 0.0
  %2653 = vmatpush1.msra.mxu0 0.0
  %2654 = vmatprep.subr.mxu0 0.0
  %2655 = vmatpush1.msra.mxu0 0.0
  %2656 = vmatprep.subr.mxu0 0.0
  %2657 = vmatpush1.msra.mxu0 0.0
  %2658 = vmatprep.subr.mxu0 0.0
  %2659 = vmatpush1.msra.mxu0 0.0
  %2660 = vmatprep.subr.mxu0 0.0
  %2661 = vmatpush1.msra.mxu0 0.0
  %2662 = vmatprep.subr.mxu0 0.0
  %2663 = vmatpush1.msra.mxu0 0.0
  %2664 = vmatprep.subr.mxu0 0.0
  %2665 = vmatpush1.msra.mxu0 0.0
  %2666 = vmatprep.subr.mxu0 0.0
  %2667 = vmatpush1.msra.mxu0 0.0
  %2668 = vmatprep.subr.mxu0 0.0
  %2669 = vmatpush1.msra.mxu0 0.0
  %2670 = vmatprep.subr.mxu0 0.0
  %2671 = vmatpush1.msra.mxu0 0.0
  %2672 = vmatprep.subr.mxu0 0.0
  %2673 = vmatpush1.msra.mxu0 0.0
  %2674 = vmatprep.subr.mxu0 0.0
  %2675 = vmatpush1.msra.mxu0 0.0
  %2676 = vmatprep.subr.mxu0 0.0
  %2677 = vmatpush1.msra.mxu0 0.0
  %2678 = vmatprep.subr.mxu0 0.0
  %2679 = vmatpush1.msra.mxu0 0.0
  %2680 = vmatprep.subr.mxu0 0.0
  %2681 = vmatpush1.msra.mxu0 0.0
  %2682 = vmatprep.subr.mxu0 0.0
  %2683 = vmatpush1.msra.mxu0 0.0
  %2684 = vmatprep.subr.mxu0 0.0
  %2685 = vmatpush1.msra.mxu0 0.0
  %2686 = vmatprep.subr.mxu0 0.0
  %2687 = vmatpush1.msra.mxu0 0.0
  %2688 = vmatprep.subr.mxu0 0.0
  %2689 = vmatpush1.msra.mxu0 0.0
  %2690 = vmatprep.subr.mxu0 0.0
  %2691 = vmatpush1.msra.mxu0 0.0
  %2692 = vmatprep.subr.mxu0 0.0
  %2693 = vmatpush1.msra.mxu0 0.0
  %2694 = vmatprep.subr.mxu0 0.0
  %2695 = vmatpush1.msra.mxu0 0.0
  %2696 = vmatprep.subr.mxu0 0.0
  %2697 = vmatpush1.msra.mxu0 0.0
  %2698 = vmatprep.subr.mxu0 0.0
  %2699 = vmatpush1.msra.mxu0 0.0
  %2700 = vmatprep.subr.mxu0 0.0
  %2701 = vmatpush1.msra.mxu0 0.0
  %2702 = vmatprep.subr.mxu0 0.0
  %2703 = vmatpush1.msra.mxu0 0.0
  %2704 = vmatprep.subr.mxu0 0.0
  %2705 = vmatpush1.msra.mxu0 0.0
  %2706 = vmatprep.mubr.f32.mxu0 0.0
  %2707 = vmatmul.mubr.f32.gmra.mrb[0].mxu0 %v2640
  %v2708 = vpop.f32.mrb[0].mxu0
  %v2709 = vadd.f32 0.0, %v2708
  %v2710 = vpop.f32.mrb[0].mxu0
  %v2711 = vadd.f32 0.0, %v2710
  %2712 = vdwg.mxu0
  %2713 = vmatprep.subr.mxu0 %v2634
  %2714 = vmatpush1.msra.mxu0 %v2633
  %2715 = vmatprep.subr.mxu0 %v2638
  %2716 = vmatpush1.msra.mxu0 %v2637
  %2717 = vmatprep.subr.mxu0 0.0
  %2718 = vmatpush1.msra.mxu0 0.0
  %2719 = vmatprep.subr.mxu0 0.0
  %2720 = vmatpush1.msra.mxu0 0.0
  %2721 = vmatprep.subr.mxu0 0.0
  %2722 = vmatpush1.msra.mxu0 0.0
  %2723 = vmatprep.subr.mxu0 0.0
  %2724 = vmatpush1.msra.mxu0 0.0
  %2725 = vmatprep.subr.mxu0 0.0
  %2726 = vmatpush1.msra.mxu0 0.0
  %2727 = vmatprep.subr.mxu0 0.0
  %2728 = vmatpush1.msra.mxu0 0.0
  %2729 = vmatprep.subr.mxu0 0.0
  %2730 = vmatpush1.msra.mxu0 0.0
  %2731 = vmatprep.subr.mxu0 0.0
  %2732 = vmatpush1.msra.mxu0 0.0
  %2733 = vmatprep.subr.mxu0 0.0
  %2734 = vmatpush1.msra.mxu0 0.0
  %2735 = vmatprep.subr.mxu0 0.0
  %2736 = vmatpush1.msra.mxu0 0.0
  %2737 = vmatprep.subr.mxu0 0.0
  %2738 = vmatpush1.msra.mxu0 0.0
  %2739 = vmatprep.subr.mxu0 0.0
  %2740 = vmatpush1.msra.mxu0 0.0
  %2741 = vmatprep.subr.mxu0 0.0
  %2742 = vmatpush1.msra.mxu0 0.0
  %2743 = vmatprep.subr.mxu0 0.0
  %2744 = vmatpush1.msra.mxu0 0.0
  %2745 = vmatprep.subr.mxu0 0.0
  %2746 = vmatpush1.msra.mxu0 0.0
  %2747 = vmatprep.subr.mxu0 0.0
  %2748 = vmatpush1.msra.mxu0 0.0
  %2749 = vmatprep.subr.mxu0 0.0
  %2750 = vmatpush1.msra.mxu0 0.0
  %2751 = vmatprep.subr.mxu0 0.0
  %2752 = vmatpush1.msra.mxu0 0.0
  %2753 = vmatprep.subr.mxu0 0.0
  %2754 = vmatpush1.msra.mxu0 0.0
  %2755 = vmatprep.subr.mxu0 0.0
  %2756 = vmatpush1.msra.mxu0 0.0
  %2757 = vmatprep.subr.mxu0 0.0
  %2758 = vmatpush1.msra.mxu0 0.0
  %2759 = vmatprep.subr.mxu0 0.0
  %2760 = vmatpush1.msra.mxu0 0.0
  %2761 = vmatprep.subr.mxu0 0.0
  %2762 = vmatpush1.msra.mxu0 0.0
  %2763 = vmatprep.subr.mxu0 0.0
  %2764 = vmatpush1.msra.mxu0 0.0
  %2765 = vmatprep.subr.mxu0 0.0
  %2766 = vmatpush1.msra.mxu0 0.0
  %2767 = vmatprep.subr.mxu0 0.0
  %2768 = vmatpush1.msra.mxu0 0.0
  %2769 = vmatprep.subr.mxu0 0.0
  %2770 = vmatpush1.msra.mxu0 0.0
  %2771 = vmatprep.subr.mxu0 0.0
  %2772 = vmatpush1.msra.mxu0 0.0
  %2773 = vmatprep.subr.mxu0 0.0
  %2774 = vmatpush1.msra.mxu0 0.0
  %2775 = vmatprep.subr.mxu0 0.0
  %2776 = vmatpush1.msra.mxu0 0.0
  %2777 = vmatprep.mubr.f32.mxu0 0.0
  %2778 = vmatmul.mubr.f32.gmra.mrb[0].mxu0 %v2640
  %v2779 = vpop.f32.mrb[0].mxu0
  %v2780 = vadd.f32 0.0, %v2779
  %v2781 = vpop.f32.mrb[0].mxu0
  %v2782 = vadd.f32 0.0, %v2781
  %2783 = vdwg.mxu0
  %v2784 = vadd.f32 %v2603, %v2709
  %v2785 = vadd.f32 %v2604, %v2711
  %v2786 = vadd.f32 %v2605, %v2780
  %v2787 = vadd.f32 %v2606, %v2782
  %2788 = vrot.lane.b32.xlu0 %v1724, 113
  %v2789 = vpop.permute.xlu0 %2788
  %2790 = vrot.lane.b32.xlu0 %v1728, 113
  %v2791 = vpop.permute.xlu0 %2790
  %2792 = vrot.lane.b32.xlu0 %v1725, 113
  %v2793 = vpop.permute.xlu0 %2792
  %2794 = vrot.lane.b32.xlu0 %v1729, 113
  %v2795 = vpop.permute.xlu0 %2794
  %2796 = vrot.lane.b32.xlu0 %v1726, 113
  %v2797 = vpop.permute.xlu0 %2796
  %2798 = vrot.lane.b32.xlu0 %v1730, 113
  %v2799 = vpop.permute.xlu0 %2798
  %2800 = vrot.lane.b32.xlu0 %v1727, 113
  %v2801 = vpop.permute.xlu0 %2800
  %2802 = vrot.lane.b32.xlu0 %v1731, 113
  %v2803 = vpop.permute.xlu0 %2802
  %v2804 = vsel %vm1134, %v2797, %v2801
  %v2805 = vsel %vm1134, %v2799, %v2803
  %v2806 = vsel %vm1134, %v2793, %v2797
  %v2807 = vsel %vm1134, %v2795, %v2799
  %v2808 = vsel %vm1134, %v2789, %v2793
  %v2809 = vsel %vm1134, %v2791, %v2795
  %v2810 = vsel %vm1134, %v2801, %v2789
  %v2811 = vsel %vm1134, %v2803, %v2791
  %v2812 = vmul.f32 %v2808, %v1142
  %v2813 = vmul.f32 %v2806, %v1146
  %v2814 = vmul.f32 %v2804, %v1150
  %v2815 = vmul.f32 %v2810, %v1154
  %v2816 = vmul.f32 %v2809, %v1142
  %v2817 = vmul.f32 %v2807, %v1146
  %v2818 = vmul.f32 %v2805, %v1150
  %v2819 = vmul.f32 %v2811, %v1154
  %v2821 = vsel %vm1773, %v1738, 0
  %2823 = vmatprep.subr.mxu0 %v2813
  %2824 = vmatpush1.msra.mxu0 %v2812
  %2825 = vmatprep.subr.mxu0 %v2817
  %2826 = vmatpush1.msra.mxu0 %v2816
  %2827 = vmatprep.subr.mxu0 0.0
  %2828 = vmatpush1.msra.mxu0 0.0
  %2829 = vmatprep.subr.mxu0 0.0
  %2830 = vmatpush1.msra.mxu0 0.0
  %2831 = vmatprep.subr.mxu0 0.0
  %2832 = vmatpush1.msra.mxu0 0.0
  %2833 = vmatprep.subr.mxu0 0.0
  %2834 = vmatpush1.msra.mxu0 0.0
  %2835 = vmatprep.subr.mxu0 0.0
  %2836 = vmatpush1.msra.mxu0 0.0
  %2837 = vmatprep.subr.mxu0 0.0
  %2838 = vmatpush1.msra.mxu0 0.0
  %2839 = vmatprep.subr.mxu0 0.0
  %2840 = vmatpush1.msra.mxu0 0.0
  %2841 = vmatprep.subr.mxu0 0.0
  %2842 = vmatpush1.msra.mxu0 0.0
  %2843 = vmatprep.subr.mxu0 0.0
  %2844 = vmatpush1.msra.mxu0 0.0
  %2845 = vmatprep.subr.mxu0 0.0
  %2846 = vmatpush1.msra.mxu0 0.0
  %2847 = vmatprep.subr.mxu0 0.0
  %2848 = vmatpush1.msra.mxu0 0.0
  %2849 = vmatprep.subr.mxu0 0.0
  %2850 = vmatpush1.msra.mxu0 0.0
  %2851 = vmatprep.subr.mxu0 0.0
  %2852 = vmatpush1.msra.mxu0 0.0
  %2853 = vmatprep.subr.mxu0 0.0
  %2854 = vmatpush1.msra.mxu0 0.0
  %2855 = vmatprep.subr.mxu0 0.0
  %2856 = vmatpush1.msra.mxu0 0.0
  %2857 = vmatprep.subr.mxu0 0.0
  %2858 = vmatpush1.msra.mxu0 0.0
  %2859 = vmatprep.subr.mxu0 0.0
  %2860 = vmatpush1.msra.mxu0 0.0
  %2861 = vmatprep.subr.mxu0 0.0
  %2862 = vmatpush1.msra.mxu0 0.0
  %2863 = vmatprep.subr.mxu0 0.0
  %2864 = vmatpush1.msra.mxu0 0.0
  %2865 = vmatprep.subr.mxu0 0.0
  %2866 = vmatpush1.msra.mxu0 0.0
  %2867 = vmatprep.subr.mxu0 0.0
  %2868 = vmatpush1.msra.mxu0 0.0
  %2869 = vmatprep.subr.mxu0 0.0
  %2870 = vmatpush1.msra.mxu0 0.0
  %2871 = vmatprep.subr.mxu0 0.0
  %2872 = vmatpush1.msra.mxu0 0.0
  %2873 = vmatprep.subr.mxu0 0.0
  %2874 = vmatpush1.msra.mxu0 0.0
  %2875 = vmatprep.subr.mxu0 0.0
  %2876 = vmatpush1.msra.mxu0 0.0
  %2877 = vmatprep.subr.mxu0 0.0
  %2878 = vmatpush1.msra.mxu0 0.0
  %2879 = vmatprep.subr.mxu0 0.0
  %2880 = vmatpush1.msra.mxu0 0.0
  %2881 = vmatprep.subr.mxu0 0.0
  %2882 = vmatpush1.msra.mxu0 0.0
  %2883 = vmatprep.subr.mxu0 0.0
  %2884 = vmatpush1.msra.mxu0 0.0
  %2885 = vmatprep.subr.mxu0 0.0
  %2886 = vmatpush1.msra.mxu0 0.0
  %2887 = vmatprep.mubr.f32.mxu0 0.0
  %2888 = vmatmul.mubr.f32.gmra.mrb[0].mxu0 %v2821
  %v2889 = vpop.f32.mrb[0].mxu0
  %v2890 = vadd.f32 0.0, %v2889
  %v2891 = vpop.f32.mrb[0].mxu0
  %v2892 = vadd.f32 0.0, %v2891
  %2893 = vdwg.mxu0
  %2894 = vmatprep.subr.mxu0 %v2815
  %2895 = vmatpush1.msra.mxu0 %v2814
  %2896 = vmatprep.subr.mxu0 %v2819
  %2897 = vmatpush1.msra.mxu0 %v2818
  %2898 = vmatprep.subr.mxu0 0.0
  %2899 = vmatpush1.msra.mxu0 0.0
  %2900 = vmatprep.subr.mxu0 0.0
  %2901 = vmatpush1.msra.mxu0 0.0
  %2902 = vmatprep.subr.mxu0 0.0
  %2903 = vmatpush1.msra.mxu0 0.0
  %2904 = vmatprep.subr.mxu0 0.0
  %2905 = vmatpush1.msra.mxu0 0.0
  %2906 = vmatprep.subr.mxu0 0.0
  %2907 = vmatpush1.msra.mxu0 0.0
  %2908 = vmatprep.subr.mxu0 0.0
  %2909 = vmatpush1.msra.mxu0 0.0
  %2910 = vmatprep.subr.mxu0 0.0
  %2911 = vmatpush1.msra.mxu0 0.0
  %2912 = vmatprep.subr.mxu0 0.0
  %2913 = vmatpush1.msra.mxu0 0.0
  %2914 = vmatprep.subr.mxu0 0.0
  %2915 = vmatpush1.msra.mxu0 0.0
  %2916 = vmatprep.subr.mxu0 0.0
  %2917 = vmatpush1.msra.mxu0 0.0
  %2918 = vmatprep.subr.mxu0 0.0
  %2919 = vmatpush1.msra.mxu0 0.0
  %2920 = vmatprep.subr.mxu0 0.0
  %2921 = vmatpush1.msra.mxu0 0.0
  %2922 = vmatprep.subr.mxu0 0.0
  %2923 = vmatpush1.msra.mxu0 0.0
  %2924 = vmatprep.subr.mxu0 0.0
  %2925 = vmatpush1.msra.mxu0 0.0
  %2926 = vmatprep.subr.mxu0 0.0
  %2927 = vmatpush1.msra.mxu0 0.0
  %2928 = vmatprep.subr.mxu0 0.0
  %2929 = vmatpush1.msra.mxu0 0.0
  %2930 = vmatprep.subr.mxu0 0.0
  %2931 = vmatpush1.msra.mxu0 0.0
  %2932 = vmatprep.subr.mxu0 0.0
  %2933 = vmatpush1.msra.mxu0 0.0
  %2934 = vmatprep.subr.mxu0 0.0
  %2935 = vmatpush1.msra.mxu0 0.0
  %2936 = vmatprep.subr.mxu0 0.0
  %2937 = vmatpush1.msra.mxu0 0.0
  %2938 = vmatprep.subr.mxu0 0.0
  %2939 = vmatpush1.msra.mxu0 0.0
  %2940 = vmatprep.subr.mxu0 0.0
  %2941 = vmatpush1.msra.mxu0 0.0
  %2942 = vmatprep.subr.mxu0 0.0
  %2943 = vmatpush1.msra.mxu0 0.0
  %2944 = vmatprep.subr.mxu0 0.0
  %2945 = vmatpush1.msra.mxu0 0.0
  %2946 = vmatprep.subr.mxu0 0.0
  %2947 = vmatpush1.msra.mxu0 0.0
  %2948 = vmatprep.subr.mxu0 0.0
  %2949 = vmatpush1.msra.mxu0 0.0
  %2950 = vmatprep.subr.mxu0 0.0
  %2951 = vmatpush1.msra.mxu0 0.0
  %2952 = vmatprep.subr.mxu0 0.0
  %2953 = vmatpush1.msra.mxu0 0.0
  %2954 = vmatprep.subr.mxu0 0.0
  %2955 = vmatpush1.msra.mxu0 0.0
  %2956 = vmatprep.subr.mxu0 0.0
  %2957 = vmatpush1.msra.mxu0 0.0
  %2958 = vmatprep.mubr.f32.mxu0 0.0
  %2959 = vmatmul.mubr.f32.gmra.mrb[0].mxu0 %v2821
  %v2960 = vpop.f32.mrb[0].mxu0
  %v2961 = vadd.f32 0.0, %v2960
  %v2962 = vpop.f32.mrb[0].mxu0
  %v2963 = vadd.f32 0.0, %v2962
  %2964 = vdwg.mxu0
  %v2965 = vadd.f32 %v2784, %v2890
  %v2966 = vadd.f32 %v2785, %v2892
  %v2967 = vadd.f32 %v2786, %v2961
  %v2968 = vadd.f32 %v2787, %v2963
  %2969 = vrot.lane.b32.xlu0 %v1724, 112
  %v2970 = vpop.permute.xlu0 %2969
  %2971 = vrot.lane.b32.xlu0 %v1728, 112
  %v2972 = vpop.permute.xlu0 %2971
  %2973 = vrot.lane.b32.xlu0 %v1725, 112
  %v2974 = vpop.permute.xlu0 %2973
  %2975 = vrot.lane.b32.xlu0 %v1729, 112
  %v2976 = vpop.permute.xlu0 %2975
  %2977 = vrot.lane.b32.xlu0 %v1726, 112
  %v2978 = vpop.permute.xlu0 %2977
  %2979 = vrot.lane.b32.xlu0 %v1730, 112
  %v2980 = vpop.permute.xlu0 %2979
  %2981 = vrot.lane.b32.xlu0 %v1727, 112
  %v2982 = vpop.permute.xlu0 %2981
  %2983 = vrot.lane.b32.xlu0 %v1731, 112
  %v2984 = vpop.permute.xlu0 %2983
  %v2985 = vsel %vm1316, %v2978, %v2982
  %v2986 = vsel %vm1316, %v2980, %v2984
  %v2987 = vsel %vm1316, %v2974, %v2978
  %v2988 = vsel %vm1316, %v2976, %v2980
  %v2989 = vsel %vm1316, %v2970, %v2974
  %v2990 = vsel %vm1316, %v2972, %v2976
  %v2991 = vsel %vm1316, %v2982, %v2970
  %v2992 = vsel %vm1316, %v2984, %v2972
  %v2993 = vmul.f32 %v2989, %v1324
  %v2994 = vmul.f32 %v2987, %v1328
  %v2995 = vmul.f32 %v2985, %v1332
  %v2996 = vmul.f32 %v2991, %v1336
  %v2997 = vmul.f32 %v2990, %v1324
  %v2998 = vmul.f32 %v2988, %v1328
  %v2999 = vmul.f32 %v2986, %v1332
  %v3000 = vmul.f32 %v2992, %v1336
  %v3002 = vsel %vm1773, %v1739, 0
  %3004 = vmatprep.subr.mxu0 %v2994
  %3005 = vmatpush1.msra.mxu0 %v2993
  %3006 = vmatprep.subr.mxu0 %v2998
  %3007 = vmatpush1.msra.mxu0 %v2997
  %3008 = vmatprep.subr.mxu0 0.0
  %3009 = vmatpush1.msra.mxu0 0.0
  %3010 = vmatprep.subr.mxu0 0.0
  %3011 = vmatpush1.msra.mxu0 0.0
  %3012 = vmatprep.subr.mxu0 0.0
  %3013 = vmatpush1.msra.mxu0 0.0
  %3014 = vmatprep.subr.mxu0 0.0
  %3015 = vmatpush1.msra.mxu0 0.0
  %3016 = vmatprep.subr.mxu0 0.0
  %3017 = vmatpush1.msra.mxu0 0.0
  %3018 = vmatprep.subr.mxu0 0.0
  %3019 = vmatpush1.msra.mxu0 0.0
  %3020 = vmatprep.subr.mxu0 0.0
  %3021 = vmatpush1.msra.mxu0 0.0
  %3022 = vmatprep.subr.mxu0 0.0
  %3023 = vmatpush1.msra.mxu0 0.0
  %3024 = vmatprep.subr.mxu0 0.0
  %3025 = vmatpush1.msra.mxu0 0.0
  %3026 = vmatprep.subr.mxu0 0.0
  %3027 = vmatpush1.msra.mxu0 0.0
  %3028 = vmatprep.subr.mxu0 0.0
  %3029 = vmatpush1.msra.mxu0 0.0
  %3030 = vmatprep.subr.mxu0 0.0
  %3031 = vmatpush1.msra.mxu0 0.0
  %3032 = vmatprep.subr.mxu0 0.0
  %3033 = vmatpush1.msra.mxu0 0.0
  %3034 = vmatprep.subr.mxu0 0.0
  %3035 = vmatpush1.msra.mxu0 0.0
  %3036 = vmatprep.subr.mxu0 0.0
  %3037 = vmatpush1.msra.mxu0 0.0
  %3038 = vmatprep.subr.mxu0 0.0
  %3039 = vmatpush1.msra.mxu0 0.0
  %3040 = vmatprep.subr.mxu0 0.0
  %3041 = vmatpush1.msra.mxu0 0.0
  %3042 = vmatprep.subr.mxu0 0.0
  %3043 = vmatpush1.msra.mxu0 0.0
  %3044 = vmatprep.subr.mxu0 0.0
  %3045 = vmatpush1.msra.mxu0 0.0
  %3046 = vmatprep.subr.mxu0 0.0
  %3047 = vmatpush1.msra.mxu0 0.0
  %3048 = vmatprep.subr.mxu0 0.0
  %3049 = vmatpush1.msra.mxu0 0.0
  %3050 = vmatprep.subr.mxu0 0.0
  %3051 = vmatpush1.msra.mxu0 0.0
  %3052 = vmatprep.subr.mxu0 0.0
  %3053 = vmatpush1.msra.mxu0 0.0
  %3054 = vmatprep.subr.mxu0 0.0
  %3055 = vmatpush1.msra.mxu0 0.0
  %3056 = vmatprep.subr.mxu0 0.0
  %3057 = vmatpush1.msra.mxu0 0.0
  %3058 = vmatprep.subr.mxu0 0.0
  %3059 = vmatpush1.msra.mxu0 0.0
  %3060 = vmatprep.subr.mxu0 0.0
  %3061 = vmatpush1.msra.mxu0 0.0
  %3062 = vmatprep.subr.mxu0 0.0
  %3063 = vmatpush1.msra.mxu0 0.0
  %3064 = vmatprep.subr.mxu0 0.0
  %3065 = vmatpush1.msra.mxu0 0.0
  %3066 = vmatprep.subr.mxu0 0.0
  %3067 = vmatpush1.msra.mxu0 0.0
  %3068 = vmatprep.mubr.f32.mxu0 0.0
  %3069 = vmatmul.mubr.f32.gmra.mrb[0].mxu0 %v3002
  %v3070 = vpop.f32.mrb[0].mxu0
  %v3071 = vadd.f32 0.0, %v3070
  %v3072 = vpop.f32.mrb[0].mxu0
  %v3073 = vadd.f32 0.0, %v3072
  %3074 = vdwg.mxu0
  %3075 = vmatprep.subr.mxu0 %v2996
  %3076 = vmatpush1.msra.mxu0 %v2995
  %3077 = vmatprep.subr.mxu0 %v3000
  %3078 = vmatpush1.msra.mxu0 %v2999
  %3079 = vmatprep.subr.mxu0 0.0
  %3080 = vmatpush1.msra.mxu0 0.0
  %3081 = vmatprep.subr.mxu0 0.0
  %3082 = vmatpush1.msra.mxu0 0.0
  %3083 = vmatprep.subr.mxu0 0.0
  %3084 = vmatpush1.msra.mxu0 0.0
  %3085 = vmatprep.subr.mxu0 0.0
  %3086 = vmatpush1.msra.mxu0 0.0
  %3087 = vmatprep.subr.mxu0 0.0
  %3088 = vmatpush1.msra.mxu0 0.0
  %3089 = vmatprep.subr.mxu0 0.0
  %3090 = vmatpush1.msra.mxu0 0.0
  %3091 = vmatprep.subr.mxu0 0.0
  %3092 = vmatpush1.msra.mxu0 0.0
  %3093 = vmatprep.subr.mxu0 0.0
  %3094 = vmatpush1.msra.mxu0 0.0
  %3095 = vmatprep.subr.mxu0 0.0
  %3096 = vmatpush1.msra.mxu0 0.0
  %3097 = vmatprep.subr.mxu0 0.0
  %3098 = vmatpush1.msra.mxu0 0.0
  %3099 = vmatprep.subr.mxu0 0.0
  %3100 = vmatpush1.msra.mxu0 0.0
  %3101 = vmatprep.subr.mxu0 0.0
  %3102 = vmatpush1.msra.mxu0 0.0
  %3103 = vmatprep.subr.mxu0 0.0
  %3104 = vmatpush1.msra.mxu0 0.0
  %3105 = vmatprep.subr.mxu0 0.0
  %3106 = vmatpush1.msra.mxu0 0.0
  %3107 = vmatprep.subr.mxu0 0.0
  %3108 = vmatpush1.msra.mxu0 0.0
  %3109 = vmatprep.subr.mxu0 0.0
  %3110 = vmatpush1.msra.mxu0 0.0
  %3111 = vmatprep.subr.mxu0 0.0
  %3112 = vmatpush1.msra.mxu0 0.0
  %3113 = vmatprep.subr.mxu0 0.0
  %3114 = vmatpush1.msra.mxu0 0.0
  %3115 = vmatprep.subr.mxu0 0.0
  %3116 = vmatpush1.msra.mxu0 0.0
  %3117 = vmatprep.subr.mxu0 0.0
  %3118 = vmatpush1.msra.mxu0 0.0
  %3119 = vmatprep.subr.mxu0 0.0
  %3120 = vmatpush1.msra.mxu0 0.0
  %3121 = vmatprep.subr.mxu0 0.0
  %3122 = vmatpush1.msra.mxu0 0.0
  %3123 = vmatprep.subr.mxu0 0.0
  %3124 = vmatpush1.msra.mxu0 0.0
  %3125 = vmatprep.subr.mxu0 0.0
  %3126 = vmatpush1.msra.mxu0 0.0
  %3127 = vmatprep.subr.mxu0 0.0
  %3128 = vmatpush1.msra.mxu0 0.0
  %3129 = vmatprep.subr.mxu0 0.0
  %3130 = vmatpush1.msra.mxu0 0.0
  %3131 = vmatprep.subr.mxu0 0.0
  %3132 = vmatpush1.msra.mxu0 0.0
  %3133 = vmatprep.subr.mxu0 0.0
  %3134 = vmatpush1.msra.mxu0 0.0
  %3135 = vmatprep.subr.mxu0 0.0
  %3136 = vmatpush1.msra.mxu0 0.0
  %3137 = vmatprep.subr.mxu0 0.0
  %3138 = vmatpush1.msra.mxu0 0.0
  %3139 = vmatprep.mubr.f32.mxu0 0.0
  %3140 = vmatmul.mubr.f32.gmra.mrb[0].mxu0 %v3002
  %v3141 = vpop.f32.mrb[0].mxu0
  %v3142 = vadd.f32 0.0, %v3141
  %v3143 = vpop.f32.mrb[0].mxu0
  %v3144 = vadd.f32 0.0, %v3143
  %3145 = vdwg.mxu0
  %v3146 = vadd.f32 %v2965, %v3071
  %v3147 = vadd.f32 %v2966, %v3073
  %v3148 = vadd.f32 %v2967, %v3142
  %v3149 = vadd.f32 %v2968, %v3144
  %3150 = vrot.lane.b32.xlu0 %v1724, 111
  %v3151 = vpop.permute.xlu0 %3150
  %3152 = vrot.lane.b32.xlu0 %v1728, 111
  %v3153 = vpop.permute.xlu0 %3152
  %3154 = vrot.lane.b32.xlu0 %v1725, 111
  %v3155 = vpop.permute.xlu0 %3154
  %3156 = vrot.lane.b32.xlu0 %v1729, 111
  %v3157 = vpop.permute.xlu0 %3156
  %3158 = vrot.lane.b32.xlu0 %v1726, 111
  %v3159 = vpop.permute.xlu0 %3158
  %3160 = vrot.lane.b32.xlu0 %v1730, 111
  %v3161 = vpop.permute.xlu0 %3160
  %3162 = vrot.lane.b32.xlu0 %v1727, 111
  %v3163 = vpop.permute.xlu0 %3162
  %3164 = vrot.lane.b32.xlu0 %v1731, 111
  %v3165 = vpop.permute.xlu0 %3164
  %v3166 = vsel %vm1498, %v3159, %v3163
  %v3167 = vsel %vm1498, %v3161, %v3165
  %v3168 = vsel %vm1498, %v3155, %v3159
  %v3169 = vsel %vm1498, %v3157, %v3161
  %v3170 = vsel %vm1498, %v3151, %v3155
  %v3171 = vsel %vm1498, %v3153, %v3157
  %v3172 = vsel %vm1498, %v3163, %v3151
  %v3173 = vsel %vm1498, %v3165, %v3153
  %v3174 = vmul.f32 %v3170, %v1506
  %v3175 = vmul.f32 %v3168, %v1510
  %v3176 = vmul.f32 %v3166, %v1514
  %v3177 = vmul.f32 %v3172, %v1518
  %v3178 = vmul.f32 %v3171, %v1506
  %v3179 = vmul.f32 %v3169, %v1510
  %v3180 = vmul.f32 %v3167, %v1514
  %v3181 = vmul.f32 %v3173, %v1518
  %v3183 = vsel %vm1773, %v1740, 0
  %3185 = vmatprep.subr.mxu0 %v3175
  %3186 = vmatpush1.msra.mxu0 %v3174
  %3187 = vmatprep.subr.mxu0 %v3179
  %3188 = vmatpush1.msra.mxu0 %v3178
  %3189 = vmatprep.subr.mxu0 0.0
  %3190 = vmatpush1.msra.mxu0 0.0
  %3191 = vmatprep.subr.mxu0 0.0
  %3192 = vmatpush1.msra.mxu0 0.0
  %3193 = vmatprep.subr.mxu0 0.0
  %3194 = vmatpush1.msra.mxu0 0.0
  %3195 = vmatprep.subr.mxu0 0.0
  %3196 = vmatpush1.msra.mxu0 0.0
  %3197 = vmatprep.subr.mxu0 0.0
  %3198 = vmatpush1.msra.mxu0 0.0
  %3199 = vmatprep.subr.mxu0 0.0
  %3200 = vmatpush1.msra.mxu0 0.0
  %3201 = vmatprep.subr.mxu0 0.0
  %3202 = vmatpush1.msra.mxu0 0.0
  %3203 = vmatprep.subr.mxu0 0.0
  %3204 = vmatpush1.msra.mxu0 0.0
  %3205 = vmatprep.subr.mxu0 0.0
  %3206 = vmatpush1.msra.mxu0 0.0
  %3207 = vmatprep.subr.mxu0 0.0
  %3208 = vmatpush1.msra.mxu0 0.0
  %3209 = vmatprep.subr.mxu0 0.0
  %3210 = vmatpush1.msra.mxu0 0.0
  %3211 = vmatprep.subr.mxu0 0.0
  %3212 = vmatpush1.msra.mxu0 0.0
  %3213 = vmatprep.subr.mxu0 0.0
  %3214 = vmatpush1.msra.mxu0 0.0
  %3215 = vmatprep.subr.mxu0 0.0
  %3216 = vmatpush1.msra.mxu0 0.0
  %3217 = vmatprep.subr.mxu0 0.0
  %3218 = vmatpush1.msra.mxu0 0.0
  %3219 = vmatprep.subr.mxu0 0.0
  %3220 = vmatpush1.msra.mxu0 0.0
  %3221 = vmatprep.subr.mxu0 0.0
  %3222 = vmatpush1.msra.mxu0 0.0
  %3223 = vmatprep.subr.mxu0 0.0
  %3224 = vmatpush1.msra.mxu0 0.0
  %3225 = vmatprep.subr.mxu0 0.0
  %3226 = vmatpush1.msra.mxu0 0.0
  %3227 = vmatprep.subr.mxu0 0.0
  %3228 = vmatpush1.msra.mxu0 0.0
  %3229 = vmatprep.subr.mxu0 0.0
  %3230 = vmatpush1.msra.mxu0 0.0
  %3231 = vmatprep.subr.mxu0 0.0
  %3232 = vmatpush1.msra.mxu0 0.0
  %3233 = vmatprep.subr.mxu0 0.0
  %3234 = vmatpush1.msra.mxu0 0.0
  %3235 = vmatprep.subr.mxu0 0.0
  %3236 = vmatpush1.msra.mxu0 0.0
  %3237 = vmatprep.subr.mxu0 0.0
  %3238 = vmatpush1.msra.mxu0 0.0
  %3239 = vmatprep.subr.mxu0 0.0
  %3240 = vmatpush1.msra.mxu0 0.0
  %3241 = vmatprep.subr.mxu0 0.0
  %3242 = vmatpush1.msra.mxu0 0.0
  %3243 = vmatprep.subr.mxu0 0.0
  %3244 = vmatpush1.msra.mxu0 0.0
  %3245 = vmatprep.subr.mxu0 0.0
  %3246 = vmatpush1.msra.mxu0 0.0
  %3247 = vmatprep.subr.mxu0 0.0
  %3248 = vmatpush1.msra.mxu0 0.0
  %3249 = vmatprep.mubr.f32.mxu0 0.0
  %3250 = vmatmul.mubr.f32.gmra.mrb[0].mxu0 %v3183
  %v3251 = vpop.f32.mrb[0].mxu0
  %v3252 = vadd.f32 0.0, %v3251
  %v3253 = vpop.f32.mrb[0].mxu0
  %v3254 = vadd.f32 0.0, %v3253
  %3255 = vdwg.mxu0
  %3256 = vmatprep.subr.mxu0 %v3177
  %3257 = vmatpush1.msra.mxu0 %v3176
  %3258 = vmatprep.subr.mxu0 %v3181
  %3259 = vmatpush1.msra.mxu0 %v3180
  %3260 = vmatprep.subr.mxu0 0.0
  %3261 = vmatpush1.msra.mxu0 0.0
  %3262 = vmatprep.subr.mxu0 0.0
  %3263 = vmatpush1.msra.mxu0 0.0
  %3264 = vmatprep.subr.mxu0 0.0
  %3265 = vmatpush1.msra.mxu0 0.0
  %3266 = vmatprep.subr.mxu0 0.0
  %3267 = vmatpush1.msra.mxu0 0.0
  %3268 = vmatprep.subr.mxu0 0.0
  %3269 = vmatpush1.msra.mxu0 0.0
  %3270 = vmatprep.subr.mxu0 0.0
  %3271 = vmatpush1.msra.mxu0 0.0
  %3272 = vmatprep.subr.mxu0 0.0
  %3273 = vmatpush1.msra.mxu0 0.0
  %3274 = vmatprep.subr.mxu0 0.0
  %3275 = vmatpush1.msra.mxu0 0.0
  %3276 = vmatprep.subr.mxu0 0.0
  %3277 = vmatpush1.msra.mxu0 0.0
  %3278 = vmatprep.subr.mxu0 0.0
  %3279 = vmatpush1.msra.mxu0 0.0
  %3280 = vmatprep.subr.mxu0 0.0
  %3281 = vmatpush1.msra.mxu0 0.0
  %3282 = vmatprep.subr.mxu0 0.0
  %3283 = vmatpush1.msra.mxu0 0.0
  %3284 = vmatprep.subr.mxu0 0.0
  %3285 = vmatpush1.msra.mxu0 0.0
  %3286 = vmatprep.subr.mxu0 0.0
  %3287 = vmatpush1.msra.mxu0 0.0
  %3288 = vmatprep.subr.mxu0 0.0
  %3289 = vmatpush1.msra.mxu0 0.0
  %3290 = vmatprep.subr.mxu0 0.0
  %3291 = vmatpush1.msra.mxu0 0.0
  %3292 = vmatprep.subr.mxu0 0.0
  %3293 = vmatpush1.msra.mxu0 0.0
  %3294 = vmatprep.subr.mxu0 0.0
  %3295 = vmatpush1.msra.mxu0 0.0
  %3296 = vmatprep.subr.mxu0 0.0
  %3297 = vmatpush1.msra.mxu0 0.0
  %3298 = vmatprep.subr.mxu0 0.0
  %3299 = vmatpush1.msra.mxu0 0.0
  %3300 = vmatprep.subr.mxu0 0.0
  %3301 = vmatpush1.msra.mxu0 0.0
  %3302 = vmatprep.subr.mxu0 0.0
  %3303 = vmatpush1.msra.mxu0 0.0
  %3304 = vmatprep.subr.mxu0 0.0
  %3305 = vmatpush1.msra.mxu0 0.0
  %3306 = vmatprep.subr.mxu0 0.0
  %3307 = vmatpush1.msra.mxu0 0.0
  %3308 = vmatprep.subr.mxu0 0.0
  %3309 = vmatpush1.msra.mxu0 0.0
  %3310 = vmatprep.subr.mxu0 0.0
  %3311 = vmatpush1.msra.mxu0 0.0
  %3312 = vmatprep.subr.mxu0 0.0
  %3313 = vmatpush1.msra.mxu0 0.0
  %3314 = vmatprep.subr.mxu0 0.0
  %3315 = vmatpush1.msra.mxu0 0.0
  %3316 = vmatprep.subr.mxu0 0.0
  %3317 = vmatpush1.msra.mxu0 0.0
  %3318 = vmatprep.subr.mxu0 0.0
  %3319 = vmatpush1.msra.mxu0 0.0
  %3320 = vmatprep.mubr.f32.mxu0 0.0
  %3321 = vmatmul.mubr.f32.gmra.mrb[0].mxu0 %v3183
  %v3322 = vpop.f32.mrb[0].mxu0
  %v3323 = vadd.f32 0.0, %v3322
  %v3324 = vpop.f32.mrb[0].mxu0
  %v3325 = vadd.f32 0.0, %v3324
  %3326 = vdwg.mxu0
  %v3327 = vadd.f32 %v3146, %v3252
  %v3328 = vadd.f32 %v3147, %v3254
  %v3329 = vadd.f32 %v3148, %v3323
  %v3330 = vadd.f32 %v3149, %v3325
  %3331 = vst [vmem:[%s6 + $0x40] sm:$0xff] %v3327
  %3332 = vst [vmem:[%s6 + $0x48] sm:$0xff] %v3328
  %3333 = vst [vmem:[%s6 + $0x50] sm:$0xff] %v3329
  %3334 = vst [vmem:[%s6 + $0x58] sm:$0xff] %v3330
  // Predicated region
  $region26: #{dense_block_forward.1} parent=0 // pred_check
    _
  $region27: #{dense_block_forward.1} parent=0 // pred_check_branch
    %3336 = sbr.rel (0) target = $region29
  $region28: #{dense_block_forward.1} parent=0 // pred_region
    _
  $region29: #{dense_block_forward.1} parent=0 // pred_fallthru
    _
  // Predicated region
  $region30: #{dense_block_forward.1} parent=0 // pred_check
    _
  $region31: #{dense_block_forward.1} parent=0 // pred_check_branch
    %3338 = sbr.rel (0) target = $region33
  $region32: #{dense_block_forward.1} parent=0 // pred_region
    _
  $region33: #{dense_block_forward.1} parent=0 // pred_fallthru
    _

</llo_original>
